<compile_context>
chip_gen: v6e
topology: v6e:2x2x1
jax: 0.10.0
libtpu: 0.0.40
codegen_flags: <defaults>
</compile_context>

<pallas_src>
from functools import partial

import jax
import jax.numpy as jnp
from jax.experimental import pallas as pl
from jax.experimental.pallas import tpu as pltpu


# ----------------------------- Pallas kernel ------------------------------- #

def _basic_block_kernel(xm_ref, xt_ref, xb_ref, w1_ref, b1_ref, w2_ref, b2_ref,
                        o_ref, xs_ref, h1_ref, *, apply_relu):
    """Fused BasicBlock forward for one (batch, row-tile) grid step.

    xm_ref : (1, th, W, Cin)   bf16  row-tile of the unpadded NHWC input
    xt_ref : (1, 2,  W, Cin)   bf16  two rows ABOVE the tile (garbage when r == 0)
    xb_ref : (1, 2,  W, Cin)   bf16  two rows BELOW the tile (garbage when r == last)
    w1_ref : (3, 3*Cin, C1)    bf16  conv1 weights, bn1 scale folded, kw grouped into K
    b1_ref : (1, C1)           f32   bn1 folded bias
    w2_ref : (3, 3*C1, C2)     bf16  conv2 weights, bn2 scale folded, kw grouped into K
    b2_ref : (1, C2)           f32   bn2 folded bias
    o_ref  : (1, th, W, C2)    bf16  output row-tile
    xs_ref : (th+4, W+2, Cin)  bf16  VMEM scratch: zero-halo staged input rows
    h1_ref : (th+2, W+2, C1)   bf16  VMEM scratch: zero-halo conv1 output rows
    """
    r = pl.program_id(1)
    n_rt = pl.num_programs(1)
    th = o_ref.shape[1]
    ww = o_ref.shape[2]
    cin = xm_ref.shape[3]
    c1 = w1_ref.shape[2]
    c2 = w2_ref.shape[2]

    # ---- stage input rows into the zero-halo VMEM scratch (no host-side pad) ------- #
    # Column halos: two thin strips, zeroed every step (cheap, core-sharding safe).
    xs_ref[:, 0:1, :] = jnp.zeros((th + 4, 1, cin), xs_ref.dtype)
    xs_ref[:, ww + 1:ww + 2, :] = jnp.zeros((th + 4, 1, cin), xs_ref.dtype)
    # Interior rows of this tile.
    xs_ref[2:th + 2, 1:ww + 1, :] = xm_ref[0]

    # Two halo rows above / below: neighbour data, or zeros at the image border.
    @pl.when(r == 0)
    def _():
        xs_ref[0:2, 1:ww + 1, :] = jnp.zeros((2, ww, cin), xs_ref.dtype)

    @pl.when(r > 0)
    def _():
        xs_ref[0:2, 1:ww + 1, :] = xt_ref[0]

    @pl.when(r == n_rt - 1)
    def _():
        xs_ref[th + 2:th + 4, 1:ww + 1, :] = jnp.zeros((2, ww, cin), xs_ref.dtype)

    @pl.when(r < n_rt - 1)
    def _():
        xs_ref[th + 2:th + 4, 1:ww + 1, :] = xb_ref[0]

    # ---- conv1 (3x3, pad 1) + folded bn1 + ReLU over th+2 rows (1-row halo for conv2).
    # Taps grouped along K: per kh, the 3 kw-shifted windows are concatenated channel-wise
    # -> one (M, 3*Cin) @ (3*Cin, C1) MXU dot (3 dots total instead of 9 + 8 VPU adds).
    m1 = (th + 2) * ww
    acc1 = jnp.zeros((m1, c1), jnp.float32)
    for kh in range(3):
        band = xs_ref[kh:kh + th + 2, :, :]                         # (th+2, W+2, Cin)
        patch = jnp.concatenate(
            [band[:, 0:ww, :], band[:, 1:ww + 1, :], band[:, 2:ww + 2, :]],
            axis=-1).reshape(m1, 3 * cin)
        acc1 = acc1 + jnp.dot(patch, w1_ref[kh],
                              preferred_element_type=jnp.float32)
    y1 = jnp.maximum(acc1 + b1_ref[...], 0.0)

    # Stage conv1 output (interior columns of all th+2 rows); zero the column halos only.
    h1_ref[:, 1:ww + 1, :] = y1.reshape(th + 2, ww, c1).astype(h1_ref.dtype)
    h1_ref[:, 0:1, :] = jnp.zeros((th + 2, 1, c1), h1_ref.dtype)
    h1_ref[:, ww + 1:ww + 2, :] = jnp.zeros((th + 2, 1, c1), h1_ref.dtype)

    # conv2 zero-pads its input: rows outside the image must be 0, not relu(bn1 bias).
    @pl.when(r == 0)
    def _():
        h1_ref[0:1, 1:ww + 1, :] = jnp.zeros((1, ww, c1), h1_ref.dtype)

    @pl.when(r == n_rt - 1)
    def _():
        h1_ref[th + 1:th + 2, 1:ww + 1, :] = jnp.zeros((1, ww, c1), h1_ref.dtype)

    # ---- conv2 (3x3, pad 1) + folded bn2 + identity residual (+ ReLU) -------------- #
    m2 = th * ww
    acc2 = jnp.zeros((m2, c2), jnp.float32)
    for kh in range(3):
        band = h1_ref[kh:kh + th, :, :]                             # (th, W+2, C1)
        patch = jnp.concatenate(
            [band[:, 0:ww, :], band[:, 1:ww + 1, :], band[:, 2:ww + 2, :]],
            axis=-1).reshape(m2, 3 * c1)
        acc2 = acc2 + jnp.dot(patch, w2_ref[kh],
                              preferred_element_type=jnp.float32)

    residual = xm_ref[0].reshape(m2, cin).astype(jnp.float32)
    y2 = acc2 + b2_ref[...] + residual
    if apply_relu:
        y2 = jnp.maximum(y2, 0.0)
    o_ref[0] = y2.reshape(th, ww, c2).astype(o_ref.dtype)


# ------------------------------- JAX glue ---------------------------------- #

def _fold_bn_into_weights(w_hwio, scale):
    """Fold per-output-channel eval-mode BN scale into HWIO conv weights (exact)."""
    return w_hwio * scale[None, None, None, :]


def _pick_row_tile(h, target=16):
    """Largest even divisor of h that is <= target (spatial grid tile)."""
    best = 0
    for t in range(2, min(h, target) + 1, 2):
        if h % t == 0:
            best = t
    if best == 0:
        if h % 2 == 0:
            return h
        raise ValueError(f"H={h} must be even for the row-tiled kernel")  # TODO(synk): odd H
    return best


def basic_block_forward_nhwc(x_nhwc, params, *, no_relu=False, row_tile=None,
                             compute_dtype=jnp.bfloat16, out_dtype=jnp.bfloat16):
    """Fused BasicBlock forward on NHWC input (preferred entry point)."""
    n, h, w, cin = x_nhwc.shape
    w1, w2 = params["w1"], params["w2"]                  # (3,3,Cin,C1), (3,3,C1,C2)
    c1, c2 = w1.shape[-1], w2.shape[-1]
    if cin != c2:
        raise ValueError("identity residual requires inplanes == planes "
                         f"(got {cin} vs {c2}); downsample branch not implemented")
    # TODO(synk): stride>1 / downsample branch not implemented (module default is None).

    th = row_tile if row_tile is not None else _pick_row_tile(h)
    if th < 2 or th % 2 != 0 or h % th != 0:
        raise ValueError(f"row_tile={th} must be even and divide H={h}")
    n_rt = h // th
    hb = th // 2                       # halo blocks are 2 rows -> indices in units of 2

    # Fold BN scale into the weights, group kw into the contraction dim: (3, 3*Cin, Cout).
    w1f = _fold_bn_into_weights(w1, params["bn1_scale"]).reshape(3, 3 * cin, c1).astype(compute_dtype)
    w2f = _fold_bn_into_weights(w2, params["bn2_scale"]).reshape(3, 3 * c1, c2).astype(compute_dtype)
    b1 = params["bn1_bias"].reshape(1, c1).astype(jnp.float32)
    b2 = params["bn2_bias"].reshape(1, c2).astype(jnp.float32)

    # Single HBM representation of the activations (no padding pass; the cast is a no-op
    # when the producer already emits bf16).
    xc = x_nhwc.astype(compute_dtype)

    def mid_map(b, r):
        return (b, r, 0, 0)

    def top_map(b, r):                 # rows r*th-2 .. r*th-1, clamped (masked at r == 0)
        return (b, jnp.maximum(r * hb - 1, 0), 0, 0)

    def bot_map(b, r):                 # rows r*th+th .. +1, clamped (masked at r == last)
        return (b, jnp.minimum(r * hb + hb, h // 2 - 1), 0, 0)

    itemsz = jnp.dtype(compute_dtype).itemsize
    flops = 2 * n * h * w * 9 * (cin * c1 + c1 * c2)
    bytes_accessed = int(n * h * w * cin * itemsz * (1.0 + 2.0 / th)      # input + halo
                         + n * h * w * c2 * jnp.dtype(out_dtype).itemsize  # output
                         + (w1f.size + w2f.size) * itemsz + (c1 + c2) * 4)

    return pl.pallas_call(
        partial(_basic_block_kernel, apply_relu=not no_relu),
        out_shape=jax.ShapeDtypeStruct((n, h, w, c2), out_dtype),
        grid_spec=pltpu.PrefetchScalarGridSpec(
            num_scalar_prefetch=0,
            grid=(n, n_rt),
            in_specs=[
                pl.BlockSpec((1, th, w, cin), mid_map),
                pl.BlockSpec((1, 2, w, cin), top_map),
                pl.BlockSpec((1, 2, w, cin), bot_map),
                pl.BlockSpec((3, 3 * cin, c1), lambda b, r: (0, 0, 0)),
                pl.BlockSpec((1, c1), lambda b, r: (0, 0)),
                pl.BlockSpec((3, 3 * c1, c2), lambda b, r: (0, 0, 0)),
                pl.BlockSpec((1, c2), lambda b, r: (0, 0)),
            ],
            out_specs=pl.BlockSpec((1, th, w, c2), mid_map),
            scratch_shapes=[
                pltpu.VMEM((th + 4, w + 2, cin), compute_dtype),   # staged padded input
                pltpu.VMEM((th + 2, w + 2, c1), compute_dtype),    # staged padded conv1 out
            ],
        ),
        compiler_params=pltpu.CompilerParams(
            dimension_semantics=("parallel", "parallel"),
            vmem_limit_bytes=48 * 1024 * 1024,   # headroom under v7x's 64 MiB physical VMEM
        ),
        cost_estimate=pl.CostEstimate(flops=int(flops), transcendentals=0,
                                      bytes_accessed=bytes_accessed),
    )(xc, xc, xc, w1f, b1, w2f, b2)


def basic_block_forward(x_nchw, params, *, no_relu=False, row_tile=None):
    """PyTorch-parity entry point (NCHW). Prefer `basic_block_forward_nhwc`: the two
    transposes here are pure layout glue (one HBM pass each) outside the kernel."""
    x = jnp.transpose(x_nchw, (0, 2, 3, 1))                  # NCHW -> NHWC
    out = basic_block_forward_nhwc(x, params, no_relu=no_relu, row_tile=row_tile)
    return jnp.transpose(out, (0, 3, 1, 2))                  # NHWC -> NCHW


def init_params(key, inplanes, planes, eps=1e-5):
    """Deterministic synthetic parameters (conv weights + folded eval-mode BatchNorm)."""
    ks = jax.random.split(key, 10)
    w1 = jax.random.normal(ks[0], (3, 3, inplanes, planes), jnp.float32) / (3.0 * jnp.sqrt(float(inplanes)))
    w2 = jax.random.normal(ks[1], (3, 3, planes, planes), jnp.float32) / (3.0 * jnp.sqrt(float(planes)))

    def bn(kg, kb, km, kv):
        gamma = 1.0 + 0.1 * jax.random.normal(kg, (planes,), jnp.float32)
        beta = 0.1 * jax.random.normal(kb, (planes,), jnp.float32)
        mean = 0.1 * jax.random.normal(km, (planes,), jnp.float32)
        var = 0.9 + 0.2 * jax.random.uniform(kv, (planes,), jnp.float32)
        scale = gamma / jnp.sqrt(var + eps)
        bias = beta - mean * scale
        return scale, bias

    s1, b1 = bn(ks[2], ks[3], ks[4], ks[5])
    s2, b2 = bn(ks[6], ks[7], ks[8], ks[9])
    return {"w1": w1, "w2": w2,
            "bn1_scale": s1, "bn1_bias": b1,
            "bn2_scale": s2, "bn2_bias": b2}


def reference_forward(x_nchw, params, *, no_relu=False):
    """Pure-JAX f32 reference (lax.conv) for correctness checking."""
    x = jnp.transpose(x_nchw, (0, 2, 3, 1)).astype(jnp.float32)
    dn = jax.lax.conv_dimension_numbers(x.shape, params["w1"].shape, ("NHWC", "HWIO", "NHWC"))

    def conv(inp, wgt):
        return jax.lax.conv_general_dilated(inp, wgt, (1, 1), "SAME",
                                            dimension_numbers=dn,
                                            precision=jax.lax.Precision.HIGHEST)

    out = conv(x, params["w1"]) * params["bn1_scale"] + params["bn1_bias"]
    out = jnp.maximum(out, 0.0)
    out = conv(out, params["w2"]) * params["bn2_scale"] + params["bn2_bias"] + x
    if not no_relu:
        out = jnp.maximum(out, 0.0)
    return jnp.transpose(out, (0, 3, 1, 2))


if __name__ == "__main__":
    key = jax.random.PRNGKey(0)
    k_x, k_p = jax.random.split(key)

    N, C, H, W = 2, 8, 16, 16            # inplanes == planes (downsample=None requires it)
    x = jax.random.normal(k_x, (N, C, H, W), jnp.float32)
    params = init_params(k_p, C, C)

    # row_tile=8 -> 2 row-tiles per image: exercises both image-border and interior-halo
    # paths of the spatially tiled kernel.
    fwd = jax.jit(partial(basic_block_forward, no_relu=False, row_tile=8))
    out = jax.block_until_ready(fwd(x, params))

    ref = reference_forward(x, params, no_relu=False)
    assert out.shape == (N, C, H, W), out.shape
    # bf16 matmul operands, bf16 intermediate/residual/output (f32 accumulation) ->
    # tolerance sized for bf16 rounding.
    max_err = float(jnp.max(jnp.abs(out.astype(jnp.float32) - ref)))
    assert max_err < 1.5e-1, f"max abs err too large: {max_err}"

    print("KERNEL_OK")
</pallas_src>

<mosaic_0001>
module attributes {stable_mosaic.version = 11 : i64} {
  func.func @_basic_block_kernel(%arg0: i32, %arg1: i32, %arg2: memref<1x8x16x8xbf16, #tpu.memory_space<vmem>>, %arg3: memref<1x2x16x8xbf16, #tpu.memory_space<vmem>>, %arg4: memref<1x2x16x8xbf16, #tpu.memory_space<vmem>>, %arg5: memref<3x24x8xbf16, #tpu.memory_space<vmem>>, %arg6: memref<1x8xf32, #tpu.memory_space<vmem>>, %arg7: memref<3x24x8xbf16, #tpu.memory_space<vmem>>, %arg8: memref<1x8xf32, #tpu.memory_space<vmem>>, %arg9: memref<1x8x16x8xbf16, #tpu.memory_space<vmem>>, %arg10: memref<12x18x8xbf16, #tpu.memory_space<vmem>>, %arg11: memref<10x18x8xbf16, #tpu.memory_space<vmem>>) attributes {dimension_semantics = [#tpu.dimension_semantics<parallel>, #tpu.dimension_semantics<parallel>], iteration_bounds = array<i64: 2, 2>, scalar_prefetch = 0 : i64, scratch_operands = 2 : i64, tpu.core_type = #tpu.core_type<tc>, window_params = [{transform_indices = @transform_0, window_bounds = array<i64: 1, 8, 16, 8>}, {transform_indices = @transform_1, window_bounds = array<i64: 1, 2, 16, 8>}, {transform_indices = @transform_2, window_bounds = array<i64: 1, 2, 16, 8>}, {pipeline_mode = #tpu.pipeline_mode<synchronous>, transform_indices = @transform_3, window_bounds = array<i64: 3, 24, 8>}, {pipeline_mode = #tpu.pipeline_mode<synchronous>, transform_indices = @transform_4, window_bounds = array<i64: 1, 8>}, {pipeline_mode = #tpu.pipeline_mode<synchronous>, transform_indices = @transform_5, window_bounds = array<i64: 3, 24, 8>}, {pipeline_mode = #tpu.pipeline_mode<synchronous>, transform_indices = @transform_6, window_bounds = array<i64: 1, 8>}, {transform_indices = @transform_7, window_bounds = array<i64: 1, 8, 16, 8>}]} {
    %cst = arith.constant 0.000000e+00 : bf16
    %0 = vector.broadcast %cst : bf16 to vector<12x1x8xbf16>
    %c0 = arith.constant 0 : index
    %c0_0 = arith.constant 0 : index
    %c0_1 = arith.constant 0 : index
    %1 = vector.load %arg10[%c0, %c0_0, %c0_1] : memref<12x18x8xbf16, #tpu.memory_space<vmem>>, vector<12x1x8xbf16>
    tpu.vector_store %arg10[%c0, %c0_0, %c0_1], %0 {strides = array<i32>} : memref<12x18x8xbf16, #tpu.memory_space<vmem>>, vector<12x1x8xbf16>,
    %cst_2 = arith.constant 0.000000e+00 : bf16
    %2 = vector.broadcast %cst_2 : bf16 to vector<12x1x8xbf16>
    %c0_3 = arith.constant 0 : index
    %c17 = arith.constant 17 : index
    %c0_4 = arith.constant 0 : index
    %3 = vector.load %arg10[%c0_3, %c17, %c0_4] : memref<12x18x8xbf16, #tpu.memory_space<vmem>>, vector<12x1x8xbf16>
    tpu.vector_store %arg10[%c0_3, %c17, %c0_4], %2 {strides = array<i32>} : memref<12x18x8xbf16, #tpu.memory_space<vmem>>, vector<12x1x8xbf16>,
    %c0_5 = arith.constant 0 : index
    %c0_6 = arith.constant 0 : index
    %c0_7 = arith.constant 0 : index
    %c0_8 = arith.constant 0 : index
    %4 = vector.load %arg2[%c0_5, %c0_6, %c0_7, %c0_8] : memref<1x8x16x8xbf16, #tpu.memory_space<vmem>>, vector<1x8x16x8xbf16>
    %5 = vector.shape_cast %4 : vector<1x8x16x8xbf16> to vector<8x16x8xbf16>
    %c2 = arith.constant 2 : index
    %c1 = arith.constant 1 : index
    %c0_9 = arith.constant 0 : index
    %6 = vector.load %arg10[%c2, %c1, %c0_9] : memref<12x18x8xbf16, #tpu.memory_space<vmem>>, vector<8x16x8xbf16>
    tpu.vector_store %arg10[%c2, %c1, %c0_9], %5 {strides = array<i32>} : memref<12x18x8xbf16, #tpu.memory_space<vmem>>, vector<8x16x8xbf16>,
    %c0_i32 = arith.constant 0 : i32
    %7 = arith.cmpi eq, %arg1, %c0_i32 : i32
    %8 = arith.extui %7 : i1 to i32
    %c0_i32_10 = arith.constant 0 : i32
    %9 = arith.cmpi ne, %8, %c0_i32_10 : i32
    scf.if %9 {
      %cst_89 = arith.constant 0.000000e+00 : bf16
      %114 = vector.broadcast %cst_89 : bf16 to vector<2x16x8xbf16>
      %c0_90 = arith.constant 0 : index
      %c1_91 = arith.constant 1 : index
      %c0_92 = arith.constant 0 : index
      %115 = vector.load %arg10[%c0_90, %c1_91, %c0_92] : memref<12x18x8xbf16, #tpu.memory_space<vmem>>, vector<2x16x8xbf16>
      tpu.vector_store %arg10[%c0_90, %c1_91, %c0_92], %114 {strides = array<i32>} : memref<12x18x8xbf16, #tpu.memory_space<vmem>>, vector<2x16x8xbf16>,
    } else {
    }
    %c0_i32_11 = arith.constant 0 : i32
    %10 = arith.cmpi sgt, %arg1, %c0_i32_11 : i32
    %11 = arith.extui %10 : i1 to i32
    %c0_i32_12 = arith.constant 0 : i32
    %12 = arith.cmpi ne, %11, %c0_i32_12 : i32
    scf.if %12 {
      %c0_89 = arith.constant 0 : index
      %c0_90 = arith.constant 0 : index
      %c0_91 = arith.constant 0 : index
      %c0_92 = arith.constant 0 : index
      %114 = vector.load %arg3[%c0_89, %c0_90, %c0_91, %c0_92] : memref<1x2x16x8xbf16, #tpu.memory_space<vmem>>, vector<1x2x16x8xbf16>
      %115 = vector.shape_cast %114 : vector<1x2x16x8xbf16> to vector<2x16x8xbf16>
      %c0_93 = arith.constant 0 : index
      %c1_94 = arith.constant 1 : index
      %c0_95 = arith.constant 0 : index
      %116 = vector.load %arg10[%c0_93, %c1_94, %c0_95] : memref<12x18x8xbf16, #tpu.memory_space<vmem>>, vector<2x16x8xbf16>
      tpu.vector_store %arg10[%c0_93, %c1_94, %c0_95], %115 {strides = array<i32>} : memref<12x18x8xbf16, #tpu.memory_space<vmem>>, vector<2x16x8xbf16>,
    } else {
    }
    %c1_i32 = arith.constant 1 : i32
    %13 = arith.cmpi eq, %arg1, %c1_i32 : i32
    %14 = arith.extui %13 : i1 to i32
    %c0_i32_13 = arith.constant 0 : i32
    %15 = arith.cmpi ne, %14, %c0_i32_13 : i32
    scf.if %15 {
      %cst_89 = arith.constant 0.000000e+00 : bf16
      %114 = vector.broadcast %cst_89 : bf16 to vector<2x16x8xbf16>
      %c10 = arith.constant 10 : index
      %c1_90 = arith.constant 1 : index
      %c0_91 = arith.constant 0 : index
      %115 = vector.load %arg10[%c10, %c1_90, %c0_91] : memref<12x18x8xbf16, #tpu.memory_space<vmem>>, vector<2x16x8xbf16>
      tpu.vector_store %arg10[%c10, %c1_90, %c0_91], %114 {strides = array<i32>} : memref<12x18x8xbf16, #tpu.memory_space<vmem>>, vector<2x16x8xbf16>,
    } else {
    }
    %c1_i32_14 = arith.constant 1 : i32
    %16 = arith.cmpi slt, %arg1, %c1_i32_14 : i32
    %17 = arith.extui %16 : i1 to i32
    %c0_i32_15 = arith.constant 0 : i32
    %18 = arith.cmpi ne, %17, %c0_i32_15 : i32
    scf.if %18 {
      %c0_89 = arith.constant 0 : index
      %c0_90 = arith.constant 0 : index
      %c0_91 = arith.constant 0 : index
      %c0_92 = arith.constant 0 : index
      %114 = vector.load %arg4[%c0_89, %c0_90, %c0_91, %c0_92] : memref<1x2x16x8xbf16, #tpu.memory_space<vmem>>, vector<1x2x16x8xbf16>
      %115 = vector.shape_cast %114 : vector<1x2x16x8xbf16> to vector<2x16x8xbf16>
      %c10 = arith.constant 10 : index
      %c1_93 = arith.constant 1 : index
      %c0_94 = arith.constant 0 : index
      %116 = vector.load %arg10[%c10, %c1_93, %c0_94] : memref<12x18x8xbf16, #tpu.memory_space<vmem>>, vector<2x16x8xbf16>
      tpu.vector_store %arg10[%c10, %c1_93, %c0_94], %115 {strides = array<i32>} : memref<12x18x8xbf16, #tpu.memory_space<vmem>>, vector<2x16x8xbf16>,
    } else {
    }
    %cst_16 = arith.constant 0.000000e+00 : f32
    %19 = vector.broadcast %cst_16 : f32 to vector<160x8xf32>
    %c0_17 = arith.constant 0 : index
    %c0_18 = arith.constant 0 : index
    %c0_19 = arith.constant 0 : index
    %20 = vector.load %arg10[%c0_17, %c0_18, %c0_19] : memref<12x18x8xbf16, #tpu.memory_space<vmem>>, vector<10x18x8xbf16>
    %21 = vector.extract_strided_slice %20 {offsets = [0, 0, 0], sizes = [10, 16, 8], strides = [1, 1, 1]} : vector<10x18x8xbf16> to vector<10x16x8xbf16>
    %22 = vector.extract_strided_slice %20 {offsets = [0, 1, 0], sizes = [10, 16, 8], strides = [1, 1, 1]} : vector<10x18x8xbf16> to vector<10x16x8xbf16>
    %23 = vector.extract_strided_slice %20 {offsets = [0, 2, 0], sizes = [10, 16, 8], strides = [1, 1, 1]} : vector<10x18x8xbf16> to vector<10x16x8xbf16>
    %24 = tpu.concatenate %21, %22, %23 in 2 : vector<10x16x8xbf16>, vector<10x16x8xbf16>, vector<10x16x8xbf16> -> vector<10x16x24xbf16>
    %25 = vector.shape_cast %24 : vector<10x16x24xbf16> to vector<160x24xbf16>
    %c0_20 = arith.constant 0 : index
    %c0_21 = arith.constant 0 : index
    %c0_22 = arith.constant 0 : index
    %26 = vector.load %arg5[%c0_20, %c0_21, %c0_22] : memref<3x24x8xbf16, #tpu.memory_space<vmem>>, vector<1x24x8xbf16>
    %27 = vector.shape_cast %26 : vector<1x24x8xbf16> to vector<24x8xbf16>
    %cst_23 = arith.constant dense<0.000000e+00> : vector<160x8xf32>
    %28 = tpu.matmul %25, %27, %cst_23 {dimension_numbers = #tpu.dot_dimension_numbers<[1], [0], [0], [1], [0, 0, 1, 1], [], []>} : vector<160x24xbf16>, vector<24x8xbf16>, vector<160x8xf32> -> vector<160x8xf32>
    %29 = arith.addf %19, %28 : vector<160x8xf32>
    %c1_24 = arith.constant 1 : index
    %c0_25 = arith.constant 0 : index
    %c0_26 = arith.constant 0 : index
    %30 = vector.load %arg10[%c1_24, %c0_25, %c0_26] : memref<12x18x8xbf16, #tpu.memory_space<vmem>>, vector<10x18x8xbf16>
    %31 = vector.extract_strided_slice %30 {offsets = [0, 0, 0], sizes = [10, 16, 8], strides = [1, 1, 1]} : vector<10x18x8xbf16> to vector<10x16x8xbf16>
    %32 = vector.extract_strided_slice %30 {offsets = [0, 1, 0], sizes = [10, 16, 8], strides = [1, 1, 1]} : vector<10x18x8xbf16> to vector<10x16x8xbf16>
    %33 = vector.extract_strided_slice %30 {offsets = [0, 2, 0], sizes = [10, 16, 8], strides = [1, 1, 1]} : vector<10x18x8xbf16> to vector<10x16x8xbf16>
    %34 = tpu.concatenate %31, %32, %33 in 2 : vector<10x16x8xbf16>, vector<10x16x8xbf16>, vector<10x16x8xbf16> -> vector<10x16x24xbf16>
    %35 = vector.shape_cast %34 : vector<10x16x24xbf16> to vector<160x24xbf16>
    %c1_27 = arith.constant 1 : index
    %c0_28 = arith.constant 0 : index
    %c0_29 = arith.constant 0 : index
    %36 = vector.load %arg5[%c1_27, %c0_28, %c0_29] : memref<3x24x8xbf16, #tpu.memory_space<vmem>>, vector<1x24x8xbf16>
    %37 = vector.shape_cast %36 : vector<1x24x8xbf16> to vector<24x8xbf16>
    %cst_30 = arith.constant dense<0.000000e+00> : vector<160x8xf32>
    %38 = tpu.matmul %35, %37, %cst_30 {dimension_numbers = #tpu.dot_dimension_numbers<[1], [0], [0], [1], [0, 0, 1, 1], [], []>} : vector<160x24xbf16>, vector<24x8xbf16>, vector<160x8xf32> -> vector<160x8xf32>
    %39 = arith.addf %29, %38 : vector<160x8xf32>
    %c2_31 = arith.constant 2 : index
    %c0_32 = arith.constant 0 : index
    %c0_33 = arith.constant 0 : index
    %40 = vector.load %arg10[%c2_31, %c0_32, %c0_33] : memref<12x18x8xbf16, #tpu.memory_space<vmem>>, vector<10x18x8xbf16>
    %41 = vector.extract_strided_slice %40 {offsets = [0, 0, 0], sizes = [10, 16, 8], strides = [1, 1, 1]} : vector<10x18x8xbf16> to vector<10x16x8xbf16>
    %42 = vector.extract_strided_slice %40 {offsets = [0, 1, 0], sizes = [10, 16, 8], strides = [1, 1, 1]} : vector<10x18x8xbf16> to vector<10x16x8xbf16>
    %43 = vector.extract_strided_slice %40 {offsets = [0, 2, 0], sizes = [10, 16, 8], strides = [1, 1, 1]} : vector<10x18x8xbf16> to vector<10x16x8xbf16>
    %44 = tpu.concatenate %41, %42, %43 in 2 : vector<10x16x8xbf16>, vector<10x16x8xbf16>, vector<10x16x8xbf16> -> vector<10x16x24xbf16>
    %45 = vector.shape_cast %44 : vector<10x16x24xbf16> to vector<160x24xbf16>
    %c2_34 = arith.constant 2 : index
    %c0_35 = arith.constant 0 : index
    %c0_36 = arith.constant 0 : index
    %46 = vector.load %arg5[%c2_34, %c0_35, %c0_36] : memref<3x24x8xbf16, #tpu.memory_space<vmem>>, vector<1x24x8xbf16>
    %47 = vector.shape_cast %46 : vector<1x24x8xbf16> to vector<24x8xbf16>
    %cst_37 = arith.constant dense<0.000000e+00> : vector<160x8xf32>
    %48 = tpu.matmul %45, %47, %cst_37 {dimension_numbers = #tpu.dot_dimension_numbers<[1], [0], [0], [1], [0, 0, 1, 1], [], []>} : vector<160x24xbf16>, vector<24x8xbf16>, vector<160x8xf32> -> vector<160x8xf32>
    %49 = arith.addf %39, %48 : vector<160x8xf32>
    %c0_38 = arith.constant 0 : index
    %c0_39 = arith.constant 0 : index
    %50 = vector.load %arg6[%c0_38, %c0_39] : memref<1x8xf32, #tpu.memory_space<vmem>>, vector<1x8xf32>
    %51 = vector.broadcast %50 : vector<1x8xf32> to vector<160x8xf32>
    %52 = arith.addf %49, %51 : vector<160x8xf32>
    %cst_40 = arith.constant 0.000000e+00 : f32
    %53 = vector.broadcast %cst_40 : f32 to vector<160x8xf32>
    %54 = arith.maximumf %52, %53 : vector<160x8xf32>
    %55 = vector.shape_cast %54 : vector<160x8xf32> to vector<10x16x8xf32>
    %56 = arith.truncf %55 : vector<10x16x8xf32> to vector<10x16x8xbf16>
    %c0_41 = arith.constant 0 : index
    %c1_42 = arith.constant 1 : index
    %c0_43 = arith.constant 0 : index
    %57 = vector.load %arg11[%c0_41, %c1_42, %c0_43] : memref<10x18x8xbf16, #tpu.memory_space<vmem>>, vector<10x16x8xbf16>
    tpu.vector_store %arg11[%c0_41, %c1_42, %c0_43], %56 {strides = array<i32>} : memref<10x18x8xbf16, #tpu.memory_space<vmem>>, vector<10x16x8xbf16>,
    %cst_44 = arith.constant 0.000000e+00 : bf16
    %58 = vector.broadcast %cst_44 : bf16 to vector<10x1x8xbf16>
    %c0_45 = arith.constant 0 : index
    %c0_46 = arith.constant 0 : index
    %c0_47 = arith.constant 0 : index
    %59 = vector.load %arg11[%c0_45, %c0_46, %c0_47] : memref<10x18x8xbf16, #tpu.memory_space<vmem>>, vector<10x1x8xbf16>
    tpu.vector_store %arg11[%c0_45, %c0_46, %c0_47], %58 {strides = array<i32>} : memref<10x18x8xbf16, #tpu.memory_space<vmem>>, vector<10x1x8xbf16>,
    %cst_48 = arith.constant 0.000000e+00 : bf16
    %60 = vector.broadcast %cst_48 : bf16 to vector<10x1x8xbf16>
    %c0_49 = arith.constant 0 : index
    %c17_50 = arith.constant 17 : index
    %c0_51 = arith.constant 0 : index
    %61 = vector.load %arg11[%c0_49, %c17_50, %c0_51] : memref<10x18x8xbf16, #tpu.memory_space<vmem>>, vector<10x1x8xbf16>
    tpu.vector_store %arg11[%c0_49, %c17_50, %c0_51], %60 {strides = array<i32>} : memref<10x18x8xbf16, #tpu.memory_space<vmem>>, vector<10x1x8xbf16>,
    %c0_i32_52 = arith.constant 0 : i32
    %62 = arith.cmpi eq, %arg1, %c0_i32_52 : i32
    %63 = arith.extui %62 : i1 to i32
    %c0_i32_53 = arith.constant 0 : i32
    %64 = arith.cmpi ne, %63, %c0_i32_53 : i32
    scf.if %64 {
      %cst_89 = arith.constant 0.000000e+00 : bf16
      %114 = vector.broadcast %cst_89 : bf16 to vector<1x16x8xbf16>
      %c0_90 = arith.constant 0 : index
      %c1_91 = arith.constant 1 : index
      %c0_92 = arith.constant 0 : index
      %115 = vector.load %arg11[%c0_90, %c1_91, %c0_92] : memref<10x18x8xbf16, #tpu.memory_space<vmem>>, vector<1x16x8xbf16>
      tpu.vector_store %arg11[%c0_90, %c1_91, %c0_92], %114 {strides = array<i32>} : memref<10x18x8xbf16, #tpu.memory_space<vmem>>, vector<1x16x8xbf16>,
    } else {
    }
    %c1_i32_54 = arith.constant 1 : i32
    %65 = arith.cmpi eq, %arg1, %c1_i32_54 : i32
    %66 = arith.extui %65 : i1 to i32
    %c0_i32_55 = arith.constant 0 : i32
    %67 = arith.cmpi ne, %66, %c0_i32_55 : i32
    scf.if %67 {
      %cst_89 = arith.constant 0.000000e+00 : bf16
      %114 = vector.broadcast %cst_89 : bf16 to vector<1x16x8xbf16>
      %c9 = arith.constant 9 : index
      %c1_90 = arith.constant 1 : index
      %c0_91 = arith.constant 0 : index
      %115 = vector.load %arg11[%c9, %c1_90, %c0_91] : memref<10x18x8xbf16, #tpu.memory_space<vmem>>, vector<1x16x8xbf16>
      tpu.vector_store %arg11[%c9, %c1_90, %c0_91], %114 {strides = array<i32>} : memref<10x18x8xbf16, #tpu.memory_space<vmem>>, vector<1x16x8xbf16>,
    } else {
    }
    %cst_56 = arith.constant 0.000000e+00 : f32
    %68 = vector.broadcast %cst_56 : f32 to vector<128x8xf32>
    %c0_57 = arith.constant 0 : index
    %c0_58 = arith.constant 0 : index
    %c0_59 = arith.constant 0 : index
    %69 = vector.load %arg11[%c0_57, %c0_58, %c0_59] : memref<10x18x8xbf16, #tpu.memory_space<vmem>>, vector<8x18x8xbf16>
    %70 = vector.extract_strided_slice %69 {offsets = [0, 0, 0], sizes = [8, 16, 8], strides = [1, 1, 1]} : vector<8x18x8xbf16> to vector<8x16x8xbf16>
    %71 = vector.extract_strided_slice %69 {offsets = [0, 1, 0], sizes = [8, 16, 8], strides = [1, 1, 1]} : vector<8x18x8xbf16> to vector<8x16x8xbf16>
    %72 = vector.extract_strided_slice %69 {offsets = [0, 2, 0], sizes = [8, 16, 8], strides = [1, 1, 1]} : vector<8x18x8xbf16> to vector<8x16x8xbf16>
    %73 = tpu.concatenate %70, %71, %72 in 2 : vector<8x16x8xbf16>, vector<8x16x8xbf16>, vector<8x16x8xbf16> -> vector<8x16x24xbf16>
    %74 = vector.shape_cast %73 : vector<8x16x24xbf16> to vector<128x24xbf16>
    %c0_60 = arith.constant 0 : index
    %c0_61 = arith.constant 0 : index
    %c0_62 = arith.constant 0 : index
    %75 = vector.load %arg7[%c0_60, %c0_61, %c0_62] : memref<3x24x8xbf16, #tpu.memory_space<vmem>>, vector<1x24x8xbf16>
    %76 = vector.shape_cast %75 : vector<1x24x8xbf16> to vector<24x8xbf16>
    %cst_63 = arith.constant dense<0.000000e+00> : vector<128x8xf32>
    %77 = tpu.matmul %74, %76, %cst_63 {dimension_numbers = #tpu.dot_dimension_numbers<[1], [0], [0], [1], [0, 0, 1, 1], [], []>} : vector<128x24xbf16>, vector<24x8xbf16>, vector<128x8xf32> -> vector<128x8xf32>
    %78 = arith.addf %68, %77 : vector<128x8xf32>
    %c1_64 = arith.constant 1 : index
    %c0_65 = arith.constant 0 : index
    %c0_66 = arith.constant 0 : index
    %79 = vector.load %arg11[%c1_64, %c0_65, %c0_66] : memref<10x18x8xbf16, #tpu.memory_space<vmem>>, vector<8x18x8xbf16>
    %80 = vector.extract_strided_slice %79 {offsets = [0, 0, 0], sizes = [8, 16, 8], strides = [1, 1, 1]} : vector<8x18x8xbf16> to vector<8x16x8xbf16>
    %81 = vector.extract_strided_slice %79 {offsets = [0, 1, 0], sizes = [8, 16, 8], strides = [1, 1, 1]} : vector<8x18x8xbf16> to vector<8x16x8xbf16>
    %82 = vector.extract_strided_slice %79 {offsets = [0, 2, 0], sizes = [8, 16, 8], strides = [1, 1, 1]} : vector<8x18x8xbf16> to vector<8x16x8xbf16>
    %83 = tpu.concatenate %80, %81, %82 in 2 : vector<8x16x8xbf16>, vector<8x16x8xbf16>, vector<8x16x8xbf16> -> vector<8x16x24xbf16>
    %84 = vector.shape_cast %83 : vector<8x16x24xbf16> to vector<128x24xbf16>
    %c1_67 = arith.constant 1 : index
    %c0_68 = arith.constant 0 : index
    %c0_69 = arith.constant 0 : index
    %85 = vector.load %arg7[%c1_67, %c0_68, %c0_69] : memref<3x24x8xbf16, #tpu.memory_space<vmem>>, vector<1x24x8xbf16>
    %86 = vector.shape_cast %85 : vector<1x24x8xbf16> to vector<24x8xbf16>
    %cst_70 = arith.constant dense<0.000000e+00> : vector<128x8xf32>
    %87 = tpu.matmul %84, %86, %cst_70 {dimension_numbers = #tpu.dot_dimension_numbers<[1], [0], [0], [1], [0, 0, 1, 1], [], []>} : vector<128x24xbf16>, vector<24x8xbf16>, vector<128x8xf32> -> vector<128x8xf32>
    %88 = arith.addf %78, %87 : vector<128x8xf32>
    %c2_71 = arith.constant 2 : index
    %c0_72 = arith.constant 0 : index
    %c0_73 = arith.constant 0 : index
    %89 = vector.load %arg11[%c2_71, %c0_72, %c0_73] : memref<10x18x8xbf16, #tpu.memory_space<vmem>>, vector<8x18x8xbf16>
    %90 = vector.extract_strided_slice %89 {offsets = [0, 0, 0], sizes = [8, 16, 8], strides = [1, 1, 1]} : vector<8x18x8xbf16> to vector<8x16x8xbf16>
    %91 = vector.extract_strided_slice %89 {offsets = [0, 1, 0], sizes = [8, 16, 8], strides = [1, 1, 1]} : vector<8x18x8xbf16> to vector<8x16x8xbf16>
    %92 = vector.extract_strided_slice %89 {offsets = [0, 2, 0], sizes = [8, 16, 8], strides = [1, 1, 1]} : vector<8x18x8xbf16> to vector<8x16x8xbf16>
    %93 = tpu.concatenate %90, %91, %92 in 2 : vector<8x16x8xbf16>, vector<8x16x8xbf16>, vector<8x16x8xbf16> -> vector<8x16x24xbf16>
    %94 = vector.shape_cast %93 : vector<8x16x24xbf16> to vector<128x24xbf16>
    %c2_74 = arith.constant 2 : index
    %c0_75 = arith.constant 0 : index
    %c0_76 = arith.constant 0 : index
    %95 = vector.load %arg7[%c2_74, %c0_75, %c0_76] : memref<3x24x8xbf16, #tpu.memory_space<vmem>>, vector<1x24x8xbf16>
    %96 = vector.shape_cast %95 : vector<1x24x8xbf16> to vector<24x8xbf16>
    %cst_77 = arith.constant dense<0.000000e+00> : vector<128x8xf32>
    %97 = tpu.matmul %94, %96, %cst_77 {dimension_numbers = #tpu.dot_dimension_numbers<[1], [0], [0], [1], [0, 0, 1, 1], [], []>} : vector<128x24xbf16>, vector<24x8xbf16>, vector<128x8xf32> -> vector<128x8xf32>
    %98 = arith.addf %88, %97 : vector<128x8xf32>
    %c0_78 = arith.constant 0 : index
    %c0_79 = arith.constant 0 : index
    %c0_80 = arith.constant 0 : index
    %c0_81 = arith.constant 0 : index
    %99 = vector.load %arg2[%c0_78, %c0_79, %c0_80, %c0_81] : memref<1x8x16x8xbf16, #tpu.memory_space<vmem>>, vector<1x8x16x8xbf16>
    %100 = vector.shape_cast %99 : vector<1x8x16x8xbf16> to vector<8x16x8xbf16>
    %101 = vector.shape_cast %100 : vector<8x16x8xbf16> to vector<128x8xbf16>
    %102 = arith.extf %101 : vector<128x8xbf16> to vector<128x8xf32>
    %c0_82 = arith.constant 0 : index
    %c0_83 = arith.constant 0 : index
    %103 = vector.load %arg8[%c0_82, %c0_83] : memref<1x8xf32, #tpu.memory_space<vmem>>, vector<1x8xf32>
    %104 = vector.broadcast %103 : vector<1x8xf32> to vector<128x8xf32>
    %105 = arith.addf %98, %104 : vector<128x8xf32>
    %106 = arith.addf %105, %102 : vector<128x8xf32>
    %cst_84 = arith.constant 0.000000e+00 : f32
    %107 = vector.broadcast %cst_84 : f32 to vector<128x8xf32>
    %108 = arith.maximumf %106, %107 : vector<128x8xf32>
    %109 = vector.shape_cast %108 : vector<128x8xf32> to vector<8x16x8xf32>
    %110 = arith.truncf %109 : vector<8x16x8xf32> to vector<8x16x8xbf16>
    %c0_85 = arith.constant 0 : index
    %c0_86 = arith.constant 0 : index
    %c0_87 = arith.constant 0 : index
    %c0_88 = arith.constant 0 : index
    %111 = vector.load %arg9[%c0_85, %c0_86, %c0_87, %c0_88] : memref<1x8x16x8xbf16, #tpu.memory_space<vmem>>, vector<1x8x16x8xbf16>
    %112 = vector.shape_cast %111 : vector<1x8x16x8xbf16> to vector<8x16x8xbf16>
    %113 = vector.shape_cast %110 : vector<8x16x8xbf16> to vector<1x8x16x8xbf16>
    tpu.vector_store %arg9[%c0_85, %c0_86, %c0_87, %c0_88], %113 {strides = array<i32>} : memref<1x8x16x8xbf16, #tpu.memory_space<vmem>>, vector<1x8x16x8xbf16>,
    return
  }
  func.func @transform_0(%arg0: i32, %arg1: i32) -> (i32, i32, i32, i32) {
    %c0_i32 = arith.constant 0 : i32
    %c0_i32_0 = arith.constant 0 : i32
    %c0_i32_1 = arith.constant 0 : i32
    return %arg0, %arg1, %c0_i32, %c0_i32_0 : i32, i32, i32, i32
  }
  func.func @transform_1(%arg0: i32, %arg1: i32) -> (i32, i32, i32, i32) {
    %c4_i32 = arith.constant 4 : i32
    %0 = arith.muli %arg1, %c4_i32 : i32
    %c1_i32 = arith.constant 1 : i32
    %1 = arith.subi %0, %c1_i32 : i32
    %c0_i32 = arith.constant 0 : i32
    %2 = arith.maxsi %1, %c0_i32 : i32
    %c0_i32_0 = arith.constant 0 : i32
    %c0_i32_1 = arith.constant 0 : i32
    %c0_i32_2 = arith.constant 0 : i32
    return %arg0, %2, %c0_i32_0, %c0_i32_1 : i32, i32, i32, i32
  }
  func.func @transform_2(%arg0: i32, %arg1: i32) -> (i32, i32, i32, i32) {
    %c4_i32 = arith.constant 4 : i32
    %0 = arith.muli %arg1, %c4_i32 : i32
    %c4_i32_0 = arith.constant 4 : i32
    %1 = arith.addi %0, %c4_i32_0 : i32
    %c7_i32 = arith.constant 7 : i32
    %2 = arith.minsi %1, %c7_i32 : i32
    %c0_i32 = arith.constant 0 : i32
    %c0_i32_1 = arith.constant 0 : i32
    %c0_i32_2 = arith.constant 0 : i32
    return %arg0, %2, %c0_i32, %c0_i32_1 : i32, i32, i32, i32
  }
  func.func @transform_3(%arg0: i32, %arg1: i32) -> (i32, i32, i32) {
    %c0_i32 = arith.constant 0 : i32
    %c0_i32_0 = arith.constant 0 : i32
    %c0_i32_1 = arith.constant 0 : i32
    %c0_i32_2 = arith.constant 0 : i32
    return %c0_i32, %c0_i32_0, %c0_i32_1 : i32, i32, i32
  }
  func.func @transform_4(%arg0: i32, %arg1: i32) -> (i32, i32) {
    %c0_i32 = arith.constant 0 : i32
    %c0_i32_0 = arith.constant 0 : i32
    %c0_i32_1 = arith.constant 0 : i32
    return %c0_i32, %c0_i32_0 : i32, i32
  }
  func.func @transform_5(%arg0: i32, %arg1: i32) -> (i32, i32, i32) {
    %c0_i32 = arith.constant 0 : i32
    %c0_i32_0 = arith.constant 0 : i32
    %c0_i32_1 = arith.constant 0 : i32
    %c0_i32_2 = arith.constant 0 : i32
    return %c0_i32, %c0_i32_0, %c0_i32_1 : i32, i32, i32
  }
  func.func @transform_6(%arg0: i32, %arg1: i32) -> (i32, i32) {
    %c0_i32 = arith.constant 0 : i32
    %c0_i32_0 = arith.constant 0 : i32
    %c0_i32_1 = arith.constant 0 : i32
    return %c0_i32, %c0_i32_0 : i32, i32
  }
  func.func @transform_7(%arg0: i32, %arg1: i32) -> (i32, i32, i32, i32) {
    %c0_i32 = arith.constant 0 : i32
    %c0_i32_0 = arith.constant 0 : i32
    %c0_i32_1 = arith.constant 0 : i32
    return %arg0, %arg1, %c0_i32, %c0_i32_0 : i32, i32, i32, i32
  }
}

</mosaic_0001>

<llo_original>
// kernel: basic_block_forward.1
$region0: #{basic_block_forward.1}
  #allocation0 [shape = 'u32[]', space=smem, size = 0x4, offset = 0x4, fixed_abs, tag = 'smem constant byte address 0x4 - core index']
  #allocation1 [shape = 'u32[144,128]{1,0:T(1,128)}', space=vmem, size = 0x12000, scoped, tag = 'internal scratch']
  #allocation2 [shape = 'bf16[12,18,8]{2,1,0:T(8,128)(2,1)}', space=vmem, size = 0x12000, scoped, tag = 'scratch operand']
  #allocation3 [shape = 'bf16[10,18,8]{2,1,0:T(8,128)(2,1)}', space=vmem, size = 0xf000, scoped, tag = 'scratch operand']
  %s0 = inlined_call_operand.vmem [shape: bf16[2,16,16,8], index: 0, kind: input, shape index: {}, may-alias: {0,1,2}]
  %s1 = inlined_call_operand.vmem [shape: bf16[2,16,16,8], index: 1, kind: input, shape index: {}, may-alias: {0,1,2}]
  %s2 = inlined_call_operand.vmem [shape: bf16[2,16,16,8], index: 2, kind: input, shape index: {}, may-alias: {0,1,2}]
  %s3 = inlined_call_operand.vmem [shape: bf16[3,24,8], index: 3, kind: input, shape index: {}]
  %s4 = inlined_call_operand.vmem [shape: f32[1,8], index: 4, kind: input, shape index: {}]
  %s5 = inlined_call_operand.vmem [shape: bf16[3,24,8], index: 5, kind: input, shape index: {}]
  %s6 = inlined_call_operand.vmem [shape: f32[1,8], index: 6, kind: input, shape index: {}]
  %s7 = inlined_call_operand.vmem [shape: bf16[2,16,16,8], index: 7, kind: output, shape index: {}]
  %s8 = sld [smem:[#allocation0]]
  $region85: #{basic_block_forward.1} parent=0
    _
  %s10 = ssub.s32 1, %s8
  %s11 = scalar_select 0, %s10, %s8
  loop: start=0, step=1, limit=6
  $region2: #{basic_block_forward.1} parent=0 // loop_pre_header
    _
  $region3: #{basic_block_forward.1} parent=0 // loop_header
    %s13 = sphi 0, %s17
    %p14 = scmp.ge.s32.totalorder %s13, 6
    %s20 = sphi 0, %s32
    %s21 = sphi 0, %s28
    %s22 = sphi 0, %s20
    %s23 = sphi 0, %s21
    %s24 = sphi 0, %s22
    %s25 = sphi 0, %s23
    %s37 = sphi 0, %s39
    %s40 = sphi 0, %s37
    %s41 = sphi 0, %s40
    %s57 = sphi 0, %s41
    %s73 = sphi 0, %s75
    %s76 = sphi 0, %s73
    %s77 = sphi 0, %s76
    %s93 = sphi 0, %s77
    %s109 = sphi 0, %s111
    %s112 = sphi 0, %s109
    %s113 = sphi 0, %s112
    %s129 = sphi 0, %s113
    %s133 = sphi 0, %s133
    %s135 = sphi 0, %s133
    %s136 = sphi 0, %s135
    %s150 = sphi 0, %s136
    %s154 = sphi 0, %s154
    %s156 = sphi 0, %s154
    %s157 = sphi 0, %s156
    %s171 = sphi 0, %s157
    %s175 = sphi 0, %s175
    %s177 = sphi 0, %s175
    %s178 = sphi 0, %s177
    %s192 = sphi 0, %s178
    %s196 = sphi 0, %s196
    %s198 = sphi 0, %s196
    %s199 = sphi 0, %s198
    %s213 = sphi 0, %s199
    %s221 = sphi 0, %s223
    %s224 = sphi 0, %s221
    %s225 = sphi 0, %s224
    %s241 = sphi 0, %s225
  $region4: #{basic_block_forward.1} parent=0 // loop_header_branch
    %16 = sbr.rel (%p14) target = $region8
  $region5: #{basic_block_forward.1} parent=0 // loop_body
    %s18 = ssub.s32 %s13, 1
    %s19 = ssub.s32 %s13, 2
    %s26 = sadd.s32 1, %s21
    %p27 = scmp.ge.s32.totalorder %s26, 2
    %s28 = scalar_select %p27, 0, %s26
    %s29 = sadd.s32 1, %s20
    %s30 = scalar_select %p27, %s29, %s20
    %p31 = scmp.ge.s32.totalorder %s30, 2
    %s32 = scalar_select %p31, 0, %s30
    %s33 = ssub.s32 %s20, %s32
    %s34 = ssub.s32 %s21, %s28
    %s35 = sor.u32 %s33, %s34
    %p36 = scmp.eq.s32.totalorder %s35, 0
    %s38 = sadd.s32 %s37, 1
    %s39 = scalar_select %p36, %s37, %s38
    %p42 = pneg %p36
    %p43 = scmp.eq.s32.totalorder %s13, 3
    %p44 = por %p42, %p43
    %p45 = scmp.ne.s32.totalorder %s37, %s40
    %p46 = scmp.eq.s32.totalorder %s13, 0
    %p47 = por %p45, %p46
    %p48 = scmp.ne.s32.totalorder %s37, %s40
    %p49 = scmp.eq.s32.totalorder %s18, 3
    %p50 = por %p48, %p49
    %p51 = scmp.ne.s32.totalorder %s40, %s41
    %p52 = scmp.eq.s32.totalorder %s18, 0
    %p53 = por %p51, %p52
    %p54 = scmp.ne.s32.totalorder %s40, %s41
    %p55 = scmp.eq.s32.totalorder %s19, 3
    %p56 = por %p54, %p55
    %p58 = scmp.ne.s32.totalorder %s41, %s57
    %p59 = scmp.eq.s32.totalorder %s19, 0
    %p60 = por %p58, %p59
    %s61 = smul.u32 %s21, 4
    %s62 = ssub.s32 %s61, 1
    %p63 = scmp.gt.s32.totalorder %s62, 0
    %s64 = scalar_select %p63, %s62, 0
    %s65 = smul.u32 %s28, 4
    %s66 = ssub.s32 %s65, 1
    %p67 = scmp.gt.s32.totalorder %s66, 0
    %s68 = scalar_select %p67, %s66, 0
    %s69 = ssub.s32 %s20, %s32
    %s70 = ssub.s32 %s64, %s68
    %s71 = sor.u32 %s69, %s70
    %p72 = scmp.eq.s32.totalorder %s71, 0
    %s74 = sadd.s32 %s73, 1
    %s75 = scalar_select %p72, %s73, %s74
    %p78 = pneg %p72
    %p79 = scmp.eq.s32.totalorder %s13, 3
    %p80 = por %p78, %p79
    %p81 = scmp.ne.s32.totalorder %s73, %s76
    %p82 = scmp.eq.s32.totalorder %s13, 0
    %p83 = por %p81, %p82
    %p84 = scmp.ne.s32.totalorder %s73, %s76
    %p85 = scmp.eq.s32.totalorder %s18, 3
    %p86 = por %p84, %p85
    %p87 = scmp.ne.s32.totalorder %s76, %s77
    %p88 = scmp.eq.s32.totalorder %s18, 0
    %p89 = por %p87, %p88
    %p90 = scmp.ne.s32.totalorder %s76, %s77
    %p91 = scmp.eq.s32.totalorder %s19, 3
    %p92 = por %p90, %p91
    %p94 = scmp.ne.s32.totalorder %s77, %s93
    %p95 = scmp.eq.s32.totalorder %s19, 0
    %p96 = por %p94, %p95
    %s97 = smul.u32 %s21, 4
    %s98 = sadd.s32 %s97, 4
    %p99 = scmp.lt.s32.totalorder %s98, 7
    %s100 = scalar_select %p99, %s98, 7
    %s101 = smul.u32 %s28, 4
    %s102 = sadd.s32 %s101, 4
    %p103 = scmp.lt.s32.totalorder %s102, 7
    %s104 = scalar_select %p103, %s102, 7
    %s105 = ssub.s32 %s20, %s32
    %s106 = ssub.s32 %s100, %s104
    %s107 = sor.u32 %s105, %s106
    %p108 = scmp.eq.s32.totalorder %s107, 0
    %s110 = sadd.s32 %s109, 1
    %s111 = scalar_select %p108, %s109, %s110
    %p114 = pneg %p108
    %p115 = scmp.eq.s32.totalorder %s13, 3
    %p116 = por %p114, %p115
    %p117 = scmp.ne.s32.totalorder %s109, %s112
    %p118 = scmp.eq.s32.totalorder %s13, 0
    %p119 = por %p117, %p118
    %p120 = scmp.ne.s32.totalorder %s109, %s112
    %p121 = scmp.eq.s32.totalorder %s18, 3
    %p122 = por %p120, %p121
    %p123 = scmp.ne.s32.totalorder %s112, %s113
    %p124 = scmp.eq.s32.totalorder %s18, 0
    %p125 = por %p123, %p124
    %p126 = scmp.ne.s32.totalorder %s112, %s113
    %p127 = scmp.eq.s32.totalorder %s19, 3
    %p128 = por %p126, %p127
    %p130 = scmp.ne.s32.totalorder %s113, %s129
    %p131 = scmp.eq.s32.totalorder %s19, 0
    %p132 = por %p130, %p131
    %s134 = sadd.s32 %s133, 1
    %p137 = scmp.eq.s32.totalorder %s13, 3
    %p138 = scmp.ne.s32.totalorder %s133, %s135
    %p139 = scmp.eq.s32.totalorder %s13, 0
    %p140 = por %p138, %p139
    %p141 = scmp.ne.s32.totalorder %s133, %s135
    %p142 = scmp.eq.s32.totalorder %s18, 3
    %p143 = por %p141, %p142
    %p144 = scmp.ne.s32.totalorder %s135, %s136
    %p145 = scmp.eq.s32.totalorder %s18, 0
    %p146 = por %p144, %p145
    %p147 = scmp.ne.s32.totalorder %s135, %s136
    %p148 = scmp.eq.s32.totalorder %s19, 3
    %p149 = por %p147, %p148
    %p151 = scmp.ne.s32.totalorder %s136, %s150
    %p152 = scmp.eq.s32.totalorder %s19, 0
    %p153 = por %p151, %p152
    %s155 = sadd.s32 %s154, 1
    %p158 = scmp.eq.s32.totalorder %s13, 3
    %p159 = scmp.ne.s32.totalorder %s154, %s156
    %p160 = scmp.eq.s32.totalorder %s13, 0
    %p161 = por %p159, %p160
    %p162 = scmp.ne.s32.totalorder %s154, %s156
    %p163 = scmp.eq.s32.totalorder %s18, 3
    %p164 = por %p162, %p163
    %p165 = scmp.ne.s32.totalorder %s156, %s157
    %p166 = scmp.eq.s32.totalorder %s18, 0
    %p167 = por %p165, %p166
    %p168 = scmp.ne.s32.totalorder %s156, %s157
    %p169 = scmp.eq.s32.totalorder %s19, 3
    %p170 = por %p168, %p169
    %p172 = scmp.ne.s32.totalorder %s157, %s171
    %p173 = scmp.eq.s32.totalorder %s19, 0
    %p174 = por %p172, %p173
    %s176 = sadd.s32 %s175, 1
    %p179 = scmp.eq.s32.totalorder %s13, 3
    %p180 = scmp.ne.s32.totalorder %s175, %s177
    %p181 = scmp.eq.s32.totalorder %s13, 0
    %p182 = por %p180, %p181
    %p183 = scmp.ne.s32.totalorder %s175, %s177
    %p184 = scmp.eq.s32.totalorder %s18, 3
    %p185 = por %p183, %p184
    %p186 = scmp.ne.s32.totalorder %s177, %s178
    %p187 = scmp.eq.s32.totalorder %s18, 0
    %p188 = por %p186, %p187
    %p189 = scmp.ne.s32.totalorder %s177, %s178
    %p190 = scmp.eq.s32.totalorder %s19, 3
    %p191 = por %p189, %p190
    %p193 = scmp.ne.s32.totalorder %s178, %s192
    %p194 = scmp.eq.s32.totalorder %s19, 0
    %p195 = por %p193, %p194
    %s197 = sadd.s32 %s196, 1
    %p200 = scmp.eq.s32.totalorder %s13, 3
    %p201 = scmp.ne.s32.totalorder %s196, %s198
    %p202 = scmp.eq.s32.totalorder %s13, 0
    %p203 = por %p201, %p202
    %p204 = scmp.ne.s32.totalorder %s196, %s198
    %p205 = scmp.eq.s32.totalorder %s18, 3
    %p206 = por %p204, %p205
    %p207 = scmp.ne.s32.totalorder %s198, %s199
    %p208 = scmp.eq.s32.totalorder %s18, 0
    %p209 = por %p207, %p208
    %p210 = scmp.ne.s32.totalorder %s198, %s199
    %p211 = scmp.eq.s32.totalorder %s19, 3
    %p212 = por %p210, %p211
    %p214 = scmp.ne.s32.totalorder %s199, %s213
    %p215 = scmp.eq.s32.totalorder %s19, 0
    %p216 = por %p214, %p215
    %s217 = ssub.s32 %s20, %s32
    %s218 = ssub.s32 %s21, %s28
    %s219 = sor.u32 %s217, %s218
    %p220 = scmp.eq.s32.totalorder %s219, 0
    %s222 = sadd.s32 %s221, 1
    %s223 = scalar_select %p220, %s221, %s222
    %p226 = pneg %p220
    %p227 = scmp.eq.s32.totalorder %s13, 3
    %p228 = por %p226, %p227
    %p229 = scmp.ne.s32.totalorder %s221, %s224
    %p230 = scmp.eq.s32.totalorder %s13, 0
    %p231 = por %p229, %p230
    %p232 = scmp.ne.s32.totalorder %s221, %s224
    %p233 = scmp.eq.s32.totalorder %s18, 3
    %p234 = por %p232, %p233
    %p235 = scmp.ne.s32.totalorder %s224, %s225
    %p236 = scmp.eq.s32.totalorder %s18, 0
    %p237 = por %p235, %p236
    %p238 = scmp.ne.s32.totalorder %s224, %s225
    %p239 = scmp.eq.s32.totalorder %s19, 3
    %p240 = por %p238, %p239
    %p242 = scmp.ne.s32.totalorder %s225, %s241
    %p243 = scmp.eq.s32.totalorder %s19, 0
    %p244 = por %p242, %p243
    %p245 = scmp.le.s32.totalorder 1, %s13
    %p246 = scmp.lt.s32.totalorder %s13, 5
    %p247 = pnand %p245, %p246
    %p248 = pneg %p247
    // Predicated region
    $region9: #{basic_block_forward.1} parent=5 // pred_check
      _
    $region10: #{basic_block_forward.1} parent=5 // pred_check_branch
      %250 = sbr.rel (%p247) target = $region12
    $region11: #{basic_block_forward.1} parent=5 // pred_region
      %s251 = ssub.s32 %s13, 1
      // Predicated region
      $region13: #{basic_block_forward.1} parent=11 // pred_check
        %p252 = pneg %p146
      $region14: #{basic_block_forward.1} parent=11 // pred_check_branch
        %254 = sbr.rel (%p252) target = $region16
      $region15: #{basic_block_forward.1} parent=11 // pred_region
        _
      $region16: #{basic_block_forward.1} parent=11 // pred_fallthru
        _
      // Predicated region
      $region17: #{basic_block_forward.1} parent=11 // pred_check
        %p255 = pneg %p167
      $region18: #{basic_block_forward.1} parent=11 // pred_check_branch
        %257 = sbr.rel (%p255) target = $region20
      $region19: #{basic_block_forward.1} parent=11 // pred_region
        _
      $region20: #{basic_block_forward.1} parent=11 // pred_fallthru
        _
      // Predicated region
      $region21: #{basic_block_forward.1} parent=11 // pred_check
        %p258 = pneg %p188
      $region22: #{basic_block_forward.1} parent=11 // pred_check_branch
        %260 = sbr.rel (%p258) target = $region24
      $region23: #{basic_block_forward.1} parent=11 // pred_region
        _
      $region24: #{basic_block_forward.1} parent=11 // pred_fallthru
        _
      // Predicated region
      $region25: #{basic_block_forward.1} parent=11 // pred_check
        %p261 = pneg %p209
      $region26: #{basic_block_forward.1} parent=11 // pred_check_branch
        %263 = sbr.rel (%p261) target = $region28
      $region27: #{basic_block_forward.1} parent=11 // pred_region
        _
      $region28: #{basic_block_forward.1} parent=11 // pred_fallthru
        _
    $region12: #{basic_block_forward.1} parent=5 // pred_fallthru
      _
    %p264 = scmp.lt.s32.totalorder %s13, 4
    // Predicated region
    $region29: #{basic_block_forward.1} parent=5 // pred_check
      %p265 = pneg %p264
    $region30: #{basic_block_forward.1} parent=5 // pred_check_branch
      %267 = sbr.rel (%p265) target = $region32
    $region31: #{basic_block_forward.1} parent=5 // pred_region
      // Predicated region
      $region33: #{basic_block_forward.1} parent=31 // pred_check
        %p268 = pneg %p47
      $region34: #{basic_block_forward.1} parent=31 // pred_check_branch
        %270 = sbr.rel (%p268) target = $region36
      $region35: #{basic_block_forward.1} parent=31 // pred_region
        %s271 = smul.u32 8, %s21
        %p272 = scmp.lt.s32.totalorder %s20, 1
        %s273 = scalar_select %p272, %s20, 1
        %p274 = scmp.lt.s32.totalorder %s271, 15
        %s275 = scalar_select %p274, %s271, 15
        %s276 = smul.addr %s275, 2
        %s277 = smul.addr %s273, 32
        %s278 = sadd.s32 %s276, %s277
        %s279 = smul.addr %s278, 4
        %s280 = scalar_lea.vmem %s0, %s279
        %s281 = smul.u32 8, %s21
      $region36: #{basic_block_forward.1} parent=31 // pred_fallthru
        _
      // Predicated region
      $region37: #{basic_block_forward.1} parent=31 // pred_check
        %p282 = pneg %p83
      $region38: #{basic_block_forward.1} parent=31 // pred_check_branch
        %284 = sbr.rel (%p282) target = $region40
      $region39: #{basic_block_forward.1} parent=31 // pred_region
        %s285 = smul.u32 %s21, 4
        %s286 = ssub.s32 %s285, 1
        %p287 = scmp.gt.s32.totalorder %s286, 0
        %s288 = scalar_select %p287, %s286, 0
        %s289 = smul.u32 2, %s288
        %p290 = scmp.lt.s32.totalorder %s20, 1
        %s291 = scalar_select %p290, %s20, 1
        %p292 = scmp.lt.s32.totalorder %s289, 15
        %s293 = scalar_select %p292, %s289, 15
        %s294 = smul.addr %s293, 2
        %s295 = smul.addr %s291, 32
        %s296 = sadd.s32 %s294, %s295
        %s297 = smul.addr %s296, 4
        %s298 = scalar_lea.vmem %s1, %s297
        %s299 = smul.u32 %s21, 4
        %s300 = ssub.s32 %s299, 1
        %p301 = scmp.gt.s32.totalorder %s300, 0
        %s302 = scalar_select %p301, %s300, 0
        %s303 = smul.u32 2, %s302
      $region40: #{basic_block_forward.1} parent=31 // pred_fallthru
        _
      // Predicated region
      $region41: #{basic_block_forward.1} parent=31 // pred_check
        %p304 = pneg %p119
      $region42: #{basic_block_forward.1} parent=31 // pred_check_branch
        %306 = sbr.rel (%p304) target = $region44
      $region43: #{basic_block_forward.1} parent=31 // pred_region
        %s307 = smul.u32 %s21, 4
        %s308 = sadd.s32 %s307, 4
        %p309 = scmp.lt.s32.totalorder %s308, 7
        %s310 = scalar_select %p309, %s308, 7
        %s311 = smul.u32 2, %s310
        %p312 = scmp.lt.s32.totalorder %s20, 1
        %s313 = scalar_select %p312, %s20, 1
        %p314 = scmp.lt.s32.totalorder %s311, 15
        %s315 = scalar_select %p314, %s311, 15
        %s316 = smul.addr %s315, 2
        %s317 = smul.addr %s313, 32
        %s318 = sadd.s32 %s316, %s317
        %s319 = smul.addr %s318, 4
        %s320 = scalar_lea.vmem %s2, %s319
        %s321 = smul.u32 %s21, 4
        %s322 = sadd.s32 %s321, 4
        %p323 = scmp.lt.s32.totalorder %s322, 7
        %s324 = scalar_select %p323, %s322, 7
        %s325 = smul.u32 2, %s324
      $region44: #{basic_block_forward.1} parent=31 // pred_fallthru
        _
    $region32: #{basic_block_forward.1} parent=5 // pred_fallthru
      _
    %p326 = scmp.le.s32.totalorder 1, %s13
    %p327 = scmp.lt.s32.totalorder %s13, 5
    %p328 = pnand %p326, %p327
    %p329 = pneg %p328
    // Predicated region
    $region45: #{basic_block_forward.1} parent=5 // pred_check
      _
    $region46: #{basic_block_forward.1} parent=5 // pred_check_branch
      %331 = sbr.rel (%p328) target = $region48
    $region47: #{basic_block_forward.1} parent=5 // pred_region
      %s332 = ssub.s32 %s13, 1
      %s333 = smul.u32 8, %s23
      %p334 = scmp.lt.s32.totalorder %s22, 1
      %s335 = scalar_select %p334, %s22, 1
      %p336 = scmp.lt.s32.totalorder %s333, 15
      %s337 = scalar_select %p336, %s333, 15
      %s338 = smul.addr %s337, 2
      %s339 = smul.addr %s335, 32
      %s340 = sadd.s32 %s338, %s339
      %s341 = smul.addr %s340, 4
      %s342 = scalar_lea.vmem %s0, %s341
      %p343 = pneg %p53
      %p344 = pneg %p50
      %s345 = smul.u32 %s23, 4
      %s346 = ssub.s32 %s345, 1
      %p347 = scmp.gt.s32.totalorder %s346, 0
      %s348 = scalar_select %p347, %s346, 0
      %s349 = smul.u32 2, %s348
      %p350 = scmp.lt.s32.totalorder %s22, 1
      %s351 = scalar_select %p350, %s22, 1
      %p352 = scmp.lt.s32.totalorder %s349, 15
      %s353 = scalar_select %p352, %s349, 15
      %s354 = smul.addr %s353, 2
      %s355 = smul.addr %s351, 32
      %s356 = sadd.s32 %s354, %s355
      %s357 = smul.addr %s356, 4
      %s358 = scalar_lea.vmem %s1, %s357
      %p359 = pneg %p89
      %p360 = pneg %p86
      %s361 = smul.u32 %s23, 4
      %s362 = sadd.s32 %s361, 4
      %p363 = scmp.lt.s32.totalorder %s362, 7
      %s364 = scalar_select %p363, %s362, 7
      %s365 = smul.u32 2, %s364
      %p366 = scmp.lt.s32.totalorder %s22, 1
      %s367 = scalar_select %p366, %s22, 1
      %p368 = scmp.lt.s32.totalorder %s365, 15
      %s369 = scalar_select %p368, %s365, 15
      %s370 = smul.addr %s369, 2
      %s371 = smul.addr %s367, 32
      %s372 = sadd.s32 %s370, %s371
      %s373 = smul.addr %s372, 4
      %s374 = scalar_lea.vmem %s2, %s373
      %p375 = pneg %p125
      %p376 = pneg %p122
      %p377 = pneg %p146
      %p378 = pneg %p143
      %p379 = pneg %p167
      %p380 = pneg %p164
      %p381 = pneg %p188
      %p382 = pneg %p185
      %p383 = pneg %p209
      %p384 = pneg %p206
      %p385 = pneg %p237
      %p386 = pneg %p234
      %s387 = smul.u32 8, %s23
      %p388 = scmp.lt.s32.totalorder %s22, 1
      %s389 = scalar_select %p388, %s22, 1
      %p390 = scmp.lt.s32.totalorder %s387, 15
      %s391 = scalar_select %p390, %s387, 15
      %s392 = smul.addr %s391, 2
      %s393 = smul.addr %s389, 32
      %s394 = sadd.s32 %s392, %s393
      %s395 = smul.addr %s394, 4
      %s396 = scalar_lea.vmem %s7, %s395
      %s397 = smul.u32 8, %s23
      %p398 = scmp.lt.s32.totalorder %s22, 1
      %s399 = scalar_select %p398, %s22, 1
      %p400 = scmp.lt.s32.totalorder %s397, 15
      %s401 = scalar_select %p400, %s397, 15
      %s402 = smul.addr %s401, 2
      %s403 = smul.addr %s399, 32
      %s404 = sadd.s32 %s402, %s403
      %s405 = smul.addr %s404, 4
      %s406 = scalar_lea.vmem %s0, %s405
      %s407 = smul.u32 8, %s23
      %s408 = smul.u32 %s23, 4
      %s409 = ssub.s32 %s408, 1
      %p410 = scmp.gt.s32.totalorder %s409, 0
      %s411 = scalar_select %p410, %s409, 0
      %s412 = smul.u32 2, %s411
      %p413 = scmp.lt.s32.totalorder %s22, 1
      %s414 = scalar_select %p413, %s22, 1
      %p415 = scmp.lt.s32.totalorder %s412, 15
      %s416 = scalar_select %p415, %s412, 15
      %s417 = smul.addr %s416, 2
      %s418 = smul.addr %s414, 32
      %s419 = sadd.s32 %s417, %s418
      %s420 = smul.addr %s419, 4
      %s421 = scalar_lea.vmem %s1, %s420
      %s422 = smul.u32 %s23, 4
      %s423 = ssub.s32 %s422, 1
      %p424 = scmp.gt.s32.totalorder %s423, 0
      %s425 = scalar_select %p424, %s423, 0
      %s426 = smul.u32 2, %s425
      %s427 = smul.u32 %s23, 4
      %s428 = sadd.s32 %s427, 4
      %p429 = scmp.lt.s32.totalorder %s428, 7
      %s430 = scalar_select %p429, %s428, 7
      %s431 = smul.u32 2, %s430
      %p432 = scmp.lt.s32.totalorder %s22, 1
      %s433 = scalar_select %p432, %s22, 1
      %p434 = scmp.lt.s32.totalorder %s431, 15
      %s435 = scalar_select %p434, %s431, 15
      %s436 = smul.addr %s435, 2
      %s437 = smul.addr %s433, 32
      %s438 = sadd.s32 %s436, %s437
      %s439 = smul.addr %s438, 4
      %s440 = scalar_lea.vmem %s2, %s439
      %s441 = smul.u32 %s23, 4
      %s442 = sadd.s32 %s441, 4
      %p443 = scmp.lt.s32.totalorder %s442, 7
      %s444 = scalar_select %p443, %s442, 7
      %s445 = smul.u32 2, %s444
      %s446 = smul.u32 8, %s23
      %p447 = scmp.lt.s32.totalorder %s22, 1
      %s448 = scalar_select %p447, %s22, 1
      %p449 = scmp.lt.s32.totalorder %s446, 15
      %s450 = scalar_select %p449, %s446, 15
      %s451 = smul.addr %s450, 2
      %s452 = smul.addr %s448, 32
      %s453 = sadd.s32 %s451, %s452
      %s454 = smul.addr %s453, 4
      %s455 = scalar_lea.vmem %s7, %s454
      %s456 = smul.u32 8, %s23
      %vm458 = vcmask 57344
      %vm459 = vsmask.f32 256
      %vm460 = vmand %vm458, %vm459
      %v461 = vld [vmem:[#allocation2] sm:$0x1]
      %v462 = vsel %vm460, 0, %v461
      %463 = vst [vmem:[#allocation2] sm:$0x1] %v462
      %v464 = vld [vmem:[#allocation2 + $0xc] sm:$0x1]
      %v465 = vsel %vm460, 0, %v464
      %466 = vst [vmem:[#allocation2 + $0xc] sm:$0x1] %v465
      %v467 = vld [vmem:[#allocation2 + $0x18] sm:$0x1]
      %v468 = vsel %vm460, 0, %v467
      %469 = vst [vmem:[#allocation2 + $0x18] sm:$0x1] %v468
      %v470 = vld [vmem:[#allocation2 + $0x24] sm:$0x1]
      %v471 = vsel %vm460, 0, %v470
      %472 = vst [vmem:[#allocation2 + $0x24] sm:$0x1] %v471
      %v473 = vld [vmem:[#allocation2 + $0x30] sm:$0x1]
      %v474 = vsel %vm460, 0, %v473
      %475 = vst [vmem:[#allocation2 + $0x30] sm:$0x1] %v474
      %v476 = vld [vmem:[#allocation2 + $0x3c] sm:$0x1]
      %v477 = vsel %vm460, 0, %v476
      %478 = vst [vmem:[#allocation2 + $0x3c] sm:$0x1] %v477
      %v479 = vld [vmem:[#allocation2 + $0x48] sm:$0x1]
      %v480 = vsel %vm460, 0, %v479
      %481 = vst [vmem:[#allocation2 + $0x48] sm:$0x1] %v480
      %v482 = vld [vmem:[#allocation2 + $0x54] sm:$0x1]
      %v483 = vsel %vm460, 0, %v482
      %484 = vst [vmem:[#allocation2 + $0x54] sm:$0x1] %v483
      %v485 = vld [vmem:[#allocation2 + $0x60] sm:$0x1]
      %v486 = vsel %vm460, 0, %v485
      %487 = vst [vmem:[#allocation2 + $0x60] sm:$0x1] %v486
      %v488 = vld [vmem:[#allocation2 + $0x6c] sm:$0x1]
      %v489 = vsel %vm460, 0, %v488
      %490 = vst [vmem:[#allocation2 + $0x6c] sm:$0x1] %v489
      %v491 = vld [vmem:[#allocation2 + $0x78] sm:$0x1]
      %v492 = vsel %vm460, 0, %v491
      %493 = vst [vmem:[#allocation2 + $0x78] sm:$0x1] %v492
      %v494 = vld [vmem:[#allocation2 + $0x84] sm:$0x1]
      %v495 = vsel %vm460, 0, %v494
      %496 = vst [vmem:[#allocation2 + $0x84] sm:$0x1] %v495
      %vm497 = vsmask.f32 7938
      %vm498 = vmand %vm458, %vm497
      %v499 = vld [vmem:[#allocation2 + $0x8] sm:$0x1]
      %v500 = vsel %vm498, 0, %v499
      %501 = vst [vmem:[#allocation2 + $0x8] sm:$0x1] %v500
      %v502 = vld [vmem:[#allocation2 + $0x14] sm:$0x1]
      %v503 = vsel %vm498, 0, %v502
      %504 = vst [vmem:[#allocation2 + $0x14] sm:$0x1] %v503
      %v505 = vld [vmem:[#allocation2 + $0x20] sm:$0x1]
      %v506 = vsel %vm498, 0, %v505
      %507 = vst [vmem:[#allocation2 + $0x20] sm:$0x1] %v506
      %v508 = vld [vmem:[#allocation2 + $0x2c] sm:$0x1]
      %v509 = vsel %vm498, 0, %v508
      %510 = vst [vmem:[#allocation2 + $0x2c] sm:$0x1] %v509
      %v511 = vld [vmem:[#allocation2 + $0x38] sm:$0x1]
      %v512 = vsel %vm498, 0, %v511
      %513 = vst [vmem:[#allocation2 + $0x38] sm:$0x1] %v512
      %v514 = vld [vmem:[#allocation2 + $0x44] sm:$0x1]
      %v515 = vsel %vm498, 0, %v514
      %516 = vst [vmem:[#allocation2 + $0x44] sm:$0x1] %v515
      %v517 = vld [vmem:[#allocation2 + $0x50] sm:$0x1]
      %v518 = vsel %vm498, 0, %v517
      %519 = vst [vmem:[#allocation2 + $0x50] sm:$0x1] %v518
      %v520 = vld [vmem:[#allocation2 + $0x5c] sm:$0x1]
      %v521 = vsel %vm498, 0, %v520
      %522 = vst [vmem:[#allocation2 + $0x5c] sm:$0x1] %v521
      %v523 = vld [vmem:[#allocation2 + $0x68] sm:$0x1]
      %v524 = vsel %vm498, 0, %v523
      %525 = vst [vmem:[#allocation2 + $0x68] sm:$0x1] %v524
      %v526 = vld [vmem:[#allocation2 + $0x74] sm:$0x1]
      %v527 = vsel %vm498, 0, %v526
      %528 = vst [vmem:[#allocation2 + $0x74] sm:$0x1] %v527
      %v529 = vld [vmem:[#allocation2 + $0x80] sm:$0x1]
      %v530 = vsel %vm498, 0, %v529
      %531 = vst [vmem:[#allocation2 + $0x80] sm:$0x1] %v530
      %v532 = vld [vmem:[#allocation2 + $0x8c] sm:$0x1]
      %v533 = vsel %vm498, 0, %v532
      %534 = vst [vmem:[#allocation2 + $0x8c] sm:$0x1] %v533
      %v535 = vld [vmem:[%s406] sm:$0xf]
      %v536 = vld [vmem:[%s406 + $0x4] sm:$0xf]
      %v537 = vld [vmem:[%s406 + $0x8] sm:$0xf]
      %v538 = vld [vmem:[%s406 + $0xc] sm:$0xf]
      %v539 = vld [vmem:[%s406 + $0x10] sm:$0xf]
      %v540 = vld [vmem:[%s406 + $0x14] sm:$0xf]
      %v541 = vld [vmem:[%s406 + $0x18] sm:$0xf]
      %v542 = vld [vmem:[%s406 + $0x1c] sm:$0xf]
      %v543 = vld [vmem:[%s406 + $0x20] sm:$0xf]
      %v544 = vld [vmem:[%s406 + $0x24] sm:$0xf]
      %v545 = vld [vmem:[%s406 + $0x28] sm:$0xf]
      %v546 = vld [vmem:[%s406 + $0x2c] sm:$0xf]
      %v547 = vld [vmem:[%s406 + $0x30] sm:$0xf]
      %v548 = vld [vmem:[%s406 + $0x34] sm:$0xf]
      %v549 = vld [vmem:[%s406 + $0x38] sm:$0xf]
      %v550 = vld [vmem:[%s406 + $0x3c] sm:$0xf]
      %vm551 = vsmask.f32 4368
      %vm552 = vmor %vm459, %vm551
      %v554 = vshrl.u32 %v535, 16
      %v556 = vrot.slane %v554, 7
      %v557 = vshll.u32 %v535, 16
      %v559 = vor.u32 %v556, %v557
      %v560 = vrot.slane %v556, 4
      %v562 = vshrl.u32 %v536, 16
      %v564 = vrot.slane %v562, 7
      %v565 = vshll.u32 %v536, 16
      %v567 = vor.u32 %v564, %v565
      %v568 = vsel %vm552, %v560, %v567
      %v569 = vrot.slane %v564, 4
      %v571 = vshrl.u32 %v537, 16
      %v573 = vrot.slane %v571, 7
      %v574 = vshll.u32 %v537, 16
      %v576 = vor.u32 %v573, %v574
      %v577 = vrot.slane %v573, 4
      %v579 = vshrl.u32 %v538, 16
      %v581 = vrot.slane %v579, 7
      %v582 = vshll.u32 %v538, 16
      %v584 = vor.u32 %v581, %v582
      %v585 = vsel %vm552, %v577, %v584
      %v586 = vrot.slane %v581, 4
      %v588 = vshrl.u32 %v539, 16
      %v590 = vrot.slane %v588, 7
      %v591 = vshll.u32 %v539, 16
      %v593 = vor.u32 %v590, %v591
      %v594 = vrot.slane %v590, 4
      %v596 = vshrl.u32 %v540, 16
      %v598 = vrot.slane %v596, 7
      %v599 = vshll.u32 %v540, 16
      %v601 = vor.u32 %v598, %v599
      %v602 = vsel %vm552, %v594, %v601
      %v603 = vrot.slane %v598, 4
      %v605 = vshrl.u32 %v541, 16
      %v607 = vrot.slane %v605, 7
      %v608 = vshll.u32 %v541, 16
      %v610 = vor.u32 %v607, %v608
      %v611 = vrot.slane %v607, 4
      %v613 = vshrl.u32 %v542, 16
      %v615 = vrot.slane %v613, 7
      %v616 = vshll.u32 %v542, 16
      %v618 = vor.u32 %v615, %v616
      %v619 = vsel %vm552, %v611, %v618
      %v620 = vrot.slane %v615, 4
      %v622 = vshrl.u32 %v543, 16
      %v624 = vrot.slane %v622, 7
      %v625 = vshll.u32 %v543, 16
      %v627 = vor.u32 %v624, %v625
      %v628 = vrot.slane %v624, 4
      %v630 = vshrl.u32 %v544, 16
      %v632 = vrot.slane %v630, 7
      %v633 = vshll.u32 %v544, 16
      %v635 = vor.u32 %v632, %v633
      %v636 = vsel %vm552, %v628, %v635
      %v637 = vrot.slane %v632, 4
      %v639 = vshrl.u32 %v545, 16
      %v641 = vrot.slane %v639, 7
      %v642 = vshll.u32 %v545, 16
      %v644 = vor.u32 %v641, %v642
      %v645 = vrot.slane %v641, 4
      %v647 = vshrl.u32 %v546, 16
      %v649 = vrot.slane %v647, 7
      %v650 = vshll.u32 %v546, 16
      %v652 = vor.u32 %v649, %v650
      %v653 = vsel %vm552, %v645, %v652
      %v654 = vrot.slane %v649, 4
      %v656 = vshrl.u32 %v547, 16
      %v658 = vrot.slane %v656, 7
      %v659 = vshll.u32 %v547, 16
      %v661 = vor.u32 %v658, %v659
      %v662 = vrot.slane %v658, 4
      %v664 = vshrl.u32 %v548, 16
      %v666 = vrot.slane %v664, 7
      %v667 = vshll.u32 %v548, 16
      %v669 = vor.u32 %v666, %v667
      %v670 = vsel %vm552, %v662, %v669
      %v671 = vrot.slane %v666, 4
      %v673 = vshrl.u32 %v549, 16
      %v675 = vrot.slane %v673, 7
      %v676 = vshll.u32 %v549, 16
      %v678 = vor.u32 %v675, %v676
      %v679 = vrot.slane %v675, 4
      %v681 = vshrl.u32 %v550, 16
      %v683 = vrot.slane %v681, 7
      %v684 = vshll.u32 %v550, 16
      %v686 = vor.u32 %v683, %v684
      %v687 = vsel %vm552, %v679, %v686
      %v688 = vrot.slane %v683, 4
      %s713 = scalar_lea.vmem [#allocation2], 24
      %vm714 = vcmask 60416
      %vm715 = vmand %vm714, %vm497
      %v716 = vld [vmem:[%s713] sm:$0xf]
      %v717 = vsel %vm715, %v559, %v716
      %718 = vst [vmem:[%s713] sm:$0xf] %v717
      %vm719 = vcmask 60416
      %720 = vst.msk [vmem:[%s713 + $0x4] sm:$0xf] %vm719, %v568
      %v721 = vld [vmem:[%s713 + $0x8] sm:$0x1]
      %v722 = vsel %vm460, %v569, %v721
      %723 = vst [vmem:[%s713 + $0x8] sm:$0x1] %v722
      %v724 = vld [vmem:[%s713 + $0xc] sm:$0xf]
      %v725 = vsel %vm715, %v576, %v724
      %726 = vst [vmem:[%s713 + $0xc] sm:$0xf] %v725
      %727 = vst.msk [vmem:[%s713 + $0x10] sm:$0xf] %vm719, %v585
      %v728 = vld [vmem:[%s713 + $0x14] sm:$0x1]
      %v729 = vsel %vm460, %v586, %v728
      %730 = vst [vmem:[%s713 + $0x14] sm:$0x1] %v729
      %v731 = vld [vmem:[%s713 + $0x18] sm:$0xf]
      %v732 = vsel %vm715, %v593, %v731
      %733 = vst [vmem:[%s713 + $0x18] sm:$0xf] %v732
      %734 = vst.msk [vmem:[%s713 + $0x1c] sm:$0xf] %vm719, %v602
      %v735 = vld [vmem:[%s713 + $0x20] sm:$0x1]
      %v736 = vsel %vm460, %v603, %v735
      %737 = vst [vmem:[%s713 + $0x20] sm:$0x1] %v736
      %v738 = vld [vmem:[%s713 + $0x24] sm:$0xf]
      %v739 = vsel %vm715, %v610, %v738
      %740 = vst [vmem:[%s713 + $0x24] sm:$0xf] %v739
      %741 = vst.msk [vmem:[%s713 + $0x28] sm:$0xf] %vm719, %v619
      %v742 = vld [vmem:[%s713 + $0x2c] sm:$0x1]
      %v743 = vsel %vm460, %v620, %v742
      %744 = vst [vmem:[%s713 + $0x2c] sm:$0x1] %v743
      %v745 = vld [vmem:[%s713 + $0x30] sm:$0xf]
      %v746 = vsel %vm715, %v627, %v745
      %747 = vst [vmem:[%s713 + $0x30] sm:$0xf] %v746
      %748 = vst.msk [vmem:[%s713 + $0x34] sm:$0xf] %vm719, %v636
      %v749 = vld [vmem:[%s713 + $0x38] sm:$0x1]
      %v750 = vsel %vm460, %v637, %v749
      %751 = vst [vmem:[%s713 + $0x38] sm:$0x1] %v750
      %v752 = vld [vmem:[%s713 + $0x3c] sm:$0xf]
      %v753 = vsel %vm715, %v644, %v752
      %754 = vst [vmem:[%s713 + $0x3c] sm:$0xf] %v753
      %755 = vst.msk [vmem:[%s713 + $0x40] sm:$0xf] %vm719, %v653
      %v756 = vld [vmem:[%s713 + $0x44] sm:$0x1]
      %v757 = vsel %vm460, %v654, %v756
      %758 = vst [vmem:[%s713 + $0x44] sm:$0x1] %v757
      %v759 = vld [vmem:[%s713 + $0x48] sm:$0xf]
      %v760 = vsel %vm715, %v661, %v759
      %761 = vst [vmem:[%s713 + $0x48] sm:$0xf] %v760
      %762 = vst.msk [vmem:[%s713 + $0x4c] sm:$0xf] %vm719, %v670
      %v763 = vld [vmem:[%s713 + $0x50] sm:$0x1]
      %v764 = vsel %vm460, %v671, %v763
      %765 = vst [vmem:[%s713 + $0x50] sm:$0x1] %v764
      %v766 = vld [vmem:[%s713 + $0x54] sm:$0xf]
      %v767 = vsel %vm715, %v678, %v766
      %768 = vst [vmem:[%s713 + $0x54] sm:$0xf] %v767
      %769 = vst.msk [vmem:[%s713 + $0x58] sm:$0xf] %vm719, %v687
      %v770 = vld [vmem:[%s713 + $0x5c] sm:$0x1]
      %v771 = vsel %vm460, %v688, %v770
      %772 = vst [vmem:[%s713 + $0x5c] sm:$0x1] %v771
      %p773 = scmp.eq.s32.totalorder %s23, 0
      // Predicated region
      $region49: #{basic_block_forward.1} parent=47 // pred_check
        %p774 = pneg %p773
      $region50: #{basic_block_forward.1} parent=47 // pred_check_branch
        %776 = sbr.rel (%p774) target = $region52
      $region51: #{basic_block_forward.1} parent=47 // pred_region
        %v777 = vld [vmem:[#allocation2] sm:$0xf]
        %v778 = vsel %vm715, 0, %v777
        %779 = vst [vmem:[#allocation2] sm:$0xf] %v778
        %780 = vst.msk [vmem:[#allocation2 + $0x4] sm:$0xf] %vm719, 0
        %v781 = vld [vmem:[#allocation2 + $0x8] sm:$0x1]
        %v782 = vsel %vm460, 0, %v781
        %783 = vst [vmem:[#allocation2 + $0x8] sm:$0x1] %v782
        %v784 = vld [vmem:[#allocation2 + $0xc] sm:$0xf]
        %v785 = vsel %vm715, 0, %v784
        %786 = vst [vmem:[#allocation2 + $0xc] sm:$0xf] %v785
        %787 = vst.msk [vmem:[#allocation2 + $0x10] sm:$0xf] %vm719, 0
        %v788 = vld [vmem:[#allocation2 + $0x14] sm:$0x1]
        %v789 = vsel %vm460, 0, %v788
        %790 = vst [vmem:[#allocation2 + $0x14] sm:$0x1] %v789
      $region52: #{basic_block_forward.1} parent=47 // pred_fallthru
        _
      %p791 = scmp.gt.s32.totalorder %s23, 0
      // Predicated region
      $region53: #{basic_block_forward.1} parent=47 // pred_check
        %p792 = pneg %p791
      $region54: #{basic_block_forward.1} parent=47 // pred_check_branch
        %794 = sbr.rel (%p792) target = $region56
      $region55: #{basic_block_forward.1} parent=47 // pred_region
        %v795 = vld [vmem:[%s421] sm:$0xf]
        %v796 = vld [vmem:[%s421 + $0x4] sm:$0xf]
        %v797 = vld [vmem:[%s421 + $0x8] sm:$0xf]
        %v798 = vld [vmem:[%s421 + $0xc] sm:$0xf]
        %v800 = vshrl.u32 %v795, 16
        %v802 = vrot.slane %v800, 7
        %v803 = vshll.u32 %v795, 16
        %v805 = vor.u32 %v802, %v803
        %v806 = vrot.slane %v802, 4
        %v808 = vshrl.u32 %v796, 16
        %v810 = vrot.slane %v808, 7
        %v811 = vshll.u32 %v796, 16
        %v813 = vor.u32 %v810, %v811
        %v814 = vsel %vm552, %v806, %v813
        %v815 = vrot.slane %v810, 4
        %v817 = vshrl.u32 %v797, 16
        %v819 = vrot.slane %v817, 7
        %v820 = vshll.u32 %v797, 16
        %v822 = vor.u32 %v819, %v820
        %v823 = vrot.slane %v819, 4
        %v825 = vshrl.u32 %v798, 16
        %v827 = vrot.slane %v825, 7
        %v828 = vshll.u32 %v798, 16
        %v830 = vor.u32 %v827, %v828
        %v831 = vsel %vm552, %v823, %v830
        %v832 = vrot.slane %v827, 4
        %v839 = vld [vmem:[#allocation2] sm:$0xf]
        %v840 = vsel %vm715, %v805, %v839
        %841 = vst [vmem:[#allocation2] sm:$0xf] %v840
        %842 = vst.msk [vmem:[#allocation2 + $0x4] sm:$0xf] %vm719, %v814
        %v843 = vld [vmem:[#allocation2 + $0x8] sm:$0x1]
        %v844 = vsel %vm460, %v815, %v843
        %845 = vst [vmem:[#allocation2 + $0x8] sm:$0x1] %v844
        %v846 = vld [vmem:[#allocation2 + $0xc] sm:$0xf]
        %v847 = vsel %vm715, %v822, %v846
        %848 = vst [vmem:[#allocation2 + $0xc] sm:$0xf] %v847
        %849 = vst.msk [vmem:[#allocation2 + $0x10] sm:$0xf] %vm719, %v831
        %v850 = vld [vmem:[#allocation2 + $0x14] sm:$0x1]
        %v851 = vsel %vm460, %v832, %v850
        %852 = vst [vmem:[#allocation2 + $0x14] sm:$0x1] %v851
      $region56: #{basic_block_forward.1} parent=47 // pred_fallthru
        _
      %p853 = scmp.eq.s32.totalorder %s23, 1
      // Predicated region
      $region57: #{basic_block_forward.1} parent=47 // pred_check
        %p854 = pneg %p853
      $region58: #{basic_block_forward.1} parent=47 // pred_check_branch
        %856 = sbr.rel (%p854) target = $region60
      $region59: #{basic_block_forward.1} parent=47 // pred_region
        %s857 = scalar_lea.vmem [#allocation2], 120
        %v858 = vld [vmem:[%s857] sm:$0xf]
        %v859 = vsel %vm715, 0, %v858
        %860 = vst [vmem:[%s857] sm:$0xf] %v859
        %861 = vst.msk [vmem:[%s857 + $0x4] sm:$0xf] %vm719, 0
        %v862 = vld [vmem:[%s857 + $0x8] sm:$0x1]
        %v863 = vsel %vm460, 0, %v862
        %864 = vst [vmem:[%s857 + $0x8] sm:$0x1] %v863
        %v865 = vld [vmem:[%s857 + $0xc] sm:$0xf]
        %v866 = vsel %vm715, 0, %v865
        %867 = vst [vmem:[%s857 + $0xc] sm:$0xf] %v866
        %868 = vst.msk [vmem:[%s857 + $0x10] sm:$0xf] %vm719, 0
        %v869 = vld [vmem:[%s857 + $0x14] sm:$0x1]
        %v870 = vsel %vm460, 0, %v869
        %871 = vst [vmem:[%s857 + $0x14] sm:$0x1] %v870
      $region60: #{basic_block_forward.1} parent=47 // pred_fallthru
        _
      %p872 = scmp.lt.s32.totalorder %s23, 1
      // Predicated region
      $region61: #{basic_block_forward.1} parent=47 // pred_check
        %p873 = pneg %p872
      $region62: #{basic_block_forward.1} parent=47 // pred_check_branch
        %875 = sbr.rel (%p873) target = $region64
      $region63: #{basic_block_forward.1} parent=47 // pred_region
        %v876 = vld [vmem:[%s440] sm:$0xf]
        %v877 = vld [vmem:[%s440 + $0x4] sm:$0xf]
        %v878 = vld [vmem:[%s440 + $0x8] sm:$0xf]
        %v879 = vld [vmem:[%s440 + $0xc] sm:$0xf]
        %v881 = vshrl.u32 %v876, 16
        %v883 = vrot.slane %v881, 7
        %v884 = vshll.u32 %v876, 16
        %v886 = vor.u32 %v883, %v884
        %v887 = vrot.slane %v883, 4
        %v889 = vshrl.u32 %v877, 16
        %v891 = vrot.slane %v889, 7
        %v892 = vshll.u32 %v877, 16
        %v894 = vor.u32 %v891, %v892
        %v895 = vsel %vm552, %v887, %v894
        %v896 = vrot.slane %v891, 4
        %v898 = vshrl.u32 %v878, 16
        %v900 = vrot.slane %v898, 7
        %v901 = vshll.u32 %v878, 16
        %v903 = vor.u32 %v900, %v901
        %v904 = vrot.slane %v900, 4
        %v906 = vshrl.u32 %v879, 16
        %v908 = vrot.slane %v906, 7
        %v909 = vshll.u32 %v879, 16
        %v911 = vor.u32 %v908, %v909
        %v912 = vsel %vm552, %v904, %v911
        %v913 = vrot.slane %v908, 4
        %s920 = scalar_lea.vmem [#allocation2], 120
        %v921 = vld [vmem:[%s920] sm:$0xf]
        %v922 = vsel %vm715, %v886, %v921
        %923 = vst [vmem:[%s920] sm:$0xf] %v922
        %924 = vst.msk [vmem:[%s920 + $0x4] sm:$0xf] %vm719, %v895
        %v925 = vld [vmem:[%s920 + $0x8] sm:$0x1]
        %v926 = vsel %vm460, %v896, %v925
        %927 = vst [vmem:[%s920 + $0x8] sm:$0x1] %v926
        %v928 = vld [vmem:[%s920 + $0xc] sm:$0xf]
        %v929 = vsel %vm715, %v903, %v928
        %930 = vst [vmem:[%s920 + $0xc] sm:$0xf] %v929
        %931 = vst.msk [vmem:[%s920 + $0x10] sm:$0xf] %vm719, %v912
        %v932 = vld [vmem:[%s920 + $0x14] sm:$0x1]
        %v933 = vsel %vm460, %v913, %v932
        %934 = vst [vmem:[%s920 + $0x14] sm:$0x1] %v933
      $region64: #{basic_block_forward.1} parent=47 // pred_fallthru
        _
      %v935 = vld [vmem:[#allocation2] sm:$0xf]
      %v936 = vld [vmem:[#allocation2 + $0x4] sm:$0xf]
      %v937 = vld [vmem:[#allocation2 + $0x8] sm:$0x1]
      %v938 = vld [vmem:[#allocation2 + $0xc] sm:$0xf]
      %v939 = vld [vmem:[#allocation2 + $0x10] sm:$0xf]
      %v940 = vld [vmem:[#allocation2 + $0x14] sm:$0x1]
      %v941 = vld [vmem:[#allocation2 + $0x18] sm:$0xf]
      %v942 = vld [vmem:[#allocation2 + $0x1c] sm:$0xf]
      %v943 = vld [vmem:[#allocation2 + $0x20] sm:$0x1]
      %v944 = vld [vmem:[#allocation2 + $0x24] sm:$0xf]
      %v945 = vld [vmem:[#allocation2 + $0x28] sm:$0xf]
      %v946 = vld [vmem:[#allocation2 + $0x2c] sm:$0x1]
      %v947 = vld [vmem:[#allocation2 + $0x30] sm:$0xf]
      %v948 = vld [vmem:[#allocation2 + $0x34] sm:$0xf]
      %v949 = vld [vmem:[#allocation2 + $0x38] sm:$0x1]
      %v950 = vld [vmem:[#allocation2 + $0x3c] sm:$0xf]
      %v951 = vld [vmem:[#allocation2 + $0x40] sm:$0xf]
      %v952 = vld [vmem:[#allocation2 + $0x44] sm:$0x1]
      %v953 = vld [vmem:[#allocation2 + $0x48] sm:$0xf]
      %v954 = vld [vmem:[#allocation2 + $0x4c] sm:$0xf]
      %v955 = vld [vmem:[#allocation2 + $0x50] sm:$0x1]
      %v956 = vld [vmem:[#allocation2 + $0x54] sm:$0xf]
      %v957 = vld [vmem:[#allocation2 + $0x58] sm:$0xf]
      %v958 = vld [vmem:[#allocation2 + $0x5c] sm:$0x1]
      %v959 = vld [vmem:[#allocation2 + $0x60] sm:$0xf]
      %v960 = vld [vmem:[#allocation2 + $0x64] sm:$0xf]
      %v961 = vld [vmem:[#allocation2 + $0x68] sm:$0x1]
      %v962 = vld [vmem:[#allocation2 + $0x6c] sm:$0xf]
      %v963 = vld [vmem:[#allocation2 + $0x70] sm:$0xf]
      %v964 = vld [vmem:[#allocation2 + $0x74] sm:$0x1]
      %v985 = vunpack.c.l.b16 %v935
      %v986 = vunpack.c.l.b16 %v936
      %v987 = vunpack.c.l.b16 %v938
      %v988 = vunpack.c.l.b16 %v939
      %v989 = vunpack.c.l.b16 %v941
      %v990 = vunpack.c.l.b16 %v942
      %v991 = vunpack.c.l.b16 %v944
      %v992 = vunpack.c.l.b16 %v945
      %v993 = vunpack.c.l.b16 %v947
      %v994 = vunpack.c.l.b16 %v948
      %v995 = vunpack.c.l.b16 %v950
      %v996 = vunpack.c.l.b16 %v951
      %v997 = vunpack.c.l.b16 %v953
      %v998 = vunpack.c.l.b16 %v954
      %v999 = vunpack.c.l.b16 %v956
      %v1000 = vunpack.c.l.b16 %v957
      %v1001 = vunpack.c.l.b16 %v959
      %v1002 = vunpack.c.l.b16 %v960
      %v1003 = vunpack.c.l.b16 %v962
      %v1004 = vunpack.c.l.b16 %v963
      %v1005 = vpack.c.b16 %v986, %v985
      %v1006 = vpack.c.b16 %v988, %v987
      %v1007 = vpack.c.b16 %v990, %v989
      %v1008 = vpack.c.b16 %v992, %v991
      %v1009 = vpack.c.b16 %v994, %v993
      %v1010 = vpack.c.b16 %v996, %v995
      %v1011 = vpack.c.b16 %v998, %v997
      %v1012 = vpack.c.b16 %v1000, %v999
      %v1013 = vpack.c.b16 %v1002, %v1001
      %v1014 = vpack.c.b16 %v1004, %v1003
      %v1025 = vunpack.c.l.b16 %v937
      %v1026 = vunpack.c.l.b16 %v940
      %v1027 = vunpack.c.l.b16 %v943
      %v1028 = vunpack.c.l.b16 %v946
      %v1029 = vunpack.c.l.b16 %v949
      %v1030 = vunpack.c.l.b16 %v952
      %v1031 = vunpack.c.l.b16 %v955
      %v1032 = vunpack.c.l.b16 %v958
      %v1033 = vunpack.c.l.b16 %v961
      %v1034 = vunpack.c.l.b16 %v964
      %v1035 = vpack.c.b16 %v1025, %v1025
      %v1036 = vpack.c.b16 %v1026, %v1026
      %v1037 = vpack.c.b16 %v1027, %v1027
      %v1038 = vpack.c.b16 %v1028, %v1028
      %v1039 = vpack.c.b16 %v1029, %v1029
      %v1040 = vpack.c.b16 %v1030, %v1030
      %v1041 = vpack.c.b16 %v1031, %v1031
      %v1042 = vpack.c.b16 %v1032, %v1032
      %v1043 = vpack.c.b16 %v1033, %v1033
      %v1044 = vpack.c.b16 %v1034, %v1034
      %vm1045 = vsmask.f32 7424
      %v1047 = vshrl.u32 %v1005, 16
      %v1049 = vshll.u32 %v1005, 16
      %v1051 = vrot.slane %v1049, 1
      %v1052 = vor.u32 %v1047, %v1051
      %v1054 = vshll.u32 %v1035, 16
      %v1056 = vrot.slane %v1054, 1
      %v1057 = vsel %vm1045, %v1052, %v1056
      %v1059 = vshrl.u32 %v1006, 16
      %v1061 = vshll.u32 %v1006, 16
      %v1063 = vrot.slane %v1061, 1
      %v1064 = vor.u32 %v1059, %v1063
      %v1066 = vshll.u32 %v1036, 16
      %v1068 = vrot.slane %v1066, 1
      %v1069 = vsel %vm1045, %v1064, %v1068
      %v1071 = vshrl.u32 %v1007, 16
      %v1073 = vshll.u32 %v1007, 16
      %v1075 = vrot.slane %v1073, 1
      %v1076 = vor.u32 %v1071, %v1075
      %v1078 = vshll.u32 %v1037, 16
      %v1080 = vrot.slane %v1078, 1
      %v1081 = vsel %vm1045, %v1076, %v1080
      %v1083 = vshrl.u32 %v1008, 16
      %v1085 = vshll.u32 %v1008, 16
      %v1087 = vrot.slane %v1085, 1
      %v1088 = vor.u32 %v1083, %v1087
      %v1090 = vshll.u32 %v1038, 16
      %v1092 = vrot.slane %v1090, 1
      %v1093 = vsel %vm1045, %v1088, %v1092
      %v1095 = vshrl.u32 %v1009, 16
      %v1097 = vshll.u32 %v1009, 16
      %v1099 = vrot.slane %v1097, 1
      %v1100 = vor.u32 %v1095, %v1099
      %v1102 = vshll.u32 %v1039, 16
      %v1104 = vrot.slane %v1102, 1
      %v1105 = vsel %vm1045, %v1100, %v1104
      %v1107 = vshrl.u32 %v1010, 16
      %v1109 = vshll.u32 %v1010, 16
      %v1111 = vrot.slane %v1109, 1
      %v1112 = vor.u32 %v1107, %v1111
      %v1114 = vshll.u32 %v1040, 16
      %v1116 = vrot.slane %v1114, 1
      %v1117 = vsel %vm1045, %v1112, %v1116
      %v1119 = vshrl.u32 %v1011, 16
      %v1121 = vshll.u32 %v1011, 16
      %v1123 = vrot.slane %v1121, 1
      %v1124 = vor.u32 %v1119, %v1123
      %v1126 = vshll.u32 %v1041, 16
      %v1128 = vrot.slane %v1126, 1
      %v1129 = vsel %vm1045, %v1124, %v1128
      %v1131 = vshrl.u32 %v1012, 16
      %v1133 = vshll.u32 %v1012, 16
      %v1135 = vrot.slane %v1133, 1
      %v1136 = vor.u32 %v1131, %v1135
      %v1138 = vshll.u32 %v1042, 16
      %v1140 = vrot.slane %v1138, 1
      %v1141 = vsel %vm1045, %v1136, %v1140
      %v1143 = vshrl.u32 %v1013, 16
      %v1145 = vshll.u32 %v1013, 16
      %v1147 = vrot.slane %v1145, 1
      %v1148 = vor.u32 %v1143, %v1147
      %v1150 = vshll.u32 %v1043, 16
      %v1152 = vrot.slane %v1150, 1
      %v1153 = vsel %vm1045, %v1148, %v1152
      %v1155 = vshrl.u32 %v1014, 16
      %v1157 = vshll.u32 %v1014, 16
      %v1159 = vrot.slane %v1157, 1
      %v1160 = vor.u32 %v1155, %v1159
      %v1162 = vshll.u32 %v1044, 16
      %v1164 = vrot.slane %v1162, 1
      %v1165 = vsel %vm1045, %v1160, %v1164
      %1166 = vrot.lane.b32.xlu0 %v1057, 8
      %v1167 = vpop.permute.xlu0 %1166
      %1168 = vrot.lane.b32.xlu0 %v1069, 8
      %v1169 = vpop.permute.xlu0 %1168
      %1170 = vrot.lane.b32.xlu0 %v1081, 8
      %v1171 = vpop.permute.xlu0 %1170
      %1172 = vrot.lane.b32.xlu0 %v1093, 8
      %v1173 = vpop.permute.xlu0 %1172
      %1174 = vrot.lane.b32.xlu0 %v1105, 8
      %v1175 = vpop.permute.xlu0 %1174
      %1176 = vrot.lane.b32.xlu0 %v1117, 8
      %v1177 = vpop.permute.xlu0 %1176
      %1178 = vrot.lane.b32.xlu0 %v1129, 8
      %v1179 = vpop.permute.xlu0 %1178
      %1180 = vrot.lane.b32.xlu0 %v1141, 8
      %v1181 = vpop.permute.xlu0 %1180
      %1182 = vrot.lane.b32.xlu0 %v1153, 8
      %v1183 = vpop.permute.xlu0 %1182
      %1184 = vrot.lane.b32.xlu0 %v1165, 8
      %v1185 = vpop.permute.xlu0 %1184
      %vm1186 = vcmask 1046528
      %v1187 = vrot.slane %v1005, 1
      %v1188 = vrot.slane %v1035, 1
      %v1189 = vsel %vm1186, %v1187, %v1188
      %v1190 = vrot.slane %v1006, 1
      %v1191 = vrot.slane %v1036, 1
      %v1192 = vsel %vm1186, %v1190, %v1191
      %v1193 = vrot.slane %v1007, 1
      %v1194 = vrot.slane %v1037, 1
      %v1195 = vsel %vm1186, %v1193, %v1194
      %v1196 = vrot.slane %v1008, 1
      %v1197 = vrot.slane %v1038, 1
      %v1198 = vsel %vm1186, %v1196, %v1197
      %v1199 = vrot.slane %v1009, 1
      %v1200 = vrot.slane %v1039, 1
      %v1201 = vsel %vm1186, %v1199, %v1200
      %v1202 = vrot.slane %v1010, 1
      %v1203 = vrot.slane %v1040, 1
      %v1204 = vsel %vm1186, %v1202, %v1203
      %v1205 = vrot.slane %v1011, 1
      %v1206 = vrot.slane %v1041, 1
      %v1207 = vsel %vm1186, %v1205, %v1206
      %v1208 = vrot.slane %v1012, 1
      %v1209 = vrot.slane %v1042, 1
      %v1210 = vsel %vm1186, %v1208, %v1209
      %v1211 = vrot.slane %v1013, 1
      %v1212 = vrot.slane %v1043, 1
      %v1213 = vsel %vm1186, %v1211, %v1212
      %v1214 = vrot.slane %v1014, 1
      %v1215 = vrot.slane %v1044, 1
      %v1216 = vsel %vm1186, %v1214, %v1215
      %1217 = vrot.lane.b32.xlu0 %v1189, 16
      %v1218 = vpop.permute.xlu0 %1217
      %1219 = vrot.lane.b32.xlu0 %v1192, 16
      %v1220 = vpop.permute.xlu0 %1219
      %1221 = vrot.lane.b32.xlu0 %v1195, 16
      %v1222 = vpop.permute.xlu0 %1221
      %1223 = vrot.lane.b32.xlu0 %v1198, 16
      %v1224 = vpop.permute.xlu0 %1223
      %1225 = vrot.lane.b32.xlu0 %v1201, 16
      %v1226 = vpop.permute.xlu0 %1225
      %1227 = vrot.lane.b32.xlu0 %v1204, 16
      %v1228 = vpop.permute.xlu0 %1227
      %1229 = vrot.lane.b32.xlu0 %v1207, 16
      %v1230 = vpop.permute.xlu0 %1229
      %1231 = vrot.lane.b32.xlu0 %v1210, 16
      %v1232 = vpop.permute.xlu0 %1231
      %1233 = vrot.lane.b32.xlu0 %v1213, 16
      %v1234 = vpop.permute.xlu0 %1233
      %1235 = vrot.lane.b32.xlu0 %v1216, 16
      %v1236 = vpop.permute.xlu0 %1235
      %vm1237 = vcmask 64512
      %v1239 = vsel %vm1237, %v1005, %v1167
      %v1241 = vsel %vm1237, %v1006, %v1169
      %v1243 = vsel %vm1237, %v1007, %v1171
      %v1245 = vsel %vm1237, %v1008, %v1173
      %v1247 = vsel %vm1237, %v1009, %v1175
      %v1249 = vsel %vm1237, %v1010, %v1177
      %v1251 = vsel %vm1237, %v1011, %v1179
      %v1253 = vsel %vm1237, %v1012, %v1181
      %v1255 = vsel %vm1237, %v1013, %v1183
      %v1257 = vsel %vm1237, %v1014, %v1185
      %vm1258 = vcmask 130048
      %v1260 = vsel %vm1258, %v1239, %v1218
      %v1262 = vsel %vm1258, %v1241, %v1220
      %v1264 = vsel %vm1258, %v1243, %v1222
      %v1266 = vsel %vm1258, %v1245, %v1224
      %v1268 = vsel %vm1258, %v1247, %v1226
      %v1270 = vsel %vm1258, %v1249, %v1228
      %v1272 = vsel %vm1258, %v1251, %v1230
      %v1274 = vsel %vm1258, %v1253, %v1232
      %v1276 = vsel %vm1258, %v1255, %v1234
      %v1278 = vsel %vm1258, %v1257, %v1236
      %v1279 = vld [vmem:[%s3] sm:$0xf]
      %v1280 = vld [vmem:[%s3 + $0x4] sm:$0xf]
      %v1281 = vld [vmem:[%s3 + $0x8] sm:$0xf]
      %s1282 = scalar_lea.vmem [#allocation2], 12
      %v1283 = vld [vmem:[%s1282] sm:$0xf]
      %v1284 = vld [vmem:[%s1282 + $0x4] sm:$0xf]
      %v1285 = vld [vmem:[%s1282 + $0x8] sm:$0x1]
      %v1286 = vld [vmem:[%s1282 + $0xc] sm:$0xf]
      %v1287 = vld [vmem:[%s1282 + $0x10] sm:$0xf]
      %v1288 = vld [vmem:[%s1282 + $0x14] sm:$0x1]
      %v1289 = vld [vmem:[%s1282 + $0x18] sm:$0xf]
      %v1290 = vld [vmem:[%s1282 + $0x1c] sm:$0xf]
      %v1291 = vld [vmem:[%s1282 + $0x20] sm:$0x1]
      %v1292 = vld [vmem:[%s1282 + $0x24] sm:$0xf]
      %v1293 = vld [vmem:[%s1282 + $0x28] sm:$0xf]
      %v1294 = vld [vmem:[%s1282 + $0x2c] sm:$0x1]
      %v1295 = vld [vmem:[%s1282 + $0x30] sm:$0xf]
      %v1296 = vld [vmem:[%s1282 + $0x34] sm:$0xf]
      %v1297 = vld [vmem:[%s1282 + $0x38] sm:$0x1]
      %v1298 = vld [vmem:[%s1282 + $0x3c] sm:$0xf]
      %v1299 = vld [vmem:[%s1282 + $0x40] sm:$0xf]
      %v1300 = vld [vmem:[%s1282 + $0x44] sm:$0x1]
      %v1301 = vld [vmem:[%s1282 + $0x48] sm:$0xf]
      %v1302 = vld [vmem:[%s1282 + $0x4c] sm:$0xf]
      %v1303 = vld [vmem:[%s1282 + $0x50] sm:$0x1]
      %v1304 = vld [vmem:[%s1282 + $0x54] sm:$0xf]
      %v1305 = vld [vmem:[%s1282 + $0x58] sm:$0xf]
      %v1306 = vld [vmem:[%s1282 + $0x5c] sm:$0x1]
      %v1307 = vld [vmem:[%s1282 + $0x60] sm:$0xf]
      %v1308 = vld [vmem:[%s1282 + $0x64] sm:$0xf]
      %v1309 = vld [vmem:[%s1282 + $0x68] sm:$0x1]
      %v1310 = vld [vmem:[%s1282 + $0x6c] sm:$0xf]
      %v1311 = vld [vmem:[%s1282 + $0x70] sm:$0xf]
      %v1312 = vld [vmem:[%s1282 + $0x74] sm:$0x1]
      %v1333 = vunpack.c.l.b16 %v1283
      %v1334 = vunpack.c.l.b16 %v1284
      %v1335 = vunpack.c.l.b16 %v1286
      %v1336 = vunpack.c.l.b16 %v1287
      %v1337 = vunpack.c.l.b16 %v1289
      %v1338 = vunpack.c.l.b16 %v1290
      %v1339 = vunpack.c.l.b16 %v1292
      %v1340 = vunpack.c.l.b16 %v1293
      %v1341 = vunpack.c.l.b16 %v1295
      %v1342 = vunpack.c.l.b16 %v1296
      %v1343 = vunpack.c.l.b16 %v1298
      %v1344 = vunpack.c.l.b16 %v1299
      %v1345 = vunpack.c.l.b16 %v1301
      %v1346 = vunpack.c.l.b16 %v1302
      %v1347 = vunpack.c.l.b16 %v1304
      %v1348 = vunpack.c.l.b16 %v1305
      %v1349 = vunpack.c.l.b16 %v1307
      %v1350 = vunpack.c.l.b16 %v1308
      %v1351 = vunpack.c.l.b16 %v1310
      %v1352 = vunpack.c.l.b16 %v1311
      %v1353 = vpack.c.b16 %v1334, %v1333
      %v1354 = vpack.c.b16 %v1336, %v1335
      %v1355 = vpack.c.b16 %v1338, %v1337
      %v1356 = vpack.c.b16 %v1340, %v1339
      %v1357 = vpack.c.b16 %v1342, %v1341
      %v1358 = vpack.c.b16 %v1344, %v1343
      %v1359 = vpack.c.b16 %v1346, %v1345
      %v1360 = vpack.c.b16 %v1348, %v1347
      %v1361 = vpack.c.b16 %v1350, %v1349
      %v1362 = vpack.c.b16 %v1352, %v1351
      %v1373 = vunpack.c.l.b16 %v1285
      %v1374 = vunpack.c.l.b16 %v1288
      %v1375 = vunpack.c.l.b16 %v1291
      %v1376 = vunpack.c.l.b16 %v1294
      %v1377 = vunpack.c.l.b16 %v1297
      %v1378 = vunpack.c.l.b16 %v1300
      %v1379 = vunpack.c.l.b16 %v1303
      %v1380 = vunpack.c.l.b16 %v1306
      %v1381 = vunpack.c.l.b16 %v1309
      %v1382 = vunpack.c.l.b16 %v1312
      %v1383 = vpack.c.b16 %v1373, %v1373
      %v1384 = vpack.c.b16 %v1374, %v1374
      %v1385 = vpack.c.b16 %v1375, %v1375
      %v1386 = vpack.c.b16 %v1376, %v1376
      %v1387 = vpack.c.b16 %v1377, %v1377
      %v1388 = vpack.c.b16 %v1378, %v1378
      %v1389 = vpack.c.b16 %v1379, %v1379
      %v1390 = vpack.c.b16 %v1380, %v1380
      %v1391 = vpack.c.b16 %v1381, %v1381
      %v1392 = vpack.c.b16 %v1382, %v1382
      %v1394 = vshrl.u32 %v1353, 16
      %v1396 = vshll.u32 %v1353, 16
      %v1398 = vrot.slane %v1396, 1
      %v1399 = vor.u32 %v1394, %v1398
      %v1401 = vshll.u32 %v1383, 16
      %v1403 = vrot.slane %v1401, 1
      %v1404 = vsel %vm1045, %v1399, %v1403
      %v1406 = vshrl.u32 %v1354, 16
      %v1408 = vshll.u32 %v1354, 16
      %v1410 = vrot.slane %v1408, 1
      %v1411 = vor.u32 %v1406, %v1410
      %v1413 = vshll.u32 %v1384, 16
      %v1415 = vrot.slane %v1413, 1
      %v1416 = vsel %vm1045, %v1411, %v1415
      %v1418 = vshrl.u32 %v1355, 16
      %v1420 = vshll.u32 %v1355, 16
      %v1422 = vrot.slane %v1420, 1
      %v1423 = vor.u32 %v1418, %v1422
      %v1425 = vshll.u32 %v1385, 16
      %v1427 = vrot.slane %v1425, 1
      %v1428 = vsel %vm1045, %v1423, %v1427
      %v1430 = vshrl.u32 %v1356, 16
      %v1432 = vshll.u32 %v1356, 16
      %v1434 = vrot.slane %v1432, 1
      %v1435 = vor.u32 %v1430, %v1434
      %v1437 = vshll.u32 %v1386, 16
      %v1439 = vrot.slane %v1437, 1
      %v1440 = vsel %vm1045, %v1435, %v1439
      %v1442 = vshrl.u32 %v1357, 16
      %v1444 = vshll.u32 %v1357, 16
      %v1446 = vrot.slane %v1444, 1
      %v1447 = vor.u32 %v1442, %v1446
      %v1449 = vshll.u32 %v1387, 16
      %v1451 = vrot.slane %v1449, 1
      %v1452 = vsel %vm1045, %v1447, %v1451
      %v1454 = vshrl.u32 %v1358, 16
      %v1456 = vshll.u32 %v1358, 16
      %v1458 = vrot.slane %v1456, 1
      %v1459 = vor.u32 %v1454, %v1458
      %v1461 = vshll.u32 %v1388, 16
      %v1463 = vrot.slane %v1461, 1
      %v1464 = vsel %vm1045, %v1459, %v1463
      %v1466 = vshrl.u32 %v1359, 16
      %v1468 = vshll.u32 %v1359, 16
      %v1470 = vrot.slane %v1468, 1
      %v1471 = vor.u32 %v1466, %v1470
      %v1473 = vshll.u32 %v1389, 16
      %v1475 = vrot.slane %v1473, 1
      %v1476 = vsel %vm1045, %v1471, %v1475
      %v1478 = vshrl.u32 %v1360, 16
      %v1480 = vshll.u32 %v1360, 16
      %v1482 = vrot.slane %v1480, 1
      %v1483 = vor.u32 %v1478, %v1482
      %v1485 = vshll.u32 %v1390, 16
      %v1487 = vrot.slane %v1485, 1
      %v1488 = vsel %vm1045, %v1483, %v1487
      %v1490 = vshrl.u32 %v1361, 16
      %v1492 = vshll.u32 %v1361, 16
      %v1494 = vrot.slane %v1492, 1
      %v1495 = vor.u32 %v1490, %v1494
      %v1497 = vshll.u32 %v1391, 16
      %v1499 = vrot.slane %v1497, 1
      %v1500 = vsel %vm1045, %v1495, %v1499
      %v1502 = vshrl.u32 %v1362, 16
      %v1504 = vshll.u32 %v1362, 16
      %v1506 = vrot.slane %v1504, 1
      %v1507 = vor.u32 %v1502, %v1506
      %v1509 = vshll.u32 %v1392, 16
      %v1511 = vrot.slane %v1509, 1
      %v1512 = vsel %vm1045, %v1507, %v1511
      %1513 = vrot.lane.b32.xlu0 %v1404, 8
      %v1514 = vpop.permute.xlu0 %1513
      %1515 = vrot.lane.b32.xlu0 %v1416, 8
      %v1516 = vpop.permute.xlu0 %1515
      %1517 = vrot.lane.b32.xlu0 %v1428, 8
      %v1518 = vpop.permute.xlu0 %1517
      %1519 = vrot.lane.b32.xlu0 %v1440, 8
      %v1520 = vpop.permute.xlu0 %1519
      %1521 = vrot.lane.b32.xlu0 %v1452, 8
      %v1522 = vpop.permute.xlu0 %1521
      %1523 = vrot.lane.b32.xlu0 %v1464, 8
      %v1524 = vpop.permute.xlu0 %1523
      %1525 = vrot.lane.b32.xlu0 %v1476, 8
      %v1526 = vpop.permute.xlu0 %1525
      %1527 = vrot.lane.b32.xlu0 %v1488, 8
      %v1528 = vpop.permute.xlu0 %1527
      %1529 = vrot.lane.b32.xlu0 %v1500, 8
      %v1530 = vpop.permute.xlu0 %1529
      %1531 = vrot.lane.b32.xlu0 %v1512, 8
      %v1532 = vpop.permute.xlu0 %1531
      %v1533 = vrot.slane %v1353, 1
      %v1534 = vrot.slane %v1383, 1
      %v1535 = vsel %vm1186, %v1533, %v1534
      %v1536 = vrot.slane %v1354, 1
      %v1537 = vrot.slane %v1384, 1
      %v1538 = vsel %vm1186, %v1536, %v1537
      %v1539 = vrot.slane %v1355, 1
      %v1540 = vrot.slane %v1385, 1
      %v1541 = vsel %vm1186, %v1539, %v1540
      %v1542 = vrot.slane %v1356, 1
      %v1543 = vrot.slane %v1386, 1
      %v1544 = vsel %vm1186, %v1542, %v1543
      %v1545 = vrot.slane %v1357, 1
      %v1546 = vrot.slane %v1387, 1
      %v1547 = vsel %vm1186, %v1545, %v1546
      %v1548 = vrot.slane %v1358, 1
      %v1549 = vrot.slane %v1388, 1
      %v1550 = vsel %vm1186, %v1548, %v1549
      %v1551 = vrot.slane %v1359, 1
      %v1552 = vrot.slane %v1389, 1
      %v1553 = vsel %vm1186, %v1551, %v1552
      %v1554 = vrot.slane %v1360, 1
      %v1555 = vrot.slane %v1390, 1
      %v1556 = vsel %vm1186, %v1554, %v1555
      %v1557 = vrot.slane %v1361, 1
      %v1558 = vrot.slane %v1391, 1
      %v1559 = vsel %vm1186, %v1557, %v1558
      %v1560 = vrot.slane %v1362, 1
      %v1561 = vrot.slane %v1392, 1
      %v1562 = vsel %vm1186, %v1560, %v1561
      %1563 = vrot.lane.b32.xlu0 %v1535, 16
      %v1564 = vpop.permute.xlu0 %1563
      %1565 = vrot.lane.b32.xlu0 %v1538, 16
      %v1566 = vpop.permute.xlu0 %1565
      %1567 = vrot.lane.b32.xlu0 %v1541, 16
      %v1568 = vpop.permute.xlu0 %1567
      %1569 = vrot.lane.b32.xlu0 %v1544, 16
      %v1570 = vpop.permute.xlu0 %1569
      %1571 = vrot.lane.b32.xlu0 %v1547, 16
      %v1572 = vpop.permute.xlu0 %1571
      %1573 = vrot.lane.b32.xlu0 %v1550, 16
      %v1574 = vpop.permute.xlu0 %1573
      %1575 = vrot.lane.b32.xlu0 %v1553, 16
      %v1576 = vpop.permute.xlu0 %1575
      %1577 = vrot.lane.b32.xlu0 %v1556, 16
      %v1578 = vpop.permute.xlu0 %1577
      %1579 = vrot.lane.b32.xlu0 %v1559, 16
      %v1580 = vpop.permute.xlu0 %1579
      %1581 = vrot.lane.b32.xlu0 %v1562, 16
      %v1582 = vpop.permute.xlu0 %1581
      %v1584 = vsel %vm1237, %v1353, %v1514
      %v1586 = vsel %vm1237, %v1354, %v1516
      %v1588 = vsel %vm1237, %v1355, %v1518
      %v1590 = vsel %vm1237, %v1356, %v1520
      %v1592 = vsel %vm1237, %v1357, %v1522
      %v1594 = vsel %vm1237, %v1358, %v1524
      %v1596 = vsel %vm1237, %v1359, %v1526
      %v1598 = vsel %vm1237, %v1360, %v1528
      %v1600 = vsel %vm1237, %v1361, %v1530
      %v1602 = vsel %vm1237, %v1362, %v1532
      %v1604 = vsel %vm1258, %v1584, %v1564
      %v1606 = vsel %vm1258, %v1586, %v1566
      %v1608 = vsel %vm1258, %v1588, %v1568
      %v1610 = vsel %vm1258, %v1590, %v1570
      %v1612 = vsel %vm1258, %v1592, %v1572
      %v1614 = vsel %vm1258, %v1594, %v1574
      %v1616 = vsel %vm1258, %v1596, %v1576
      %v1618 = vsel %vm1258, %v1598, %v1578
      %v1620 = vsel %vm1258, %v1600, %v1580
      %v1622 = vsel %vm1258, %v1602, %v1582
      %s1623 = scalar_lea.vmem %s3, 12
      %v1624 = vld [vmem:[%s1623] sm:$0xf]
      %v1625 = vld [vmem:[%s1623 + $0x4] sm:$0xf]
      %v1626 = vld [vmem:[%s1623 + $0x8] sm:$0xf]
      %v1630 = vunpack.c.l.b16 %v1624
      %v1631 = vunpack.c.l.b16 %v1625
      %v1632 = vunpack.c.l.b16 %v1626
      %v1633 = vpack.c.b16 %v1631, %v1630
      %v1634 = vpack.c.b16 %v1632, %v1632
      %vm1636 = vcmask 195584
      %v1637 = vsel %vm1636, %v1604, 0
      %v1639 = vsel %vm1636, %v1606, 0
      %v1641 = vsel %vm1636, %v1608, 0
      %v1643 = vsel %vm1636, %v1610, 0
      %v1645 = vsel %vm1636, %v1612, 0
      %v1647 = vsel %vm1636, %v1614, 0
      %v1649 = vsel %vm1636, %v1616, 0
      %v1651 = vsel %vm1636, %v1618, 0
      %v1653 = vsel %vm1636, %v1620, 0
      %v1655 = vsel %vm1636, %v1622, 0
      %vm1657 = vcmask 1043456
      %v1659 = vsel %vm1657, %v1634, 0
      %1661 = vmatprep.subr.bf16.mxu0 0
      %1662 = vmatpush1.bf16.msra.mxu0 0
      %1663 = vmatprep.subr.bf16.mxu0 0
      %1664 = vmatpush1.bf16.msra.mxu0 0
      %1665 = vmatprep.subr.bf16.mxu0 0
      %1666 = vmatpush1.bf16.msra.mxu0 0
      %1667 = vmatprep.subr.bf16.mxu0 0
      %1668 = vmatpush1.bf16.msra.mxu0 0
      %1669 = vmatprep.subr.bf16.mxu0 0
      %1670 = vmatpush1.bf16.msra.mxu0 0
      %1671 = vmatprep.subr.bf16.mxu0 0
      %1672 = vmatpush1.bf16.msra.mxu0 0
      %1673 = vmatprep.subr.bf16.mxu0 0
      %1674 = vmatpush1.bf16.msra.mxu0 %v1659
      %1675 = vmatprep.subr.bf16.mxu0 0
      %1676 = vmatpush1.bf16.msra.mxu0 %v1633
      %1677 = vmatprep.subr.bf16.mxu0 0
      %1678 = vmatpush2.bf16.msra.mxu0 0
      %1679 = vmatprep.subr.bf16.mxu0 0
      %1680 = vmatpush2.bf16.msra.mxu0 0
      %1681 = vmatprep.subr.bf16.mxu0 0
      %1682 = vmatpush2.bf16.msra.mxu0 0
      %1683 = vmatprep.subr.bf16.mxu0 0
      %1684 = vmatpush2.bf16.msra.mxu0 0
      %1685 = vmatprep.subr.bf16.mxu0 0
      %1686 = vmatpush2.bf16.msra.mxu0 0
      %1687 = vmatprep.subr.bf16.mxu0 0
      %1688 = vmatpush2.bf16.msra.mxu0 0
      %1689 = vmatprep.subr.bf16.mxu0 0
      %1690 = vmatpush2.bf16.msra.mxu0 0
      %1691 = vmatprep.subr.bf16.mxu0 0
      %1692 = vmatpush2.bf16.msra.mxu0 0
      %1693 = vmatprep.mubr.bf16.mxu0 0
      %1694 = vmatmul.mubr.bf16.gmra.mxu0 %v1637
      %v1695 = vpop.f32.mrf.mxu0
      %v1696 = vadd.f32 0.0, %v1695
      %v1697 = vpop.f32.mrf.mxu0
      %v1698 = vpop.f32.mrf.mxu0
      %v1699 = vadd.f32 0.0, %v1698
      %v1700 = vpop.f32.mrf.mxu0
      %1701 = vmatprep.mubr.bf16.mxu0 0
      %1702 = vmatmul.mubr.bf16.gmra.mxu0 %v1639
      %v1703 = vpop.f32.mrf.mxu0
      %v1704 = vadd.f32 0.0, %v1703
      %v1705 = vpop.f32.mrf.mxu0
      %v1706 = vpop.f32.mrf.mxu0
      %v1707 = vadd.f32 0.0, %v1706
      %v1708 = vpop.f32.mrf.mxu0
      %1709 = vmatprep.mubr.bf16.mxu0 0
      %1710 = vmatmul.mubr.bf16.gmra.mxu0 %v1641
      %v1711 = vpop.f32.mrf.mxu0
      %v1712 = vadd.f32 0.0, %v1711
      %v1713 = vpop.f32.mrf.mxu0
      %v1714 = vpop.f32.mrf.mxu0
      %v1715 = vadd.f32 0.0, %v1714
      %v1716 = vpop.f32.mrf.mxu0
      %1717 = vmatprep.mubr.bf16.mxu0 0
      %1718 = vmatmul.mubr.bf16.gmra.mxu0 %v1643
      %v1719 = vpop.f32.mrf.mxu0
      %v1720 = vadd.f32 0.0, %v1719
      %v1721 = vpop.f32.mrf.mxu0
      %v1722 = vpop.f32.mrf.mxu0
      %v1723 = vadd.f32 0.0, %v1722
      %v1724 = vpop.f32.mrf.mxu0
      %1725 = vmatprep.mubr.bf16.mxu0 0
      %1726 = vmatmul.mubr.bf16.gmra.mxu0 %v1645
      %v1727 = vpop.f32.mrf.mxu0
      %v1728 = vadd.f32 0.0, %v1727
      %v1729 = vpop.f32.mrf.mxu0
      %v1730 = vpop.f32.mrf.mxu0
      %v1731 = vadd.f32 0.0, %v1730
      %v1732 = vpop.f32.mrf.mxu0
      %1733 = vmatprep.mubr.bf16.mxu0 0
      %1734 = vmatmul.mubr.bf16.gmra.mxu0 %v1647
      %v1735 = vpop.f32.mrf.mxu0
      %v1736 = vadd.f32 0.0, %v1735
      %v1737 = vpop.f32.mrf.mxu0
      %v1738 = vpop.f32.mrf.mxu0
      %v1739 = vadd.f32 0.0, %v1738
      %v1740 = vpop.f32.mrf.mxu0
      %1741 = vmatprep.mubr.bf16.mxu0 0
      %1742 = vmatmul.mubr.bf16.gmra.mxu0 %v1649
      %v1743 = vpop.f32.mrf.mxu0
      %v1744 = vadd.f32 0.0, %v1743
      %v1745 = vpop.f32.mrf.mxu0
      %v1746 = vpop.f32.mrf.mxu0
      %v1747 = vadd.f32 0.0, %v1746
      %v1748 = vpop.f32.mrf.mxu0
      %1749 = vmatprep.mubr.bf16.mxu0 0
      %1750 = vmatmul.mubr.bf16.gmra.mxu0 %v1651
      %v1751 = vpop.f32.mrf.mxu0
      %v1752 = vadd.f32 0.0, %v1751
      %v1753 = vpop.f32.mrf.mxu0
      %v1754 = vpop.f32.mrf.mxu0
      %v1755 = vadd.f32 0.0, %v1754
      %v1756 = vpop.f32.mrf.mxu0
      %1757 = vmatprep.mubr.bf16.mxu0 0
      %1758 = vmatmul.mubr.bf16.gmra.mxu0 %v1653
      %v1759 = vpop.f32.mrf.mxu0
      %v1760 = vadd.f32 0.0, %v1759
      %v1761 = vpop.f32.mrf.mxu0
      %v1762 = vpop.f32.mrf.mxu0
      %v1763 = vadd.f32 0.0, %v1762
      %v1764 = vpop.f32.mrf.mxu0
      %1765 = vmatprep.mubr.bf16.mxu0 0
      %1766 = vmatmul.mubr.bf16.gmra.mxu0 %v1655
      %v1767 = vpop.f32.mrf.mxu0
      %v1768 = vadd.f32 0.0, %v1767
      %v1769 = vpop.f32.mrf.mxu0
      %v1770 = vpop.f32.mrf.mxu0
      %v1771 = vadd.f32 0.0, %v1770
      %v1772 = vpop.f32.mrf.mxu0
      %1773 = vdwg.mxu0
      %v1777 = vunpack.c.l.b16 %v1279
      %v1778 = vunpack.c.l.b16 %v1280
      %v1779 = vunpack.c.l.b16 %v1281
      %v1780 = vpack.c.b16 %v1778, %v1777
      %v1781 = vpack.c.b16 %v1779, %v1779
      %v1783 = vsel %vm1636, %v1260, 0
      %v1785 = vsel %vm1636, %v1262, 0
      %v1787 = vsel %vm1636, %v1264, 0
      %v1789 = vsel %vm1636, %v1266, 0
      %v1791 = vsel %vm1636, %v1268, 0
      %v1793 = vsel %vm1636, %v1270, 0
      %v1795 = vsel %vm1636, %v1272, 0
      %v1797 = vsel %vm1636, %v1274, 0
      %v1799 = vsel %vm1636, %v1276, 0
      %v1801 = vsel %vm1636, %v1278, 0
      %v1804 = vsel %vm1657, %v1781, 0
      %1806 = vmatprep.subr.bf16.mxu0 0
      %1807 = vmatpush1.bf16.msra.mxu0 0
      %1808 = vmatprep.subr.bf16.mxu0 0
      %1809 = vmatpush1.bf16.msra.mxu0 0
      %1810 = vmatprep.subr.bf16.mxu0 0
      %1811 = vmatpush1.bf16.msra.mxu0 0
      %1812 = vmatprep.subr.bf16.mxu0 0
      %1813 = vmatpush1.bf16.msra.mxu0 0
      %1814 = vmatprep.subr.bf16.mxu0 0
      %1815 = vmatpush1.bf16.msra.mxu0 0
      %1816 = vmatprep.subr.bf16.mxu0 0
      %1817 = vmatpush1.bf16.msra.mxu0 0
      %1818 = vmatprep.subr.bf16.mxu0 0
      %1819 = vmatpush1.bf16.msra.mxu0 %v1804
      %1820 = vmatprep.subr.bf16.mxu0 0
      %1821 = vmatpush1.bf16.msra.mxu0 %v1780
      %1822 = vmatprep.subr.bf16.mxu0 0
      %1823 = vmatpush2.bf16.msra.mxu0 0
      %1824 = vmatprep.subr.bf16.mxu0 0
      %1825 = vmatpush2.bf16.msra.mxu0 0
      %1826 = vmatprep.subr.bf16.mxu0 0
      %1827 = vmatpush2.bf16.msra.mxu0 0
      %1828 = vmatprep.subr.bf16.mxu0 0
      %1829 = vmatpush2.bf16.msra.mxu0 0
      %1830 = vmatprep.subr.bf16.mxu0 0
      %1831 = vmatpush2.bf16.msra.mxu0 0
      %1832 = vmatprep.subr.bf16.mxu0 0
      %1833 = vmatpush2.bf16.msra.mxu0 0
      %1834 = vmatprep.subr.bf16.mxu0 0
      %1835 = vmatpush2.bf16.msra.mxu0 0
      %1836 = vmatprep.subr.bf16.mxu0 0
      %1837 = vmatpush2.bf16.msra.mxu0 0
      %1838 = vmatprep.mubr.bf16.mxu0 0
      %1839 = vmatmul.mubr.bf16.gmra.mxu0 %v1783
      %v1840 = vpop.f32.mrf.mxu0
      %v1841 = vadd.f32 %v1696, %v1840
      %v1842 = vpop.f32.mrf.mxu0
      %v1843 = vpop.f32.mrf.mxu0
      %v1844 = vadd.f32 %v1699, %v1843
      %v1845 = vpop.f32.mrf.mxu0
      %1846 = vmatprep.mubr.bf16.mxu0 0
      %1847 = vmatmul.mubr.bf16.gmra.mxu0 %v1785
      %v1848 = vpop.f32.mrf.mxu0
      %v1849 = vadd.f32 %v1704, %v1848
      %v1850 = vpop.f32.mrf.mxu0
      %v1851 = vpop.f32.mrf.mxu0
      %v1852 = vadd.f32 %v1707, %v1851
      %v1853 = vpop.f32.mrf.mxu0
      %1854 = vmatprep.mubr.bf16.mxu0 0
      %1855 = vmatmul.mubr.bf16.gmra.mxu0 %v1787
      %v1856 = vpop.f32.mrf.mxu0
      %v1857 = vadd.f32 %v1712, %v1856
      %v1858 = vpop.f32.mrf.mxu0
      %v1859 = vpop.f32.mrf.mxu0
      %v1860 = vadd.f32 %v1715, %v1859
      %v1861 = vpop.f32.mrf.mxu0
      %1862 = vmatprep.mubr.bf16.mxu0 0
      %1863 = vmatmul.mubr.bf16.gmra.mxu0 %v1789
      %v1864 = vpop.f32.mrf.mxu0
      %v1865 = vadd.f32 %v1720, %v1864
      %v1866 = vpop.f32.mrf.mxu0
      %v1867 = vpop.f32.mrf.mxu0
      %v1868 = vadd.f32 %v1723, %v1867
      %v1869 = vpop.f32.mrf.mxu0
      %1870 = vmatprep.mubr.bf16.mxu0 0
      %1871 = vmatmul.mubr.bf16.gmra.mxu0 %v1791
      %v1872 = vpop.f32.mrf.mxu0
      %v1873 = vadd.f32 %v1728, %v1872
      %v1874 = vpop.f32.mrf.mxu0
      %v1875 = vpop.f32.mrf.mxu0
      %v1876 = vadd.f32 %v1731, %v1875
      %v1877 = vpop.f32.mrf.mxu0
      %1878 = vmatprep.mubr.bf16.mxu0 0
      %1879 = vmatmul.mubr.bf16.gmra.mxu0 %v1793
      %v1880 = vpop.f32.mrf.mxu0
      %v1881 = vadd.f32 %v1736, %v1880
      %v1882 = vpop.f32.mrf.mxu0
      %v1883 = vpop.f32.mrf.mxu0
      %v1884 = vadd.f32 %v1739, %v1883
      %v1885 = vpop.f32.mrf.mxu0
      %1886 = vmatprep.mubr.bf16.mxu0 0
      %1887 = vmatmul.mubr.bf16.gmra.mxu0 %v1795
      %v1888 = vpop.f32.mrf.mxu0
      %v1889 = vadd.f32 %v1744, %v1888
      %v1890 = vpop.f32.mrf.mxu0
      %v1891 = vpop.f32.mrf.mxu0
      %v1892 = vadd.f32 %v1747, %v1891
      %v1893 = vpop.f32.mrf.mxu0
      %1894 = vmatprep.mubr.bf16.mxu0 0
      %1895 = vmatmul.mubr.bf16.gmra.mxu0 %v1797
      %v1896 = vpop.f32.mrf.mxu0
      %v1897 = vadd.f32 %v1752, %v1896
      %v1898 = vpop.f32.mrf.mxu0
      %v1899 = vpop.f32.mrf.mxu0
      %v1900 = vadd.f32 %v1755, %v1899
      %v1901 = vpop.f32.mrf.mxu0
      %1902 = vmatprep.mubr.bf16.mxu0 0
      %1903 = vmatmul.mubr.bf16.gmra.mxu0 %v1799
      %v1904 = vpop.f32.mrf.mxu0
      %v1905 = vadd.f32 %v1760, %v1904
      %v1906 = vpop.f32.mrf.mxu0
      %v1907 = vpop.f32.mrf.mxu0
      %v1908 = vadd.f32 %v1763, %v1907
      %v1909 = vpop.f32.mrf.mxu0
      %1910 = vmatprep.mubr.bf16.mxu0 0
      %1911 = vmatmul.mubr.bf16.gmra.mxu0 %v1801
      %v1912 = vpop.f32.mrf.mxu0
      %v1913 = vadd.f32 %v1768, %v1912
      %v1914 = vpop.f32.mrf.mxu0
      %v1915 = vpop.f32.mrf.mxu0
      %v1916 = vadd.f32 %v1771, %v1915
      %v1917 = vpop.f32.mrf.mxu0
      %1918 = vdwg.mxu0
      %v1919 = vld [vmem:[%s713] sm:$0xf]
      %v1920 = vld [vmem:[%s713 + $0x4] sm:$0xf]
      %v1921 = vld [vmem:[%s713 + $0x8] sm:$0x1]
      %v1922 = vld [vmem:[%s713 + $0xc] sm:$0xf]
      %v1923 = vld [vmem:[%s713 + $0x10] sm:$0xf]
      %v1924 = vld [vmem:[%s713 + $0x14] sm:$0x1]
      %v1925 = vld [vmem:[%s713 + $0x18] sm:$0xf]
      %v1926 = vld [vmem:[%s713 + $0x1c] sm:$0xf]
      %v1927 = vld [vmem:[%s713 + $0x20] sm:$0x1]
      %v1928 = vld [vmem:[%s713 + $0x24] sm:$0xf]
      %v1929 = vld [vmem:[%s713 + $0x28] sm:$0xf]
      %v1930 = vld [vmem:[%s713 + $0x2c] sm:$0x1]
      %v1931 = vld [vmem:[%s713 + $0x30] sm:$0xf]
      %v1932 = vld [vmem:[%s713 + $0x34] sm:$0xf]
      %v1933 = vld [vmem:[%s713 + $0x38] sm:$0x1]
      %v1934 = vld [vmem:[%s713 + $0x3c] sm:$0xf]
      %v1935 = vld [vmem:[%s713 + $0x40] sm:$0xf]
      %v1936 = vld [vmem:[%s713 + $0x44] sm:$0x1]
      %v1937 = vld [vmem:[%s713 + $0x48] sm:$0xf]
      %v1938 = vld [vmem:[%s713 + $0x4c] sm:$0xf]
      %v1939 = vld [vmem:[%s713 + $0x50] sm:$0x1]
      %v1940 = vld [vmem:[%s713 + $0x54] sm:$0xf]
      %v1941 = vld [vmem:[%s713 + $0x58] sm:$0xf]
      %v1942 = vld [vmem:[%s713 + $0x5c] sm:$0x1]
      %v1943 = vld [vmem:[%s713 + $0x60] sm:$0xf]
      %v1944 = vld [vmem:[%s713 + $0x64] sm:$0xf]
      %v1945 = vld [vmem:[%s713 + $0x68] sm:$0x1]
      %v1946 = vld [vmem:[%s713 + $0x6c] sm:$0xf]
      %v1947 = vld [vmem:[%s713 + $0x70] sm:$0xf]
      %v1948 = vld [vmem:[%s713 + $0x74] sm:$0x1]
      %v1969 = vunpack.c.l.b16 %v1919
      %v1970 = vunpack.c.l.b16 %v1920
      %v1971 = vunpack.c.l.b16 %v1922
      %v1972 = vunpack.c.l.b16 %v1923
      %v1973 = vunpack.c.l.b16 %v1925
      %v1974 = vunpack.c.l.b16 %v1926
      %v1975 = vunpack.c.l.b16 %v1928
      %v1976 = vunpack.c.l.b16 %v1929
      %v1977 = vunpack.c.l.b16 %v1931
      %v1978 = vunpack.c.l.b16 %v1932
      %v1979 = vunpack.c.l.b16 %v1934
      %v1980 = vunpack.c.l.b16 %v1935
      %v1981 = vunpack.c.l.b16 %v1937
      %v1982 = vunpack.c.l.b16 %v1938
      %v1983 = vunpack.c.l.b16 %v1940
      %v1984 = vunpack.c.l.b16 %v1941
      %v1985 = vunpack.c.l.b16 %v1943
      %v1986 = vunpack.c.l.b16 %v1944
      %v1987 = vunpack.c.l.b16 %v1946
      %v1988 = vunpack.c.l.b16 %v1947
      %v1989 = vpack.c.b16 %v1970, %v1969
      %v1990 = vpack.c.b16 %v1972, %v1971
      %v1991 = vpack.c.b16 %v1974, %v1973
      %v1992 = vpack.c.b16 %v1976, %v1975
      %v1993 = vpack.c.b16 %v1978, %v1977
      %v1994 = vpack.c.b16 %v1980, %v1979
      %v1995 = vpack.c.b16 %v1982, %v1981
      %v1996 = vpack.c.b16 %v1984, %v1983
      %v1997 = vpack.c.b16 %v1986, %v1985
      %v1998 = vpack.c.b16 %v1988, %v1987
      %v2009 = vunpack.c.l.b16 %v1921
      %v2010 = vunpack.c.l.b16 %v1924
      %v2011 = vunpack.c.l.b16 %v1927
      %v2012 = vunpack.c.l.b16 %v1930
      %v2013 = vunpack.c.l.b16 %v1933
      %v2014 = vunpack.c.l.b16 %v1936
      %v2015 = vunpack.c.l.b16 %v1939
      %v2016 = vunpack.c.l.b16 %v1942
      %v2017 = vunpack.c.l.b16 %v1945
      %v2018 = vunpack.c.l.b16 %v1948
      %v2019 = vpack.c.b16 %v2009, %v2009
      %v2020 = vpack.c.b16 %v2010, %v2010
      %v2021 = vpack.c.b16 %v2011, %v2011
      %v2022 = vpack.c.b16 %v2012, %v2012
      %v2023 = vpack.c.b16 %v2013, %v2013
      %v2024 = vpack.c.b16 %v2014, %v2014
      %v2025 = vpack.c.b16 %v2015, %v2015
      %v2026 = vpack.c.b16 %v2016, %v2016
      %v2027 = vpack.c.b16 %v2017, %v2017
      %v2028 = vpack.c.b16 %v2018, %v2018
      %v2030 = vshrl.u32 %v1989, 16
      %v2032 = vshll.u32 %v1989, 16
      %v2034 = vrot.slane %v2032, 1
      %v2035 = vor.u32 %v2030, %v2034
      %v2037 = vshll.u32 %v2019, 16
      %v2039 = vrot.slane %v2037, 1
      %v2040 = vsel %vm1045, %v2035, %v2039
      %v2042 = vshrl.u32 %v1990, 16
      %v2044 = vshll.u32 %v1990, 16
      %v2046 = vrot.slane %v2044, 1
      %v2047 = vor.u32 %v2042, %v2046
      %v2049 = vshll.u32 %v2020, 16
      %v2051 = vrot.slane %v2049, 1
      %v2052 = vsel %vm1045, %v2047, %v2051
      %v2054 = vshrl.u32 %v1991, 16
      %v2056 = vshll.u32 %v1991, 16
      %v2058 = vrot.slane %v2056, 1
      %v2059 = vor.u32 %v2054, %v2058
      %v2061 = vshll.u32 %v2021, 16
      %v2063 = vrot.slane %v2061, 1
      %v2064 = vsel %vm1045, %v2059, %v2063
      %v2066 = vshrl.u32 %v1992, 16
      %v2068 = vshll.u32 %v1992, 16
      %v2070 = vrot.slane %v2068, 1
      %v2071 = vor.u32 %v2066, %v2070
      %v2073 = vshll.u32 %v2022, 16
      %v2075 = vrot.slane %v2073, 1
      %v2076 = vsel %vm1045, %v2071, %v2075
      %v2078 = vshrl.u32 %v1993, 16
      %v2080 = vshll.u32 %v1993, 16
      %v2082 = vrot.slane %v2080, 1
      %v2083 = vor.u32 %v2078, %v2082
      %v2085 = vshll.u32 %v2023, 16
      %v2087 = vrot.slane %v2085, 1
      %v2088 = vsel %vm1045, %v2083, %v2087
      %v2090 = vshrl.u32 %v1994, 16
      %v2092 = vshll.u32 %v1994, 16
      %v2094 = vrot.slane %v2092, 1
      %v2095 = vor.u32 %v2090, %v2094
      %v2097 = vshll.u32 %v2024, 16
      %v2099 = vrot.slane %v2097, 1
      %v2100 = vsel %vm1045, %v2095, %v2099
      %v2102 = vshrl.u32 %v1995, 16
      %v2104 = vshll.u32 %v1995, 16
      %v2106 = vrot.slane %v2104, 1
      %v2107 = vor.u32 %v2102, %v2106
      %v2109 = vshll.u32 %v2025, 16
      %v2111 = vrot.slane %v2109, 1
      %v2112 = vsel %vm1045, %v2107, %v2111
      %v2114 = vshrl.u32 %v1996, 16
      %v2116 = vshll.u32 %v1996, 16
      %v2118 = vrot.slane %v2116, 1
      %v2119 = vor.u32 %v2114, %v2118
      %v2121 = vshll.u32 %v2026, 16
      %v2123 = vrot.slane %v2121, 1
      %v2124 = vsel %vm1045, %v2119, %v2123
      %v2126 = vshrl.u32 %v1997, 16
      %v2128 = vshll.u32 %v1997, 16
      %v2130 = vrot.slane %v2128, 1
      %v2131 = vor.u32 %v2126, %v2130
      %v2133 = vshll.u32 %v2027, 16
      %v2135 = vrot.slane %v2133, 1
      %v2136 = vsel %vm1045, %v2131, %v2135
      %v2138 = vshrl.u32 %v1998, 16
      %v2140 = vshll.u32 %v1998, 16
      %v2142 = vrot.slane %v2140, 1
      %v2143 = vor.u32 %v2138, %v2142
      %v2145 = vshll.u32 %v2028, 16
      %v2147 = vrot.slane %v2145, 1
      %v2148 = vsel %vm1045, %v2143, %v2147
      %2149 = vrot.lane.b32.xlu0 %v2040, 8
      %v2150 = vpop.permute.xlu0 %2149
      %2151 = vrot.lane.b32.xlu0 %v2052, 8
      %v2152 = vpop.permute.xlu0 %2151
      %2153 = vrot.lane.b32.xlu0 %v2064, 8
      %v2154 = vpop.permute.xlu0 %2153
      %2155 = vrot.lane.b32.xlu0 %v2076, 8
      %v2156 = vpop.permute.xlu0 %2155
      %2157 = vrot.lane.b32.xlu0 %v2088, 8
      %v2158 = vpop.permute.xlu0 %2157
      %2159 = vrot.lane.b32.xlu0 %v2100, 8
      %v2160 = vpop.permute.xlu0 %2159
      %2161 = vrot.lane.b32.xlu0 %v2112, 8
      %v2162 = vpop.permute.xlu0 %2161
      %2163 = vrot.lane.b32.xlu0 %v2124, 8
      %v2164 = vpop.permute.xlu0 %2163
      %2165 = vrot.lane.b32.xlu0 %v2136, 8
      %v2166 = vpop.permute.xlu0 %2165
      %2167 = vrot.lane.b32.xlu0 %v2148, 8
      %v2168 = vpop.permute.xlu0 %2167
      %v2169 = vrot.slane %v1989, 1
      %v2170 = vrot.slane %v2019, 1
      %v2171 = vsel %vm1186, %v2169, %v2170
      %v2172 = vrot.slane %v1990, 1
      %v2173 = vrot.slane %v2020, 1
      %v2174 = vsel %vm1186, %v2172, %v2173
      %v2175 = vrot.slane %v1991, 1
      %v2176 = vrot.slane %v2021, 1
      %v2177 = vsel %vm1186, %v2175, %v2176
      %v2178 = vrot.slane %v1992, 1
      %v2179 = vrot.slane %v2022, 1
      %v2180 = vsel %vm1186, %v2178, %v2179
      %v2181 = vrot.slane %v1993, 1
      %v2182 = vrot.slane %v2023, 1
      %v2183 = vsel %vm1186, %v2181, %v2182
      %v2184 = vrot.slane %v1994, 1
      %v2185 = vrot.slane %v2024, 1
      %v2186 = vsel %vm1186, %v2184, %v2185
      %v2187 = vrot.slane %v1995, 1
      %v2188 = vrot.slane %v2025, 1
      %v2189 = vsel %vm1186, %v2187, %v2188
      %v2190 = vrot.slane %v1996, 1
      %v2191 = vrot.slane %v2026, 1
      %v2192 = vsel %vm1186, %v2190, %v2191
      %v2193 = vrot.slane %v1997, 1
      %v2194 = vrot.slane %v2027, 1
      %v2195 = vsel %vm1186, %v2193, %v2194
      %v2196 = vrot.slane %v1998, 1
      %v2197 = vrot.slane %v2028, 1
      %v2198 = vsel %vm1186, %v2196, %v2197
      %2199 = vrot.lane.b32.xlu0 %v2171, 16
      %v2200 = vpop.permute.xlu0 %2199
      %2201 = vrot.lane.b32.xlu0 %v2174, 16
      %v2202 = vpop.permute.xlu0 %2201
      %2203 = vrot.lane.b32.xlu0 %v2177, 16
      %v2204 = vpop.permute.xlu0 %2203
      %2205 = vrot.lane.b32.xlu0 %v2180, 16
      %v2206 = vpop.permute.xlu0 %2205
      %2207 = vrot.lane.b32.xlu0 %v2183, 16
      %v2208 = vpop.permute.xlu0 %2207
      %2209 = vrot.lane.b32.xlu0 %v2186, 16
      %v2210 = vpop.permute.xlu0 %2209
      %2211 = vrot.lane.b32.xlu0 %v2189, 16
      %v2212 = vpop.permute.xlu0 %2211
      %2213 = vrot.lane.b32.xlu0 %v2192, 16
      %v2214 = vpop.permute.xlu0 %2213
      %2215 = vrot.lane.b32.xlu0 %v2195, 16
      %v2216 = vpop.permute.xlu0 %2215
      %2217 = vrot.lane.b32.xlu0 %v2198, 16
      %v2218 = vpop.permute.xlu0 %2217
      %v2220 = vsel %vm1237, %v1989, %v2150
      %v2222 = vsel %vm1237, %v1990, %v2152
      %v2224 = vsel %vm1237, %v1991, %v2154
      %v2226 = vsel %vm1237, %v1992, %v2156
      %v2228 = vsel %vm1237, %v1993, %v2158
      %v2230 = vsel %vm1237, %v1994, %v2160
      %v2232 = vsel %vm1237, %v1995, %v2162
      %v2234 = vsel %vm1237, %v1996, %v2164
      %v2236 = vsel %vm1237, %v1997, %v2166
      %v2238 = vsel %vm1237, %v1998, %v2168
      %v2240 = vsel %vm1258, %v2220, %v2200
      %v2242 = vsel %vm1258, %v2222, %v2202
      %v2244 = vsel %vm1258, %v2224, %v2204
      %v2246 = vsel %vm1258, %v2226, %v2206
      %v2248 = vsel %vm1258, %v2228, %v2208
      %v2250 = vsel %vm1258, %v2230, %v2210
      %v2252 = vsel %vm1258, %v2232, %v2212
      %v2254 = vsel %vm1258, %v2234, %v2214
      %v2256 = vsel %vm1258, %v2236, %v2216
      %v2258 = vsel %vm1258, %v2238, %v2218
      %s2259 = scalar_lea.vmem %s3, 24
      %v2260 = vld [vmem:[%s2259] sm:$0xf]
      %v2261 = vld [vmem:[%s2259 + $0x4] sm:$0xf]
      %v2262 = vld [vmem:[%s2259 + $0x8] sm:$0xf]
      %v2266 = vunpack.c.l.b16 %v2260
      %v2267 = vunpack.c.l.b16 %v2261
      %v2268 = vunpack.c.l.b16 %v2262
      %v2269 = vpack.c.b16 %v2267, %v2266
      %v2270 = vpack.c.b16 %v2268, %v2268
      %v2272 = vsel %vm1636, %v2240, 0
      %v2274 = vsel %vm1636, %v2242, 0
      %v2276 = vsel %vm1636, %v2244, 0
      %v2278 = vsel %vm1636, %v2246, 0
      %v2280 = vsel %vm1636, %v2248, 0
      %v2282 = vsel %vm1636, %v2250, 0
      %v2284 = vsel %vm1636, %v2252, 0
      %v2286 = vsel %vm1636, %v2254, 0
      %v2288 = vsel %vm1636, %v2256, 0
      %v2290 = vsel %vm1636, %v2258, 0
      %v2293 = vsel %vm1657, %v2270, 0
      %2295 = vmatprep.subr.bf16.mxu0 0
      %2296 = vmatpush1.bf16.msra.mxu0 0
      %2297 = vmatprep.subr.bf16.mxu0 0
      %2298 = vmatpush1.bf16.msra.mxu0 0
      %2299 = vmatprep.subr.bf16.mxu0 0
      %2300 = vmatpush1.bf16.msra.mxu0 0
      %2301 = vmatprep.subr.bf16.mxu0 0
      %2302 = vmatpush1.bf16.msra.mxu0 0
      %2303 = vmatprep.subr.bf16.mxu0 0
      %2304 = vmatpush1.bf16.msra.mxu0 0
      %2305 = vmatprep.subr.bf16.mxu0 0
      %2306 = vmatpush1.bf16.msra.mxu0 0
      %2307 = vmatprep.subr.bf16.mxu0 0
      %2308 = vmatpush1.bf16.msra.mxu0 %v2293
      %2309 = vmatprep.subr.bf16.mxu0 0
      %2310 = vmatpush1.bf16.msra.mxu0 %v2269
      %2311 = vmatprep.subr.bf16.mxu0 0
      %2312 = vmatpush2.bf16.msra.mxu0 0
      %2313 = vmatprep.subr.bf16.mxu0 0
      %2314 = vmatpush2.bf16.msra.mxu0 0
      %2315 = vmatprep.subr.bf16.mxu0 0
      %2316 = vmatpush2.bf16.msra.mxu0 0
      %2317 = vmatprep.subr.bf16.mxu0 0
      %2318 = vmatpush2.bf16.msra.mxu0 0
      %2319 = vmatprep.subr.bf16.mxu0 0
      %2320 = vmatpush2.bf16.msra.mxu0 0
      %2321 = vmatprep.subr.bf16.mxu0 0
      %2322 = vmatpush2.bf16.msra.mxu0 0
      %2323 = vmatprep.subr.bf16.mxu0 0
      %2324 = vmatpush2.bf16.msra.mxu0 0
      %2325 = vmatprep.subr.bf16.mxu0 0
      %2326 = vmatpush2.bf16.msra.mxu0 0
      %2327 = vmatprep.mubr.bf16.mxu0 0
      %2328 = vmatmul.mubr.bf16.gmra.mxu0 %v2272
      %v2329 = vpop.f32.mrf.mxu0
      %v2330 = vadd.f32 0.0, %v2329
      %v2331 = vpop.f32.mrf.mxu0
      %v2332 = vpop.f32.mrf.mxu0
      %v2333 = vadd.f32 0.0, %v2332
      %v2334 = vpop.f32.mrf.mxu0
      %2335 = vmatprep.mubr.bf16.mxu0 0
      %2336 = vmatmul.mubr.bf16.gmra.mxu0 %v2274
      %v2337 = vpop.f32.mrf.mxu0
      %v2338 = vadd.f32 0.0, %v2337
      %v2339 = vpop.f32.mrf.mxu0
      %v2340 = vpop.f32.mrf.mxu0
      %v2341 = vadd.f32 0.0, %v2340
      %v2342 = vpop.f32.mrf.mxu0
      %2343 = vmatprep.mubr.bf16.mxu0 0
      %2344 = vmatmul.mubr.bf16.gmra.mxu0 %v2276
      %v2345 = vpop.f32.mrf.mxu0
      %v2346 = vadd.f32 0.0, %v2345
      %v2347 = vpop.f32.mrf.mxu0
      %v2348 = vpop.f32.mrf.mxu0
      %v2349 = vadd.f32 0.0, %v2348
      %v2350 = vpop.f32.mrf.mxu0
      %2351 = vmatprep.mubr.bf16.mxu0 0
      %2352 = vmatmul.mubr.bf16.gmra.mxu0 %v2278
      %v2353 = vpop.f32.mrf.mxu0
      %v2354 = vadd.f32 0.0, %v2353
      %v2355 = vpop.f32.mrf.mxu0
      %v2356 = vpop.f32.mrf.mxu0
      %v2357 = vadd.f32 0.0, %v2356
      %v2358 = vpop.f32.mrf.mxu0
      %2359 = vmatprep.mubr.bf16.mxu0 0
      %2360 = vmatmul.mubr.bf16.gmra.mxu0 %v2280
      %v2361 = vpop.f32.mrf.mxu0
      %v2362 = vadd.f32 0.0, %v2361
      %v2363 = vpop.f32.mrf.mxu0
      %v2364 = vpop.f32.mrf.mxu0
      %v2365 = vadd.f32 0.0, %v2364
      %v2366 = vpop.f32.mrf.mxu0
      %2367 = vmatprep.mubr.bf16.mxu0 0
      %2368 = vmatmul.mubr.bf16.gmra.mxu0 %v2282
      %v2369 = vpop.f32.mrf.mxu0
      %v2370 = vadd.f32 0.0, %v2369
      %v2371 = vpop.f32.mrf.mxu0
      %v2372 = vpop.f32.mrf.mxu0
      %v2373 = vadd.f32 0.0, %v2372
      %v2374 = vpop.f32.mrf.mxu0
      %2375 = vmatprep.mubr.bf16.mxu0 0
      %2376 = vmatmul.mubr.bf16.gmra.mxu0 %v2284
      %v2377 = vpop.f32.mrf.mxu0
      %v2378 = vadd.f32 0.0, %v2377
      %v2379 = vpop.f32.mrf.mxu0
      %v2380 = vpop.f32.mrf.mxu0
      %v2381 = vadd.f32 0.0, %v2380
      %v2382 = vpop.f32.mrf.mxu0
      %2383 = vmatprep.mubr.bf16.mxu0 0
      %2384 = vmatmul.mubr.bf16.gmra.mxu0 %v2286
      %v2385 = vpop.f32.mrf.mxu0
      %v2386 = vadd.f32 0.0, %v2385
      %v2387 = vpop.f32.mrf.mxu0
      %v2388 = vpop.f32.mrf.mxu0
      %v2389 = vadd.f32 0.0, %v2388
      %v2390 = vpop.f32.mrf.mxu0
      %2391 = vmatprep.mubr.bf16.mxu0 0
      %2392 = vmatmul.mubr.bf16.gmra.mxu0 %v2288
      %v2393 = vpop.f32.mrf.mxu0
      %v2394 = vadd.f32 0.0, %v2393
      %v2395 = vpop.f32.mrf.mxu0
      %v2396 = vpop.f32.mrf.mxu0
      %v2397 = vadd.f32 0.0, %v2396
      %v2398 = vpop.f32.mrf.mxu0
      %2399 = vmatprep.mubr.bf16.mxu0 0
      %2400 = vmatmul.mubr.bf16.gmra.mxu0 %v2290
      %v2401 = vpop.f32.mrf.mxu0
      %v2402 = vadd.f32 0.0, %v2401
      %v2403 = vpop.f32.mrf.mxu0
      %v2404 = vpop.f32.mrf.mxu0
      %v2405 = vadd.f32 0.0, %v2404
      %v2406 = vpop.f32.mrf.mxu0
      %2407 = vdwg.mxu0
      %v2408 = vadd.f32 %v1841, %v2330
      %v2409 = vadd.f32 %v1844, %v2333
      %v2410 = vadd.f32 %v1849, %v2338
      %v2411 = vadd.f32 %v1852, %v2341
      %v2412 = vadd.f32 %v1857, %v2346
      %v2413 = vadd.f32 %v1860, %v2349
      %v2414 = vadd.f32 %v1865, %v2354
      %v2415 = vadd.f32 %v1868, %v2357
      %v2416 = vadd.f32 %v1873, %v2362
      %v2417 = vadd.f32 %v1876, %v2365
      %v2418 = vadd.f32 %v1881, %v2370
      %v2419 = vadd.f32 %v1884, %v2373
      %v2420 = vadd.f32 %v1889, %v2378
      %v2421 = vadd.f32 %v1892, %v2381
      %v2422 = vadd.f32 %v1897, %v2386
      %v2423 = vadd.f32 %v1900, %v2389
      %v2424 = vadd.f32 %v1905, %v2394
      %v2425 = vadd.f32 %v1908, %v2397
      %v2426 = vadd.f32 %v1913, %v2402
      %v2427 = vadd.f32 %v1916, %v2405
      %v2428 = vld [vmem:[%s4] sm:$0x1]
      %v2430 = vlaneseq
      %v2431 = vshrl.u32 %v2430, 7
      %v2432 = vsub.s32 0, %v2431
      %v2433 = vrot.slane %v2428, %v2432
      %v2435 = vadd.f32 %v2408, %v2433
      %v2436 = vadd.f32 %v2409, %v2433
      %v2437 = vadd.f32 %v2410, %v2433
      %v2438 = vadd.f32 %v2411, %v2433
      %v2439 = vadd.f32 %v2412, %v2433
      %v2440 = vadd.f32 %v2413, %v2433
      %v2441 = vadd.f32 %v2414, %v2433
      %v2442 = vadd.f32 %v2415, %v2433
      %v2443 = vadd.f32 %v2416, %v2433
      %v2444 = vadd.f32 %v2417, %v2433
      %v2445 = vadd.f32 %v2418, %v2433
      %v2446 = vadd.f32 %v2419, %v2433
      %v2447 = vadd.f32 %v2420, %v2433
      %v2448 = vadd.f32 %v2421, %v2433
      %v2449 = vadd.f32 %v2422, %v2433
      %v2450 = vadd.f32 %v2423, %v2433
      %v2451 = vadd.f32 %v2424, %v2433
      %v2452 = vadd.f32 %v2425, %v2433
      %v2453 = vadd.f32 %v2426, %v2433
      %v2454 = vadd.f32 %v2427, %v2433
      %v2455 = vmax.f32 %v2435, 0.0
      %v2456 = vmax.f32 %v2436, 0.0
      %v2457 = vmax.f32 %v2437, 0.0
      %v2458 = vmax.f32 %v2438, 0.0
      %v2459 = vmax.f32 %v2439, 0.0
      %v2460 = vmax.f32 %v2440, 0.0
      %v2461 = vmax.f32 %v2441, 0.0
      %v2462 = vmax.f32 %v2442, 0.0
      %v2463 = vmax.f32 %v2443, 0.0
      %v2464 = vmax.f32 %v2444, 0.0
      %v2465 = vmax.f32 %v2445, 0.0
      %v2466 = vmax.f32 %v2446, 0.0
      %v2467 = vmax.f32 %v2447, 0.0
      %v2468 = vmax.f32 %v2448, 0.0
      %v2469 = vmax.f32 %v2449, 0.0
      %v2470 = vmax.f32 %v2450, 0.0
      %v2471 = vmax.f32 %v2451, 0.0
      %v2472 = vmax.f32 %v2452, 0.0
      %v2473 = vmax.f32 %v2453, 0.0
      %v2474 = vmax.f32 %v2454, 0.0
      %v2475 = vpack.c.bf16 %v2456, %v2455
      %v2476 = vpack.c.bf16 %v2458, %v2457
      %v2477 = vpack.c.bf16 %v2460, %v2459
      %v2478 = vpack.c.bf16 %v2462, %v2461
      %v2479 = vpack.c.bf16 %v2464, %v2463
      %v2480 = vpack.c.bf16 %v2466, %v2465
      %v2481 = vpack.c.bf16 %v2468, %v2467
      %v2482 = vpack.c.bf16 %v2470, %v2469
      %v2483 = vpack.c.bf16 %v2472, %v2471
      %v2484 = vpack.c.bf16 %v2474, %v2473
      %v2495 = vunpack.c.l.b16 %v2475
      %v2496 = vunpack.c.h.b16 %v2475
      %v2497 = vunpack.c.l.b16 %v2476
      %v2498 = vunpack.c.h.b16 %v2476
      %v2499 = vunpack.c.l.b16 %v2477
      %v2500 = vunpack.c.h.b16 %v2477
      %v2501 = vunpack.c.l.b16 %v2478
      %v2502 = vunpack.c.h.b16 %v2478
      %v2503 = vunpack.c.l.b16 %v2479
      %v2504 = vunpack.c.h.b16 %v2479
      %v2505 = vunpack.c.l.b16 %v2480
      %v2506 = vunpack.c.h.b16 %v2480
      %v2507 = vunpack.c.l.b16 %v2481
      %v2508 = vunpack.c.h.b16 %v2481
      %v2509 = vunpack.c.l.b16 %v2482
      %v2510 = vunpack.c.h.b16 %v2482
      %v2511 = vunpack.c.l.b16 %v2483
      %v2512 = vunpack.c.h.b16 %v2483
      %v2513 = vunpack.c.l.b16 %v2484
      %v2514 = vunpack.c.h.b16 %v2484
      %v2515 = vpack.c.b16 %v2495, %v2495
      %v2516 = vpack.c.b16 %v2496, %v2496
      %v2517 = vpack.c.b16 %v2497, %v2497
      %v2518 = vpack.c.b16 %v2498, %v2498
      %v2519 = vpack.c.b16 %v2499, %v2499
      %v2520 = vpack.c.b16 %v2500, %v2500
      %v2521 = vpack.c.b16 %v2501, %v2501
      %v2522 = vpack.c.b16 %v2502, %v2502
      %v2523 = vpack.c.b16 %v2503, %v2503
      %v2524 = vpack.c.b16 %v2504, %v2504
      %v2525 = vpack.c.b16 %v2505, %v2505
      %v2526 = vpack.c.b16 %v2506, %v2506
      %v2527 = vpack.c.b16 %v2507, %v2507
      %v2528 = vpack.c.b16 %v2508, %v2508
      %v2529 = vpack.c.b16 %v2509, %v2509
      %v2530 = vpack.c.b16 %v2510, %v2510
      %v2531 = vpack.c.b16 %v2511, %v2511
      %v2532 = vpack.c.b16 %v2512, %v2512
      %v2533 = vpack.c.b16 %v2513, %v2513
      %v2534 = vpack.c.b16 %v2514, %v2514
      %v2536 = vshrl.u32 %v2515, 16
      %v2538 = vrot.slane %v2536, 7
      %v2539 = vshll.u32 %v2515, 16
      %v2541 = vor.u32 %v2538, %v2539
      %v2542 = vrot.slane %v2538, 4
      %v2544 = vshrl.u32 %v2516, 16
      %v2546 = vrot.slane %v2544, 7
      %v2547 = vshll.u32 %v2516, 16
      %v2549 = vor.u32 %v2546, %v2547
      %v2550 = vsel %vm552, %v2542, %v2549
      %v2551 = vrot.slane %v2546, 4
      %v2553 = vshrl.u32 %v2517, 16
      %v2555 = vrot.slane %v2553, 7
      %v2556 = vshll.u32 %v2517, 16
      %v2558 = vor.u32 %v2555, %v2556
      %v2559 = vrot.slane %v2555, 4
      %v2561 = vshrl.u32 %v2518, 16
      %v2563 = vrot.slane %v2561, 7
      %v2564 = vshll.u32 %v2518, 16
      %v2566 = vor.u32 %v2563, %v2564
      %v2567 = vsel %vm552, %v2559, %v2566
      %v2568 = vrot.slane %v2563, 4
      %v2570 = vshrl.u32 %v2519, 16
      %v2572 = vrot.slane %v2570, 7
      %v2573 = vshll.u32 %v2519, 16
      %v2575 = vor.u32 %v2572, %v2573
      %v2576 = vrot.slane %v2572, 4
      %v2578 = vshrl.u32 %v2520, 16
      %v2580 = vrot.slane %v2578, 7
      %v2581 = vshll.u32 %v2520, 16
      %v2583 = vor.u32 %v2580, %v2581
      %v2584 = vsel %vm552, %v2576, %v2583
      %v2585 = vrot.slane %v2580, 4
      %v2587 = vshrl.u32 %v2521, 16
      %v2589 = vrot.slane %v2587, 7
      %v2590 = vshll.u32 %v2521, 16
      %v2592 = vor.u32 %v2589, %v2590
      %v2593 = vrot.slane %v2589, 4
      %v2595 = vshrl.u32 %v2522, 16
      %v2597 = vrot.slane %v2595, 7
      %v2598 = vshll.u32 %v2522, 16
      %v2600 = vor.u32 %v2597, %v2598
      %v2601 = vsel %vm552, %v2593, %v2600
      %v2602 = vrot.slane %v2597, 4
      %v2604 = vshrl.u32 %v2523, 16
      %v2606 = vrot.slane %v2604, 7
      %v2607 = vshll.u32 %v2523, 16
      %v2609 = vor.u32 %v2606, %v2607
      %v2610 = vrot.slane %v2606, 4
      %v2612 = vshrl.u32 %v2524, 16
      %v2614 = vrot.slane %v2612, 7
      %v2615 = vshll.u32 %v2524, 16
      %v2617 = vor.u32 %v2614, %v2615
      %v2618 = vsel %vm552, %v2610, %v2617
      %v2619 = vrot.slane %v2614, 4
      %v2621 = vshrl.u32 %v2525, 16
      %v2623 = vrot.slane %v2621, 7
      %v2624 = vshll.u32 %v2525, 16
      %v2626 = vor.u32 %v2623, %v2624
      %v2627 = vrot.slane %v2623, 4
      %v2629 = vshrl.u32 %v2526, 16
      %v2631 = vrot.slane %v2629, 7
      %v2632 = vshll.u32 %v2526, 16
      %v2634 = vor.u32 %v2631, %v2632
      %v2635 = vsel %vm552, %v2627, %v2634
      %v2636 = vrot.slane %v2631, 4
      %v2638 = vshrl.u32 %v2527, 16
      %v2640 = vrot.slane %v2638, 7
      %v2641 = vshll.u32 %v2527, 16
      %v2643 = vor.u32 %v2640, %v2641
      %v2644 = vrot.slane %v2640, 4
      %v2646 = vshrl.u32 %v2528, 16
      %v2648 = vrot.slane %v2646, 7
      %v2649 = vshll.u32 %v2528, 16
      %v2651 = vor.u32 %v2648, %v2649
      %v2652 = vsel %vm552, %v2644, %v2651
      %v2653 = vrot.slane %v2648, 4
      %v2655 = vshrl.u32 %v2529, 16
      %v2657 = vrot.slane %v2655, 7
      %v2658 = vshll.u32 %v2529, 16
      %v2660 = vor.u32 %v2657, %v2658
      %v2661 = vrot.slane %v2657, 4
      %v2663 = vshrl.u32 %v2530, 16
      %v2665 = vrot.slane %v2663, 7
      %v2666 = vshll.u32 %v2530, 16
      %v2668 = vor.u32 %v2665, %v2666
      %v2669 = vsel %vm552, %v2661, %v2668
      %v2670 = vrot.slane %v2665, 4
      %v2672 = vshrl.u32 %v2531, 16
      %v2674 = vrot.slane %v2672, 7
      %v2675 = vshll.u32 %v2531, 16
      %v2677 = vor.u32 %v2674, %v2675
      %v2678 = vrot.slane %v2674, 4
      %v2680 = vshrl.u32 %v2532, 16
      %v2682 = vrot.slane %v2680, 7
      %v2683 = vshll.u32 %v2532, 16
      %v2685 = vor.u32 %v2682, %v2683
      %v2686 = vsel %vm552, %v2678, %v2685
      %v2687 = vrot.slane %v2682, 4
      %v2689 = vshrl.u32 %v2533, 16
      %v2691 = vrot.slane %v2689, 7
      %v2692 = vshll.u32 %v2533, 16
      %v2694 = vor.u32 %v2691, %v2692
      %v2695 = vrot.slane %v2691, 4
      %v2697 = vshrl.u32 %v2534, 16
      %v2699 = vrot.slane %v2697, 7
      %v2700 = vshll.u32 %v2534, 16
      %v2702 = vor.u32 %v2699, %v2700
      %v2703 = vsel %vm552, %v2695, %v2702
      %v2704 = vrot.slane %v2699, 4
      %v2735 = vld [vmem:[#allocation3] sm:$0xf]
      %v2736 = vsel %vm715, %v2541, %v2735
      %2737 = vst [vmem:[#allocation3] sm:$0xf] %v2736
      %2738 = vst.msk [vmem:[#allocation3 + $0x4] sm:$0xf] %vm719, %v2550
      %v2739 = vld [vmem:[#allocation3 + $0x8] sm:$0x1]
      %v2740 = vsel %vm460, %v2551, %v2739
      %2741 = vst [vmem:[#allocation3 + $0x8] sm:$0x1] %v2740
      %v2742 = vld [vmem:[#allocation3 + $0xc] sm:$0xf]
      %v2743 = vsel %vm715, %v2558, %v2742
      %2744 = vst [vmem:[#allocation3 + $0xc] sm:$0xf] %v2743
      %2745 = vst.msk [vmem:[#allocation3 + $0x10] sm:$0xf] %vm719, %v2567
      %v2746 = vld [vmem:[#allocation3 + $0x14] sm:$0x1]
      %v2747 = vsel %vm460, %v2568, %v2746
      %2748 = vst [vmem:[#allocation3 + $0x14] sm:$0x1] %v2747
      %v2749 = vld [vmem:[#allocation3 + $0x18] sm:$0xf]
      %v2750 = vsel %vm715, %v2575, %v2749
      %2751 = vst [vmem:[#allocation3 + $0x18] sm:$0xf] %v2750
      %2752 = vst.msk [vmem:[#allocation3 + $0x1c] sm:$0xf] %vm719, %v2584
      %v2753 = vld [vmem:[#allocation3 + $0x20] sm:$0x1]
      %v2754 = vsel %vm460, %v2585, %v2753
      %2755 = vst [vmem:[#allocation3 + $0x20] sm:$0x1] %v2754
      %v2756 = vld [vmem:[#allocation3 + $0x24] sm:$0xf]
      %v2757 = vsel %vm715, %v2592, %v2756
      %2758 = vst [vmem:[#allocation3 + $0x24] sm:$0xf] %v2757
      %2759 = vst.msk [vmem:[#allocation3 + $0x28] sm:$0xf] %vm719, %v2601
      %v2760 = vld [vmem:[#allocation3 + $0x2c] sm:$0x1]
      %v2761 = vsel %vm460, %v2602, %v2760
      %2762 = vst [vmem:[#allocation3 + $0x2c] sm:$0x1] %v2761
      %v2763 = vld [vmem:[#allocation3 + $0x30] sm:$0xf]
      %v2764 = vsel %vm715, %v2609, %v2763
      %2765 = vst [vmem:[#allocation3 + $0x30] sm:$0xf] %v2764
      %2766 = vst.msk [vmem:[#allocation3 + $0x34] sm:$0xf] %vm719, %v2618
      %v2767 = vld [vmem:[#allocation3 + $0x38] sm:$0x1]
      %v2768 = vsel %vm460, %v2619, %v2767
      %2769 = vst [vmem:[#allocation3 + $0x38] sm:$0x1] %v2768
      %v2770 = vld [vmem:[#allocation3 + $0x3c] sm:$0xf]
      %v2771 = vsel %vm715, %v2626, %v2770
      %2772 = vst [vmem:[#allocation3 + $0x3c] sm:$0xf] %v2771
      %2773 = vst.msk [vmem:[#allocation3 + $0x40] sm:$0xf] %vm719, %v2635
      %v2774 = vld [vmem:[#allocation3 + $0x44] sm:$0x1]
      %v2775 = vsel %vm460, %v2636, %v2774
      %2776 = vst [vmem:[#allocation3 + $0x44] sm:$0x1] %v2775
      %v2777 = vld [vmem:[#allocation3 + $0x48] sm:$0xf]
      %v2778 = vsel %vm715, %v2643, %v2777
      %2779 = vst [vmem:[#allocation3 + $0x48] sm:$0xf] %v2778
      %2780 = vst.msk [vmem:[#allocation3 + $0x4c] sm:$0xf] %vm719, %v2652
      %v2781 = vld [vmem:[#allocation3 + $0x50] sm:$0x1]
      %v2782 = vsel %vm460, %v2653, %v2781
      %2783 = vst [vmem:[#allocation3 + $0x50] sm:$0x1] %v2782
      %v2784 = vld [vmem:[#allocation3 + $0x54] sm:$0xf]
      %v2785 = vsel %vm715, %v2660, %v2784
      %2786 = vst [vmem:[#allocation3 + $0x54] sm:$0xf] %v2785
      %2787 = vst.msk [vmem:[#allocation3 + $0x58] sm:$0xf] %vm719, %v2669
      %v2788 = vld [vmem:[#allocation3 + $0x5c] sm:$0x1]
      %v2789 = vsel %vm460, %v2670, %v2788
      %2790 = vst [vmem:[#allocation3 + $0x5c] sm:$0x1] %v2789
      %v2791 = vld [vmem:[#allocation3 + $0x60] sm:$0xf]
      %v2792 = vsel %vm715, %v2677, %v2791
      %2793 = vst [vmem:[#allocation3 + $0x60] sm:$0xf] %v2792
      %2794 = vst.msk [vmem:[#allocation3 + $0x64] sm:$0xf] %vm719, %v2686
      %v2795 = vld [vmem:[#allocation3 + $0x68] sm:$0x1]
      %v2796 = vsel %vm460, %v2687, %v2795
      %2797 = vst [vmem:[#allocation3 + $0x68] sm:$0x1] %v2796
      %v2798 = vld [vmem:[#allocation3 + $0x6c] sm:$0xf]
      %v2799 = vsel %vm715, %v2694, %v2798
      %2800 = vst [vmem:[#allocation3 + $0x6c] sm:$0xf] %v2799
      %2801 = vst.msk [vmem:[#allocation3 + $0x70] sm:$0xf] %vm719, %v2703
      %v2802 = vld [vmem:[#allocation3 + $0x74] sm:$0x1]
      %v2803 = vsel %vm460, %v2704, %v2802
      %2804 = vst [vmem:[#allocation3 + $0x74] sm:$0x1] %v2803
      %v2805 = vld [vmem:[#allocation3] sm:$0x1]
      %v2806 = vsel %vm460, 0, %v2805
      %2807 = vst [vmem:[#allocation3] sm:$0x1] %v2806
      %v2808 = vld [vmem:[#allocation3 + $0xc] sm:$0x1]
      %v2809 = vsel %vm460, 0, %v2808
      %2810 = vst [vmem:[#allocation3 + $0xc] sm:$0x1] %v2809
      %v2811 = vld [vmem:[#allocation3 + $0x18] sm:$0x1]
      %v2812 = vsel %vm460, 0, %v2811
      %2813 = vst [vmem:[#allocation3 + $0x18] sm:$0x1] %v2812
      %v2814 = vld [vmem:[#allocation3 + $0x24] sm:$0x1]
      %v2815 = vsel %vm460, 0, %v2814
      %2816 = vst [vmem:[#allocation3 + $0x24] sm:$0x1] %v2815
      %v2817 = vld [vmem:[#allocation3 + $0x30] sm:$0x1]
      %v2818 = vsel %vm460, 0, %v2817
      %2819 = vst [vmem:[#allocation3 + $0x30] sm:$0x1] %v2818
      %v2820 = vld [vmem:[#allocation3 + $0x3c] sm:$0x1]
      %v2821 = vsel %vm460, 0, %v2820
      %2822 = vst [vmem:[#allocation3 + $0x3c] sm:$0x1] %v2821
      %v2823 = vld [vmem:[#allocation3 + $0x48] sm:$0x1]
      %v2824 = vsel %vm460, 0, %v2823
      %2825 = vst [vmem:[#allocation3 + $0x48] sm:$0x1] %v2824
      %v2826 = vld [vmem:[#allocation3 + $0x54] sm:$0x1]
      %v2827 = vsel %vm460, 0, %v2826
      %2828 = vst [vmem:[#allocation3 + $0x54] sm:$0x1] %v2827
      %v2829 = vld [vmem:[#allocation3 + $0x60] sm:$0x1]
      %v2830 = vsel %vm460, 0, %v2829
      %2831 = vst [vmem:[#allocation3 + $0x60] sm:$0x1] %v2830
      %v2832 = vld [vmem:[#allocation3 + $0x6c] sm:$0x1]
      %v2833 = vsel %vm460, 0, %v2832
      %2834 = vst [vmem:[#allocation3 + $0x6c] sm:$0x1] %v2833
      %v2835 = vld [vmem:[#allocation3 + $0x8] sm:$0x1]
      %v2836 = vsel %vm498, 0, %v2835
      %2837 = vst [vmem:[#allocation3 + $0x8] sm:$0x1] %v2836
      %v2838 = vld [vmem:[#allocation3 + $0x14] sm:$0x1]
      %v2839 = vsel %vm498, 0, %v2838
      %2840 = vst [vmem:[#allocation3 + $0x14] sm:$0x1] %v2839
      %v2841 = vld [vmem:[#allocation3 + $0x20] sm:$0x1]
      %v2842 = vsel %vm498, 0, %v2841
      %2843 = vst [vmem:[#allocation3 + $0x20] sm:$0x1] %v2842
      %v2844 = vld [vmem:[#allocation3 + $0x2c] sm:$0x1]
      %v2845 = vsel %vm498, 0, %v2844
      %2846 = vst [vmem:[#allocation3 + $0x2c] sm:$0x1] %v2845
      %v2847 = vld [vmem:[#allocation3 + $0x38] sm:$0x1]
      %v2848 = vsel %vm498, 0, %v2847
      %2849 = vst [vmem:[#allocation3 + $0x38] sm:$0x1] %v2848
      %v2850 = vld [vmem:[#allocation3 + $0x44] sm:$0x1]
      %v2851 = vsel %vm498, 0, %v2850
      %2852 = vst [vmem:[#allocation3 + $0x44] sm:$0x1] %v2851
      %v2853 = vld [vmem:[#allocation3 + $0x50] sm:$0x1]
      %v2854 = vsel %vm498, 0, %v2853
      %2855 = vst [vmem:[#allocation3 + $0x50] sm:$0x1] %v2854
      %v2856 = vld [vmem:[#allocation3 + $0x5c] sm:$0x1]
      %v2857 = vsel %vm498, 0, %v2856
      %2858 = vst [vmem:[#allocation3 + $0x5c] sm:$0x1] %v2857
      %v2859 = vld [vmem:[#allocation3 + $0x68] sm:$0x1]
      %v2860 = vsel %vm498, 0, %v2859
      %2861 = vst [vmem:[#allocation3 + $0x68] sm:$0x1] %v2860
      %v2862 = vld [vmem:[#allocation3 + $0x74] sm:$0x1]
      %v2863 = vsel %vm498, 0, %v2862
      %2864 = vst [vmem:[#allocation3 + $0x74] sm:$0x1] %v2863
      // Predicated region
      $region65: #{basic_block_forward.1} parent=47 // pred_check
        %p2865 = pneg %p773
      $region66: #{basic_block_forward.1} parent=47 // pred_check_branch
        %2867 = sbr.rel (%p2865) target = $region68
      $region67: #{basic_block_forward.1} parent=47 // pred_region
        %v2868 = vld [vmem:[#allocation3] sm:$0xf]
        %v2869 = vsel %vm715, 0, %v2868
        %2870 = vst [vmem:[#allocation3] sm:$0xf] %v2869
        %2871 = vst.msk [vmem:[#allocation3 + $0x4] sm:$0xf] %vm719, 0
        %v2872 = vld [vmem:[#allocation3 + $0x8] sm:$0x1]
        %v2873 = vsel %vm460, 0, %v2872
        %2874 = vst [vmem:[#allocation3 + $0x8] sm:$0x1] %v2873
      $region68: #{basic_block_forward.1} parent=47 // pred_fallthru
        _
      // Predicated region
      $region69: #{basic_block_forward.1} parent=47 // pred_check
        %p2875 = pneg %p853
      $region70: #{basic_block_forward.1} parent=47 // pred_check_branch
        %2877 = sbr.rel (%p2875) target = $region72
      $region71: #{basic_block_forward.1} parent=47 // pred_region
        %s2878 = scalar_lea.vmem [#allocation3], 108
        %v2879 = vld [vmem:[%s2878] sm:$0xf]
        %v2880 = vsel %vm715, 0, %v2879
        %2881 = vst [vmem:[%s2878] sm:$0xf] %v2880
        %2882 = vst.msk [vmem:[%s2878 + $0x4] sm:$0xf] %vm719, 0
        %v2883 = vld [vmem:[%s2878 + $0x8] sm:$0x1]
        %v2884 = vsel %vm460, 0, %v2883
        %2885 = vst [vmem:[%s2878 + $0x8] sm:$0x1] %v2884
      $region72: #{basic_block_forward.1} parent=47 // pred_fallthru
        _
      %v2886 = vld [vmem:[#allocation3] sm:$0xf]
      %v2887 = vld [vmem:[#allocation3 + $0x4] sm:$0xf]
      %v2888 = vld [vmem:[#allocation3 + $0x8] sm:$0x1]
      %v2889 = vld [vmem:[#allocation3 + $0xc] sm:$0xf]
      %v2890 = vld [vmem:[#allocation3 + $0x10] sm:$0xf]
      %v2891 = vld [vmem:[#allocation3 + $0x14] sm:$0x1]
      %v2892 = vld [vmem:[#allocation3 + $0x18] sm:$0xf]
      %v2893 = vld [vmem:[#allocation3 + $0x1c] sm:$0xf]
      %v2894 = vld [vmem:[#allocation3 + $0x20] sm:$0x1]
      %v2895 = vld [vmem:[#allocation3 + $0x24] sm:$0xf]
      %v2896 = vld [vmem:[#allocation3 + $0x28] sm:$0xf]
      %v2897 = vld [vmem:[#allocation3 + $0x2c] sm:$0x1]
      %v2898 = vld [vmem:[#allocation3 + $0x30] sm:$0xf]
      %v2899 = vld [vmem:[#allocation3 + $0x34] sm:$0xf]
      %v2900 = vld [vmem:[#allocation3 + $0x38] sm:$0x1]
      %v2901 = vld [vmem:[#allocation3 + $0x3c] sm:$0xf]
      %v2902 = vld [vmem:[#allocation3 + $0x40] sm:$0xf]
      %v2903 = vld [vmem:[#allocation3 + $0x44] sm:$0x1]
      %v2904 = vld [vmem:[#allocation3 + $0x48] sm:$0xf]
      %v2905 = vld [vmem:[#allocation3 + $0x4c] sm:$0xf]
      %v2906 = vld [vmem:[#allocation3 + $0x50] sm:$0x1]
      %v2907 = vld [vmem:[#allocation3 + $0x54] sm:$0xf]
      %v2908 = vld [vmem:[#allocation3 + $0x58] sm:$0xf]
      %v2909 = vld [vmem:[#allocation3 + $0x5c] sm:$0x1]
      %v2926 = vunpack.c.l.b16 %v2886
      %v2927 = vunpack.c.l.b16 %v2887
      %v2928 = vunpack.c.l.b16 %v2889
      %v2929 = vunpack.c.l.b16 %v2890
      %v2930 = vunpack.c.l.b16 %v2892
      %v2931 = vunpack.c.l.b16 %v2893
      %v2932 = vunpack.c.l.b16 %v2895
      %v2933 = vunpack.c.l.b16 %v2896
      %v2934 = vunpack.c.l.b16 %v2898
      %v2935 = vunpack.c.l.b16 %v2899
      %v2936 = vunpack.c.l.b16 %v2901
      %v2937 = vunpack.c.l.b16 %v2902
      %v2938 = vunpack.c.l.b16 %v2904
      %v2939 = vunpack.c.l.b16 %v2905
      %v2940 = vunpack.c.l.b16 %v2907
      %v2941 = vunpack.c.l.b16 %v2908
      %v2942 = vpack.c.b16 %v2927, %v2926
      %v2943 = vpack.c.b16 %v2929, %v2928
      %v2944 = vpack.c.b16 %v2931, %v2930
      %v2945 = vpack.c.b16 %v2933, %v2932
      %v2946 = vpack.c.b16 %v2935, %v2934
      %v2947 = vpack.c.b16 %v2937, %v2936
      %v2948 = vpack.c.b16 %v2939, %v2938
      %v2949 = vpack.c.b16 %v2941, %v2940
      %v2958 = vunpack.c.l.b16 %v2888
      %v2959 = vunpack.c.l.b16 %v2891
      %v2960 = vunpack.c.l.b16 %v2894
      %v2961 = vunpack.c.l.b16 %v2897
      %v2962 = vunpack.c.l.b16 %v2900
      %v2963 = vunpack.c.l.b16 %v2903
      %v2964 = vunpack.c.l.b16 %v2906
      %v2965 = vunpack.c.l.b16 %v2909
      %v2966 = vpack.c.b16 %v2958, %v2958
      %v2967 = vpack.c.b16 %v2959, %v2959
      %v2968 = vpack.c.b16 %v2960, %v2960
      %v2969 = vpack.c.b16 %v2961, %v2961
      %v2970 = vpack.c.b16 %v2962, %v2962
      %v2971 = vpack.c.b16 %v2963, %v2963
      %v2972 = vpack.c.b16 %v2964, %v2964
      %v2973 = vpack.c.b16 %v2965, %v2965
      %v2975 = vshrl.u32 %v2942, 16
      %v2977 = vshll.u32 %v2942, 16
      %v2979 = vrot.slane %v2977, 1
      %v2980 = vor.u32 %v2975, %v2979
      %v2982 = vshll.u32 %v2966, 16
      %v2984 = vrot.slane %v2982, 1
      %v2985 = vsel %vm1045, %v2980, %v2984
      %v2987 = vshrl.u32 %v2943, 16
      %v2989 = vshll.u32 %v2943, 16
      %v2991 = vrot.slane %v2989, 1
      %v2992 = vor.u32 %v2987, %v2991
      %v2994 = vshll.u32 %v2967, 16
      %v2996 = vrot.slane %v2994, 1
      %v2997 = vsel %vm1045, %v2992, %v2996
      %v2999 = vshrl.u32 %v2944, 16
      %v3001 = vshll.u32 %v2944, 16
      %v3003 = vrot.slane %v3001, 1
      %v3004 = vor.u32 %v2999, %v3003
      %v3006 = vshll.u32 %v2968, 16
      %v3008 = vrot.slane %v3006, 1
      %v3009 = vsel %vm1045, %v3004, %v3008
      %v3011 = vshrl.u32 %v2945, 16
      %v3013 = vshll.u32 %v2945, 16
      %v3015 = vrot.slane %v3013, 1
      %v3016 = vor.u32 %v3011, %v3015
      %v3018 = vshll.u32 %v2969, 16
      %v3020 = vrot.slane %v3018, 1
      %v3021 = vsel %vm1045, %v3016, %v3020
      %v3023 = vshrl.u32 %v2946, 16
      %v3025 = vshll.u32 %v2946, 16
      %v3027 = vrot.slane %v3025, 1
      %v3028 = vor.u32 %v3023, %v3027
      %v3030 = vshll.u32 %v2970, 16
      %v3032 = vrot.slane %v3030, 1
      %v3033 = vsel %vm1045, %v3028, %v3032
      %v3035 = vshrl.u32 %v2947, 16
      %v3037 = vshll.u32 %v2947, 16
      %v3039 = vrot.slane %v3037, 1
      %v3040 = vor.u32 %v3035, %v3039
      %v3042 = vshll.u32 %v2971, 16
      %v3044 = vrot.slane %v3042, 1
      %v3045 = vsel %vm1045, %v3040, %v3044
      %v3047 = vshrl.u32 %v2948, 16
      %v3049 = vshll.u32 %v2948, 16
      %v3051 = vrot.slane %v3049, 1
      %v3052 = vor.u32 %v3047, %v3051
      %v3054 = vshll.u32 %v2972, 16
      %v3056 = vrot.slane %v3054, 1
      %v3057 = vsel %vm1045, %v3052, %v3056
      %v3059 = vshrl.u32 %v2949, 16
      %v3061 = vshll.u32 %v2949, 16
      %v3063 = vrot.slane %v3061, 1
      %v3064 = vor.u32 %v3059, %v3063
      %v3066 = vshll.u32 %v2973, 16
      %v3068 = vrot.slane %v3066, 1
      %v3069 = vsel %vm1045, %v3064, %v3068
      %3070 = vrot.lane.b32.xlu0 %v2985, 8
      %v3071 = vpop.permute.xlu0 %3070
      %3072 = vrot.lane.b32.xlu0 %v2997, 8
      %v3073 = vpop.permute.xlu0 %3072
      %3074 = vrot.lane.b32.xlu0 %v3009, 8
      %v3075 = vpop.permute.xlu0 %3074
      %3076 = vrot.lane.b32.xlu0 %v3021, 8
      %v3077 = vpop.permute.xlu0 %3076
      %3078 = vrot.lane.b32.xlu0 %v3033, 8
      %v3079 = vpop.permute.xlu0 %3078
      %3080 = vrot.lane.b32.xlu0 %v3045, 8
      %v3081 = vpop.permute.xlu0 %3080
      %3082 = vrot.lane.b32.xlu0 %v3057, 8
      %v3083 = vpop.permute.xlu0 %3082
      %3084 = vrot.lane.b32.xlu0 %v3069, 8
      %v3085 = vpop.permute.xlu0 %3084
      %v3086 = vrot.slane %v2942, 1
      %v3087 = vrot.slane %v2966, 1
      %v3088 = vsel %vm1186, %v3086, %v3087
      %v3089 = vrot.slane %v2943, 1
      %v3090 = vrot.slane %v2967, 1
      %v3091 = vsel %vm1186, %v3089, %v3090
      %v3092 = vrot.slane %v2944, 1
      %v3093 = vrot.slane %v2968, 1
      %v3094 = vsel %vm1186, %v3092, %v3093
      %v3095 = vrot.slane %v2945, 1
      %v3096 = vrot.slane %v2969, 1
      %v3097 = vsel %vm1186, %v3095, %v3096
      %v3098 = vrot.slane %v2946, 1
      %v3099 = vrot.slane %v2970, 1
      %v3100 = vsel %vm1186, %v3098, %v3099
      %v3101 = vrot.slane %v2947, 1
      %v3102 = vrot.slane %v2971, 1
      %v3103 = vsel %vm1186, %v3101, %v3102
      %v3104 = vrot.slane %v2948, 1
      %v3105 = vrot.slane %v2972, 1
      %v3106 = vsel %vm1186, %v3104, %v3105
      %v3107 = vrot.slane %v2949, 1
      %v3108 = vrot.slane %v2973, 1
      %v3109 = vsel %vm1186, %v3107, %v3108
      %3110 = vrot.lane.b32.xlu0 %v3088, 16
      %v3111 = vpop.permute.xlu0 %3110
      %3112 = vrot.lane.b32.xlu0 %v3091, 16
      %v3113 = vpop.permute.xlu0 %3112
      %3114 = vrot.lane.b32.xlu0 %v3094, 16
      %v3115 = vpop.permute.xlu0 %3114
      %3116 = vrot.lane.b32.xlu0 %v3097, 16
      %v3117 = vpop.permute.xlu0 %3116
      %3118 = vrot.lane.b32.xlu0 %v3100, 16
      %v3119 = vpop.permute.xlu0 %3118
      %3120 = vrot.lane.b32.xlu0 %v3103, 16
      %v3121 = vpop.permute.xlu0 %3120
      %3122 = vrot.lane.b32.xlu0 %v3106, 16
      %v3123 = vpop.permute.xlu0 %3122
      %3124 = vrot.lane.b32.xlu0 %v3109, 16
      %v3125 = vpop.permute.xlu0 %3124
      %v3127 = vsel %vm1237, %v2942, %v3071
      %v3129 = vsel %vm1237, %v2943, %v3073
      %v3131 = vsel %vm1237, %v2944, %v3075
      %v3133 = vsel %vm1237, %v2945, %v3077
      %v3135 = vsel %vm1237, %v2946, %v3079
      %v3137 = vsel %vm1237, %v2947, %v3081
      %v3139 = vsel %vm1237, %v2948, %v3083
      %v3141 = vsel %vm1237, %v2949, %v3085
      %v3143 = vsel %vm1258, %v3127, %v3111
      %v3145 = vsel %vm1258, %v3129, %v3113
      %v3147 = vsel %vm1258, %v3131, %v3115
      %v3149 = vsel %vm1258, %v3133, %v3117
      %v3151 = vsel %vm1258, %v3135, %v3119
      %v3153 = vsel %vm1258, %v3137, %v3121
      %v3155 = vsel %vm1258, %v3139, %v3123
      %v3157 = vsel %vm1258, %v3141, %v3125
      %v3158 = vld [vmem:[%s5] sm:$0xf]
      %v3159 = vld [vmem:[%s5 + $0x4] sm:$0xf]
      %v3160 = vld [vmem:[%s5 + $0x8] sm:$0xf]
      %s3161 = scalar_lea.vmem [#allocation3], 12
      %v3162 = vld [vmem:[%s3161] sm:$0xf]
      %v3163 = vld [vmem:[%s3161 + $0x4] sm:$0xf]
      %v3164 = vld [vmem:[%s3161 + $0x8] sm:$0x1]
      %v3165 = vld [vmem:[%s3161 + $0xc] sm:$0xf]
      %v3166 = vld [vmem:[%s3161 + $0x10] sm:$0xf]
      %v3167 = vld [vmem:[%s3161 + $0x14] sm:$0x1]
      %v3168 = vld [vmem:[%s3161 + $0x18] sm:$0xf]
      %v3169 = vld [vmem:[%s3161 + $0x1c] sm:$0xf]
      %v3170 = vld [vmem:[%s3161 + $0x20] sm:$0x1]
      %v3171 = vld [vmem:[%s3161 + $0x24] sm:$0xf]
      %v3172 = vld [vmem:[%s3161 + $0x28] sm:$0xf]
      %v3173 = vld [vmem:[%s3161 + $0x2c] sm:$0x1]
      %v3174 = vld [vmem:[%s3161 + $0x30] sm:$0xf]
      %v3175 = vld [vmem:[%s3161 + $0x34] sm:$0xf]
      %v3176 = vld [vmem:[%s3161 + $0x38] sm:$0x1]
      %v3177 = vld [vmem:[%s3161 + $0x3c] sm:$0xf]
      %v3178 = vld [vmem:[%s3161 + $0x40] sm:$0xf]
      %v3179 = vld [vmem:[%s3161 + $0x44] sm:$0x1]
      %v3180 = vld [vmem:[%s3161 + $0x48] sm:$0xf]
      %v3181 = vld [vmem:[%s3161 + $0x4c] sm:$0xf]
      %v3182 = vld [vmem:[%s3161 + $0x50] sm:$0x1]
      %v3183 = vld [vmem:[%s3161 + $0x54] sm:$0xf]
      %v3184 = vld [vmem:[%s3161 + $0x58] sm:$0xf]
      %v3185 = vld [vmem:[%s3161 + $0x5c] sm:$0x1]
      %v3202 = vunpack.c.l.b16 %v3162
      %v3203 = vunpack.c.l.b16 %v3163
      %v3204 = vunpack.c.l.b16 %v3165
      %v3205 = vunpack.c.l.b16 %v3166
      %v3206 = vunpack.c.l.b16 %v3168
      %v3207 = vunpack.c.l.b16 %v3169
      %v3208 = vunpack.c.l.b16 %v3171
      %v3209 = vunpack.c.l.b16 %v3172
      %v3210 = vunpack.c.l.b16 %v3174
      %v3211 = vunpack.c.l.b16 %v3175
      %v3212 = vunpack.c.l.b16 %v3177
      %v3213 = vunpack.c.l.b16 %v3178
      %v3214 = vunpack.c.l.b16 %v3180
      %v3215 = vunpack.c.l.b16 %v3181
      %v3216 = vunpack.c.l.b16 %v3183
      %v3217 = vunpack.c.l.b16 %v3184
      %v3218 = vpack.c.b16 %v3203, %v3202
      %v3219 = vpack.c.b16 %v3205, %v3204
      %v3220 = vpack.c.b16 %v3207, %v3206
      %v3221 = vpack.c.b16 %v3209, %v3208
      %v3222 = vpack.c.b16 %v3211, %v3210
      %v3223 = vpack.c.b16 %v3213, %v3212
      %v3224 = vpack.c.b16 %v3215, %v3214
      %v3225 = vpack.c.b16 %v3217, %v3216
      %v3234 = vunpack.c.l.b16 %v3164
      %v3235 = vunpack.c.l.b16 %v3167
      %v3236 = vunpack.c.l.b16 %v3170
      %v3237 = vunpack.c.l.b16 %v3173
      %v3238 = vunpack.c.l.b16 %v3176
      %v3239 = vunpack.c.l.b16 %v3179
      %v3240 = vunpack.c.l.b16 %v3182
      %v3241 = vunpack.c.l.b16 %v3185
      %v3242 = vpack.c.b16 %v3234, %v3234
      %v3243 = vpack.c.b16 %v3235, %v3235
      %v3244 = vpack.c.b16 %v3236, %v3236
      %v3245 = vpack.c.b16 %v3237, %v3237
      %v3246 = vpack.c.b16 %v3238, %v3238
      %v3247 = vpack.c.b16 %v3239, %v3239
      %v3248 = vpack.c.b16 %v3240, %v3240
      %v3249 = vpack.c.b16 %v3241, %v3241
      %v3251 = vshrl.u32 %v3218, 16
      %v3253 = vshll.u32 %v3218, 16
      %v3255 = vrot.slane %v3253, 1
      %v3256 = vor.u32 %v3251, %v3255
      %v3258 = vshll.u32 %v3242, 16
      %v3260 = vrot.slane %v3258, 1
      %v3261 = vsel %vm1045, %v3256, %v3260
      %v3263 = vshrl.u32 %v3219, 16
      %v3265 = vshll.u32 %v3219, 16
      %v3267 = vrot.slane %v3265, 1
      %v3268 = vor.u32 %v3263, %v3267
      %v3270 = vshll.u32 %v3243, 16
      %v3272 = vrot.slane %v3270, 1
      %v3273 = vsel %vm1045, %v3268, %v3272
      %v3275 = vshrl.u32 %v3220, 16
      %v3277 = vshll.u32 %v3220, 16
      %v3279 = vrot.slane %v3277, 1
      %v3280 = vor.u32 %v3275, %v3279
      %v3282 = vshll.u32 %v3244, 16
      %v3284 = vrot.slane %v3282, 1
      %v3285 = vsel %vm1045, %v3280, %v3284
      %v3287 = vshrl.u32 %v3221, 16
      %v3289 = vshll.u32 %v3221, 16
      %v3291 = vrot.slane %v3289, 1
      %v3292 = vor.u32 %v3287, %v3291
      %v3294 = vshll.u32 %v3245, 16
      %v3296 = vrot.slane %v3294, 1
      %v3297 = vsel %vm1045, %v3292, %v3296
      %v3299 = vshrl.u32 %v3222, 16
      %v3301 = vshll.u32 %v3222, 16
      %v3303 = vrot.slane %v3301, 1
      %v3304 = vor.u32 %v3299, %v3303
      %v3306 = vshll.u32 %v3246, 16
      %v3308 = vrot.slane %v3306, 1
      %v3309 = vsel %vm1045, %v3304, %v3308
      %v3311 = vshrl.u32 %v3223, 16
      %v3313 = vshll.u32 %v3223, 16
      %v3315 = vrot.slane %v3313, 1
      %v3316 = vor.u32 %v3311, %v3315
      %v3318 = vshll.u32 %v3247, 16
      %v3320 = vrot.slane %v3318, 1
      %v3321 = vsel %vm1045, %v3316, %v3320
      %v3323 = vshrl.u32 %v3224, 16
      %v3325 = vshll.u32 %v3224, 16
      %v3327 = vrot.slane %v3325, 1
      %v3328 = vor.u32 %v3323, %v3327
      %v3330 = vshll.u32 %v3248, 16
      %v3332 = vrot.slane %v3330, 1
      %v3333 = vsel %vm1045, %v3328, %v3332
      %v3335 = vshrl.u32 %v3225, 16
      %v3337 = vshll.u32 %v3225, 16
      %v3339 = vrot.slane %v3337, 1
      %v3340 = vor.u32 %v3335, %v3339
      %v3342 = vshll.u32 %v3249, 16
      %v3344 = vrot.slane %v3342, 1
      %v3345 = vsel %vm1045, %v3340, %v3344
      %3346 = vrot.lane.b32.xlu0 %v3261, 8
      %v3347 = vpop.permute.xlu0 %3346
      %3348 = vrot.lane.b32.xlu0 %v3273, 8
      %v3349 = vpop.permute.xlu0 %3348
      %3350 = vrot.lane.b32.xlu0 %v3285, 8
      %v3351 = vpop.permute.xlu0 %3350
      %3352 = vrot.lane.b32.xlu0 %v3297, 8
      %v3353 = vpop.permute.xlu0 %3352
      %3354 = vrot.lane.b32.xlu0 %v3309, 8
      %v3355 = vpop.permute.xlu0 %3354
      %3356 = vrot.lane.b32.xlu0 %v3321, 8
      %v3357 = vpop.permute.xlu0 %3356
      %3358 = vrot.lane.b32.xlu0 %v3333, 8
      %v3359 = vpop.permute.xlu0 %3358
      %3360 = vrot.lane.b32.xlu0 %v3345, 8
      %v3361 = vpop.permute.xlu0 %3360
      %v3362 = vrot.slane %v3218, 1
      %v3363 = vrot.slane %v3242, 1
      %v3364 = vsel %vm1186, %v3362, %v3363
      %v3365 = vrot.slane %v3219, 1
      %v3366 = vrot.slane %v3243, 1
      %v3367 = vsel %vm1186, %v3365, %v3366
      %v3368 = vrot.slane %v3220, 1
      %v3369 = vrot.slane %v3244, 1
      %v3370 = vsel %vm1186, %v3368, %v3369
      %v3371 = vrot.slane %v3221, 1
      %v3372 = vrot.slane %v3245, 1
      %v3373 = vsel %vm1186, %v3371, %v3372
      %v3374 = vrot.slane %v3222, 1
      %v3375 = vrot.slane %v3246, 1
      %v3376 = vsel %vm1186, %v3374, %v3375
      %v3377 = vrot.slane %v3223, 1
      %v3378 = vrot.slane %v3247, 1
      %v3379 = vsel %vm1186, %v3377, %v3378
      %v3380 = vrot.slane %v3224, 1
      %v3381 = vrot.slane %v3248, 1
      %v3382 = vsel %vm1186, %v3380, %v3381
      %v3383 = vrot.slane %v3225, 1
      %v3384 = vrot.slane %v3249, 1
      %v3385 = vsel %vm1186, %v3383, %v3384
      %3386 = vrot.lane.b32.xlu0 %v3364, 16
      %v3387 = vpop.permute.xlu0 %3386
      %3388 = vrot.lane.b32.xlu0 %v3367, 16
      %v3389 = vpop.permute.xlu0 %3388
      %3390 = vrot.lane.b32.xlu0 %v3370, 16
      %v3391 = vpop.permute.xlu0 %3390
      %3392 = vrot.lane.b32.xlu0 %v3373, 16
      %v3393 = vpop.permute.xlu0 %3392
      %3394 = vrot.lane.b32.xlu0 %v3376, 16
      %v3395 = vpop.permute.xlu0 %3394
      %3396 = vrot.lane.b32.xlu0 %v3379, 16
      %v3397 = vpop.permute.xlu0 %3396
      %3398 = vrot.lane.b32.xlu0 %v3382, 16
      %v3399 = vpop.permute.xlu0 %3398
      %3400 = vrot.lane.b32.xlu0 %v3385, 16
      %v3401 = vpop.permute.xlu0 %3400
      %v3403 = vsel %vm1237, %v3218, %v3347
      %v3405 = vsel %vm1237, %v3219, %v3349
      %v3407 = vsel %vm1237, %v3220, %v3351
      %v3409 = vsel %vm1237, %v3221, %v3353
      %v3411 = vsel %vm1237, %v3222, %v3355
      %v3413 = vsel %vm1237, %v3223, %v3357
      %v3415 = vsel %vm1237, %v3224, %v3359
      %v3417 = vsel %vm1237, %v3225, %v3361
      %v3419 = vsel %vm1258, %v3403, %v3387
      %v3421 = vsel %vm1258, %v3405, %v3389
      %v3423 = vsel %vm1258, %v3407, %v3391
      %v3425 = vsel %vm1258, %v3409, %v3393
      %v3427 = vsel %vm1258, %v3411, %v3395
      %v3429 = vsel %vm1258, %v3413, %v3397
      %v3431 = vsel %vm1258, %v3415, %v3399
      %v3433 = vsel %vm1258, %v3417, %v3401
      %s3434 = scalar_lea.vmem %s5, 12
      %v3435 = vld [vmem:[%s3434] sm:$0xf]
      %v3436 = vld [vmem:[%s3434 + $0x4] sm:$0xf]
      %v3437 = vld [vmem:[%s3434 + $0x8] sm:$0xf]
      %v3441 = vunpack.c.l.b16 %v3435
      %v3442 = vunpack.c.l.b16 %v3436
      %v3443 = vunpack.c.l.b16 %v3437
      %v3444 = vpack.c.b16 %v3442, %v3441
      %v3445 = vpack.c.b16 %v3443, %v3443
      %v3447 = vsel %vm1636, %v3419, 0
      %v3449 = vsel %vm1636, %v3421, 0
      %v3451 = vsel %vm1636, %v3423, 0
      %v3453 = vsel %vm1636, %v3425, 0
      %v3455 = vsel %vm1636, %v3427, 0
      %v3457 = vsel %vm1636, %v3429, 0
      %v3459 = vsel %vm1636, %v3431, 0
      %v3461 = vsel %vm1636, %v3433, 0
      %v3464 = vsel %vm1657, %v3445, 0
      %3466 = vmatprep.subr.bf16.mxu0 0
      %3467 = vmatpush1.bf16.msra.mxu0 0
      %3468 = vmatprep.subr.bf16.mxu0 0
      %3469 = vmatpush1.bf16.msra.mxu0 0
      %3470 = vmatprep.subr.bf16.mxu0 0
      %3471 = vmatpush1.bf16.msra.mxu0 0
      %3472 = vmatprep.subr.bf16.mxu0 0
      %3473 = vmatpush1.bf16.msra.mxu0 0
      %3474 = vmatprep.subr.bf16.mxu0 0
      %3475 = vmatpush1.bf16.msra.mxu0 0
      %3476 = vmatprep.subr.bf16.mxu0 0
      %3477 = vmatpush1.bf16.msra.mxu0 0
      %3478 = vmatprep.subr.bf16.mxu0 0
      %3479 = vmatpush1.bf16.msra.mxu0 %v3464
      %3480 = vmatprep.subr.bf16.mxu0 0
      %3481 = vmatpush1.bf16.msra.mxu0 %v3444
      %3482 = vmatprep.subr.bf16.mxu0 0
      %3483 = vmatpush2.bf16.msra.mxu0 0
      %3484 = vmatprep.subr.bf16.mxu0 0
      %3485 = vmatpush2.bf16.msra.mxu0 0
      %3486 = vmatprep.subr.bf16.mxu0 0
      %3487 = vmatpush2.bf16.msra.mxu0 0
      %3488 = vmatprep.subr.bf16.mxu0 0
      %3489 = vmatpush2.bf16.msra.mxu0 0
      %3490 = vmatprep.subr.bf16.mxu0 0
      %3491 = vmatpush2.bf16.msra.mxu0 0
      %3492 = vmatprep.subr.bf16.mxu0 0
      %3493 = vmatpush2.bf16.msra.mxu0 0
      %3494 = vmatprep.subr.bf16.mxu0 0
      %3495 = vmatpush2.bf16.msra.mxu0 0
      %3496 = vmatprep.subr.bf16.mxu0 0
      %3497 = vmatpush2.bf16.msra.mxu0 0
      %3498 = vmatprep.mubr.bf16.mxu0 0
      %3499 = vmatmul.mubr.bf16.gmra.mxu0 %v3447
      %v3500 = vpop.f32.mrf.mxu0
      %v3501 = vadd.f32 0.0, %v3500
      %v3502 = vpop.f32.mrf.mxu0
      %v3503 = vpop.f32.mrf.mxu0
      %v3504 = vadd.f32 0.0, %v3503
      %v3505 = vpop.f32.mrf.mxu0
      %3506 = vmatprep.mubr.bf16.mxu0 0
      %3507 = vmatmul.mubr.bf16.gmra.mxu0 %v3449
      %v3508 = vpop.f32.mrf.mxu0
      %v3509 = vadd.f32 0.0, %v3508
      %v3510 = vpop.f32.mrf.mxu0
      %v3511 = vpop.f32.mrf.mxu0
      %v3512 = vadd.f32 0.0, %v3511
      %v3513 = vpop.f32.mrf.mxu0
      %3514 = vmatprep.mubr.bf16.mxu0 0
      %3515 = vmatmul.mubr.bf16.gmra.mxu0 %v3451
      %v3516 = vpop.f32.mrf.mxu0
      %v3517 = vadd.f32 0.0, %v3516
      %v3518 = vpop.f32.mrf.mxu0
      %v3519 = vpop.f32.mrf.mxu0
      %v3520 = vadd.f32 0.0, %v3519
      %v3521 = vpop.f32.mrf.mxu0
      %3522 = vmatprep.mubr.bf16.mxu0 0
      %3523 = vmatmul.mubr.bf16.gmra.mxu0 %v3453
      %v3524 = vpop.f32.mrf.mxu0
      %v3525 = vadd.f32 0.0, %v3524
      %v3526 = vpop.f32.mrf.mxu0
      %v3527 = vpop.f32.mrf.mxu0
      %v3528 = vadd.f32 0.0, %v3527
      %v3529 = vpop.f32.mrf.mxu0
      %3530 = vmatprep.mubr.bf16.mxu0 0
      %3531 = vmatmul.mubr.bf16.gmra.mxu0 %v3455
      %v3532 = vpop.f32.mrf.mxu0
      %v3533 = vadd.f32 0.0, %v3532
      %v3534 = vpop.f32.mrf.mxu0
      %v3535 = vpop.f32.mrf.mxu0
      %v3536 = vadd.f32 0.0, %v3535
      %v3537 = vpop.f32.mrf.mxu0
      %3538 = vmatprep.mubr.bf16.mxu0 0
      %3539 = vmatmul.mubr.bf16.gmra.mxu0 %v3457
      %v3540 = vpop.f32.mrf.mxu0
      %v3541 = vadd.f32 0.0, %v3540
      %v3542 = vpop.f32.mrf.mxu0
      %v3543 = vpop.f32.mrf.mxu0
      %v3544 = vadd.f32 0.0, %v3543
      %v3545 = vpop.f32.mrf.mxu0
      %3546 = vmatprep.mubr.bf16.mxu0 0
      %3547 = vmatmul.mubr.bf16.gmra.mxu0 %v3459
      %v3548 = vpop.f32.mrf.mxu0
      %v3549 = vadd.f32 0.0, %v3548
      %v3550 = vpop.f32.mrf.mxu0
      %v3551 = vpop.f32.mrf.mxu0
      %v3552 = vadd.f32 0.0, %v3551
      %v3553 = vpop.f32.mrf.mxu0
      %3554 = vmatprep.mubr.bf16.mxu0 0
      %3555 = vmatmul.mubr.bf16.gmra.mxu0 %v3461
      %v3556 = vpop.f32.mrf.mxu0
      %v3557 = vadd.f32 0.0, %v3556
      %v3558 = vpop.f32.mrf.mxu0
      %v3559 = vpop.f32.mrf.mxu0
      %v3560 = vadd.f32 0.0, %v3559
      %v3561 = vpop.f32.mrf.mxu0
      %3562 = vdwg.mxu0
      %v3566 = vunpack.c.l.b16 %v3158
      %v3567 = vunpack.c.l.b16 %v3159
      %v3568 = vunpack.c.l.b16 %v3160
      %v3569 = vpack.c.b16 %v3567, %v3566
      %v3570 = vpack.c.b16 %v3568, %v3568
      %v3572 = vsel %vm1636, %v3143, 0
      %v3574 = vsel %vm1636, %v3145, 0
      %v3576 = vsel %vm1636, %v3147, 0
      %v3578 = vsel %vm1636, %v3149, 0
      %v3580 = vsel %vm1636, %v3151, 0
      %v3582 = vsel %vm1636, %v3153, 0
      %v3584 = vsel %vm1636, %v3155, 0
      %v3586 = vsel %vm1636, %v3157, 0
      %v3589 = vsel %vm1657, %v3570, 0
      %3591 = vmatprep.subr.bf16.mxu0 0
      %3592 = vmatpush1.bf16.msra.mxu0 0
      %3593 = vmatprep.subr.bf16.mxu0 0
      %3594 = vmatpush1.bf16.msra.mxu0 0
      %3595 = vmatprep.subr.bf16.mxu0 0
      %3596 = vmatpush1.bf16.msra.mxu0 0
      %3597 = vmatprep.subr.bf16.mxu0 0
      %3598 = vmatpush1.bf16.msra.mxu0 0
      %3599 = vmatprep.subr.bf16.mxu0 0
      %3600 = vmatpush1.bf16.msra.mxu0 0
      %3601 = vmatprep.subr.bf16.mxu0 0
      %3602 = vmatpush1.bf16.msra.mxu0 0
      %3603 = vmatprep.subr.bf16.mxu0 0
      %3604 = vmatpush1.bf16.msra.mxu0 %v3589
      %3605 = vmatprep.subr.bf16.mxu0 0
      %3606 = vmatpush1.bf16.msra.mxu0 %v3569
      %3607 = vmatprep.subr.bf16.mxu0 0
      %3608 = vmatpush2.bf16.msra.mxu0 0
      %3609 = vmatprep.subr.bf16.mxu0 0
      %3610 = vmatpush2.bf16.msra.mxu0 0
      %3611 = vmatprep.subr.bf16.mxu0 0
      %3612 = vmatpush2.bf16.msra.mxu0 0
      %3613 = vmatprep.subr.bf16.mxu0 0
      %3614 = vmatpush2.bf16.msra.mxu0 0
      %3615 = vmatprep.subr.bf16.mxu0 0
      %3616 = vmatpush2.bf16.msra.mxu0 0
      %3617 = vmatprep.subr.bf16.mxu0 0
      %3618 = vmatpush2.bf16.msra.mxu0 0
      %3619 = vmatprep.subr.bf16.mxu0 0
      %3620 = vmatpush2.bf16.msra.mxu0 0
      %3621 = vmatprep.subr.bf16.mxu0 0
      %3622 = vmatpush2.bf16.msra.mxu0 0
      %3623 = vmatprep.mubr.bf16.mxu0 0
      %3624 = vmatmul.mubr.bf16.gmra.mxu0 %v3572
      %v3625 = vpop.f32.mrf.mxu0
      %v3626 = vadd.f32 %v3501, %v3625
      %v3627 = vpop.f32.mrf.mxu0
      %v3628 = vpop.f32.mrf.mxu0
      %v3629 = vadd.f32 %v3504, %v3628
      %v3630 = vpop.f32.mrf.mxu0
      %3631 = vmatprep.mubr.bf16.mxu0 0
      %3632 = vmatmul.mubr.bf16.gmra.mxu0 %v3574
      %v3633 = vpop.f32.mrf.mxu0
      %v3634 = vadd.f32 %v3509, %v3633
      %v3635 = vpop.f32.mrf.mxu0
      %v3636 = vpop.f32.mrf.mxu0
      %v3637 = vadd.f32 %v3512, %v3636
      %v3638 = vpop.f32.mrf.mxu0
      %3639 = vmatprep.mubr.bf16.mxu0 0
      %3640 = vmatmul.mubr.bf16.gmra.mxu0 %v3576
      %v3641 = vpop.f32.mrf.mxu0
      %v3642 = vadd.f32 %v3517, %v3641
      %v3643 = vpop.f32.mrf.mxu0
      %v3644 = vpop.f32.mrf.mxu0
      %v3645 = vadd.f32 %v3520, %v3644
      %v3646 = vpop.f32.mrf.mxu0
      %3647 = vmatprep.mubr.bf16.mxu0 0
      %3648 = vmatmul.mubr.bf16.gmra.mxu0 %v3578
      %v3649 = vpop.f32.mrf.mxu0
      %v3650 = vadd.f32 %v3525, %v3649
      %v3651 = vpop.f32.mrf.mxu0
      %v3652 = vpop.f32.mrf.mxu0
      %v3653 = vadd.f32 %v3528, %v3652
      %v3654 = vpop.f32.mrf.mxu0
      %3655 = vmatprep.mubr.bf16.mxu0 0
      %3656 = vmatmul.mubr.bf16.gmra.mxu0 %v3580
      %v3657 = vpop.f32.mrf.mxu0
      %v3658 = vadd.f32 %v3533, %v3657
      %v3659 = vpop.f32.mrf.mxu0
      %v3660 = vpop.f32.mrf.mxu0
      %v3661 = vadd.f32 %v3536, %v3660
      %v3662 = vpop.f32.mrf.mxu0
      %3663 = vmatprep.mubr.bf16.mxu0 0
      %3664 = vmatmul.mubr.bf16.gmra.mxu0 %v3582
      %v3665 = vpop.f32.mrf.mxu0
      %v3666 = vadd.f32 %v3541, %v3665
      %v3667 = vpop.f32.mrf.mxu0
      %v3668 = vpop.f32.mrf.mxu0
      %v3669 = vadd.f32 %v3544, %v3668
      %v3670 = vpop.f32.mrf.mxu0
      %3671 = vmatprep.mubr.bf16.mxu0 0
      %3672 = vmatmul.mubr.bf16.gmra.mxu0 %v3584
      %v3673 = vpop.f32.mrf.mxu0
      %v3674 = vadd.f32 %v3549, %v3673
      %v3675 = vpop.f32.mrf.mxu0
      %v3676 = vpop.f32.mrf.mxu0
      %v3677 = vadd.f32 %v3552, %v3676
      %v3678 = vpop.f32.mrf.mxu0
      %3679 = vmatprep.mubr.bf16.mxu0 0
      %3680 = vmatmul.mubr.bf16.gmra.mxu0 %v3586
      %v3681 = vpop.f32.mrf.mxu0
      %v3682 = vadd.f32 %v3557, %v3681
      %v3683 = vpop.f32.mrf.mxu0
      %v3684 = vpop.f32.mrf.mxu0
      %v3685 = vadd.f32 %v3560, %v3684
      %v3686 = vpop.f32.mrf.mxu0
      %3687 = vdwg.mxu0
      %s3688 = scalar_lea.vmem [#allocation3], 24
      %v3689 = vld [vmem:[%s3688] sm:$0xf]
      %v3690 = vld [vmem:[%s3688 + $0x4] sm:$0xf]
      %v3691 = vld [vmem:[%s3688 + $0x8] sm:$0x1]
      %v3692 = vld [vmem:[%s3688 + $0xc] sm:$0xf]
      %v3693 = vld [vmem:[%s3688 + $0x10] sm:$0xf]
      %v3694 = vld [vmem:[%s3688 + $0x14] sm:$0x1]
      %v3695 = vld [vmem:[%s3688 + $0x18] sm:$0xf]
      %v3696 = vld [vmem:[%s3688 + $0x1c] sm:$0xf]
      %v3697 = vld [vmem:[%s3688 + $0x20] sm:$0x1]
      %v3698 = vld [vmem:[%s3688 + $0x24] sm:$0xf]
      %v3699 = vld [vmem:[%s3688 + $0x28] sm:$0xf]
      %v3700 = vld [vmem:[%s3688 + $0x2c] sm:$0x1]
      %v3701 = vld [vmem:[%s3688 + $0x30] sm:$0xf]
      %v3702 = vld [vmem:[%s3688 + $0x34] sm:$0xf]
      %v3703 = vld [vmem:[%s3688 + $0x38] sm:$0x1]
      %v3704 = vld [vmem:[%s3688 + $0x3c] sm:$0xf]
      %v3705 = vld [vmem:[%s3688 + $0x40] sm:$0xf]
      %v3706 = vld [vmem:[%s3688 + $0x44] sm:$0x1]
      %v3707 = vld [vmem:[%s3688 + $0x48] sm:$0xf]
      %v3708 = vld [vmem:[%s3688 + $0x4c] sm:$0xf]
      %v3709 = vld [vmem:[%s3688 + $0x50] sm:$0x1]
      %v3710 = vld [vmem:[%s3688 + $0x54] sm:$0xf]
      %v3711 = vld [vmem:[%s3688 + $0x58] sm:$0xf]
      %v3712 = vld [vmem:[%s3688 + $0x5c] sm:$0x1]
      %v3729 = vunpack.c.l.b16 %v3689
      %v3730 = vunpack.c.l.b16 %v3690
      %v3731 = vunpack.c.l.b16 %v3692
      %v3732 = vunpack.c.l.b16 %v3693
      %v3733 = vunpack.c.l.b16 %v3695
      %v3734 = vunpack.c.l.b16 %v3696
      %v3735 = vunpack.c.l.b16 %v3698
      %v3736 = vunpack.c.l.b16 %v3699
      %v3737 = vunpack.c.l.b16 %v3701
      %v3738 = vunpack.c.l.b16 %v3702
      %v3739 = vunpack.c.l.b16 %v3704
      %v3740 = vunpack.c.l.b16 %v3705
      %v3741 = vunpack.c.l.b16 %v3707
      %v3742 = vunpack.c.l.b16 %v3708
      %v3743 = vunpack.c.l.b16 %v3710
      %v3744 = vunpack.c.l.b16 %v3711
      %v3745 = vpack.c.b16 %v3730, %v3729
      %v3746 = vpack.c.b16 %v3732, %v3731
      %v3747 = vpack.c.b16 %v3734, %v3733
      %v3748 = vpack.c.b16 %v3736, %v3735
      %v3749 = vpack.c.b16 %v3738, %v3737
      %v3750 = vpack.c.b16 %v3740, %v3739
      %v3751 = vpack.c.b16 %v3742, %v3741
      %v3752 = vpack.c.b16 %v3744, %v3743
      %v3761 = vunpack.c.l.b16 %v3691
      %v3762 = vunpack.c.l.b16 %v3694
      %v3763 = vunpack.c.l.b16 %v3697
      %v3764 = vunpack.c.l.b16 %v3700
      %v3765 = vunpack.c.l.b16 %v3703
      %v3766 = vunpack.c.l.b16 %v3706
      %v3767 = vunpack.c.l.b16 %v3709
      %v3768 = vunpack.c.l.b16 %v3712
      %v3769 = vpack.c.b16 %v3761, %v3761
      %v3770 = vpack.c.b16 %v3762, %v3762
      %v3771 = vpack.c.b16 %v3763, %v3763
      %v3772 = vpack.c.b16 %v3764, %v3764
      %v3773 = vpack.c.b16 %v3765, %v3765
      %v3774 = vpack.c.b16 %v3766, %v3766
      %v3775 = vpack.c.b16 %v3767, %v3767
      %v3776 = vpack.c.b16 %v3768, %v3768
      %v3778 = vshrl.u32 %v3745, 16
      %v3780 = vshll.u32 %v3745, 16
      %v3782 = vrot.slane %v3780, 1
      %v3783 = vor.u32 %v3778, %v3782
      %v3785 = vshll.u32 %v3769, 16
      %v3787 = vrot.slane %v3785, 1
      %v3788 = vsel %vm1045, %v3783, %v3787
      %v3790 = vshrl.u32 %v3746, 16
      %v3792 = vshll.u32 %v3746, 16
      %v3794 = vrot.slane %v3792, 1
      %v3795 = vor.u32 %v3790, %v3794
      %v3797 = vshll.u32 %v3770, 16
      %v3799 = vrot.slane %v3797, 1
      %v3800 = vsel %vm1045, %v3795, %v3799
      %v3802 = vshrl.u32 %v3747, 16
      %v3804 = vshll.u32 %v3747, 16
      %v3806 = vrot.slane %v3804, 1
      %v3807 = vor.u32 %v3802, %v3806
      %v3809 = vshll.u32 %v3771, 16
      %v3811 = vrot.slane %v3809, 1
      %v3812 = vsel %vm1045, %v3807, %v3811
      %v3814 = vshrl.u32 %v3748, 16
      %v3816 = vshll.u32 %v3748, 16
      %v3818 = vrot.slane %v3816, 1
      %v3819 = vor.u32 %v3814, %v3818
      %v3821 = vshll.u32 %v3772, 16
      %v3823 = vrot.slane %v3821, 1
      %v3824 = vsel %vm1045, %v3819, %v3823
      %v3826 = vshrl.u32 %v3749, 16
      %v3828 = vshll.u32 %v3749, 16
      %v3830 = vrot.slane %v3828, 1
      %v3831 = vor.u32 %v3826, %v3830
      %v3833 = vshll.u32 %v3773, 16
      %v3835 = vrot.slane %v3833, 1
      %v3836 = vsel %vm1045, %v3831, %v3835
      %v3838 = vshrl.u32 %v3750, 16
      %v3840 = vshll.u32 %v3750, 16
      %v3842 = vrot.slane %v3840, 1
      %v3843 = vor.u32 %v3838, %v3842
      %v3845 = vshll.u32 %v3774, 16
      %v3847 = vrot.slane %v3845, 1
      %v3848 = vsel %vm1045, %v3843, %v3847
      %v3850 = vshrl.u32 %v3751, 16
      %v3852 = vshll.u32 %v3751, 16
      %v3854 = vrot.slane %v3852, 1
      %v3855 = vor.u32 %v3850, %v3854
      %v3857 = vshll.u32 %v3775, 16
      %v3859 = vrot.slane %v3857, 1
      %v3860 = vsel %vm1045, %v3855, %v3859
      %v3862 = vshrl.u32 %v3752, 16
      %v3864 = vshll.u32 %v3752, 16
      %v3866 = vrot.slane %v3864, 1
      %v3867 = vor.u32 %v3862, %v3866
      %v3869 = vshll.u32 %v3776, 16
      %v3871 = vrot.slane %v3869, 1
      %v3872 = vsel %vm1045, %v3867, %v3871
      %3873 = vrot.lane.b32.xlu0 %v3788, 8
      %v3874 = vpop.permute.xlu0 %3873
      %3875 = vrot.lane.b32.xlu0 %v3800, 8
      %v3876 = vpop.permute.xlu0 %3875
      %3877 = vrot.lane.b32.xlu0 %v3812, 8
      %v3878 = vpop.permute.xlu0 %3877
      %3879 = vrot.lane.b32.xlu0 %v3824, 8
      %v3880 = vpop.permute.xlu0 %3879
      %3881 = vrot.lane.b32.xlu0 %v3836, 8
      %v3882 = vpop.permute.xlu0 %3881
      %3883 = vrot.lane.b32.xlu0 %v3848, 8
      %v3884 = vpop.permute.xlu0 %3883
      %3885 = vrot.lane.b32.xlu0 %v3860, 8
      %v3886 = vpop.permute.xlu0 %3885
      %3887 = vrot.lane.b32.xlu0 %v3872, 8
      %v3888 = vpop.permute.xlu0 %3887
      %v3889 = vrot.slane %v3745, 1
      %v3890 = vrot.slane %v3769, 1
      %v3891 = vsel %vm1186, %v3889, %v3890
      %v3892 = vrot.slane %v3746, 1
      %v3893 = vrot.slane %v3770, 1
      %v3894 = vsel %vm1186, %v3892, %v3893
      %v3895 = vrot.slane %v3747, 1
      %v3896 = vrot.slane %v3771, 1
      %v3897 = vsel %vm1186, %v3895, %v3896
      %v3898 = vrot.slane %v3748, 1
      %v3899 = vrot.slane %v3772, 1
      %v3900 = vsel %vm1186, %v3898, %v3899
      %v3901 = vrot.slane %v3749, 1
      %v3902 = vrot.slane %v3773, 1
      %v3903 = vsel %vm1186, %v3901, %v3902
      %v3904 = vrot.slane %v3750, 1
      %v3905 = vrot.slane %v3774, 1
      %v3906 = vsel %vm1186, %v3904, %v3905
      %v3907 = vrot.slane %v3751, 1
      %v3908 = vrot.slane %v3775, 1
      %v3909 = vsel %vm1186, %v3907, %v3908
      %v3910 = vrot.slane %v3752, 1
      %v3911 = vrot.slane %v3776, 1
      %v3912 = vsel %vm1186, %v3910, %v3911
      %3913 = vrot.lane.b32.xlu0 %v3891, 16
      %v3914 = vpop.permute.xlu0 %3913
      %3915 = vrot.lane.b32.xlu0 %v3894, 16
      %v3916 = vpop.permute.xlu0 %3915
      %3917 = vrot.lane.b32.xlu0 %v3897, 16
      %v3918 = vpop.permute.xlu0 %3917
      %3919 = vrot.lane.b32.xlu0 %v3900, 16
      %v3920 = vpop.permute.xlu0 %3919
      %3921 = vrot.lane.b32.xlu0 %v3903, 16
      %v3922 = vpop.permute.xlu0 %3921
      %3923 = vrot.lane.b32.xlu0 %v3906, 16
      %v3924 = vpop.permute.xlu0 %3923
      %3925 = vrot.lane.b32.xlu0 %v3909, 16
      %v3926 = vpop.permute.xlu0 %3925
      %3927 = vrot.lane.b32.xlu0 %v3912, 16
      %v3928 = vpop.permute.xlu0 %3927
      %v3930 = vsel %vm1237, %v3745, %v3874
      %v3932 = vsel %vm1237, %v3746, %v3876
      %v3934 = vsel %vm1237, %v3747, %v3878
      %v3936 = vsel %vm1237, %v3748, %v3880
      %v3938 = vsel %vm1237, %v3749, %v3882
      %v3940 = vsel %vm1237, %v3750, %v3884
      %v3942 = vsel %vm1237, %v3751, %v3886
      %v3944 = vsel %vm1237, %v3752, %v3888
      %v3946 = vsel %vm1258, %v3930, %v3914
      %v3948 = vsel %vm1258, %v3932, %v3916
      %v3950 = vsel %vm1258, %v3934, %v3918
      %v3952 = vsel %vm1258, %v3936, %v3920
      %v3954 = vsel %vm1258, %v3938, %v3922
      %v3956 = vsel %vm1258, %v3940, %v3924
      %v3958 = vsel %vm1258, %v3942, %v3926
      %v3960 = vsel %vm1258, %v3944, %v3928
      %s3961 = scalar_lea.vmem %s5, 24
      %v3962 = vld [vmem:[%s3961] sm:$0xf]
      %v3963 = vld [vmem:[%s3961 + $0x4] sm:$0xf]
      %v3964 = vld [vmem:[%s3961 + $0x8] sm:$0xf]
      %v3968 = vunpack.c.l.b16 %v3962
      %v3969 = vunpack.c.l.b16 %v3963
      %v3970 = vunpack.c.l.b16 %v3964
      %v3971 = vpack.c.b16 %v3969, %v3968
      %v3972 = vpack.c.b16 %v3970, %v3970
      %v3974 = vsel %vm1636, %v3946, 0
      %v3976 = vsel %vm1636, %v3948, 0
      %v3978 = vsel %vm1636, %v3950, 0
      %v3980 = vsel %vm1636, %v3952, 0
      %v3982 = vsel %vm1636, %v3954, 0
      %v3984 = vsel %vm1636, %v3956, 0
      %v3986 = vsel %vm1636, %v3958, 0
      %v3988 = vsel %vm1636, %v3960, 0
      %v3991 = vsel %vm1657, %v3972, 0
      %3993 = vmatprep.subr.bf16.mxu0 0
      %3994 = vmatpush1.bf16.msra.mxu0 0
      %3995 = vmatprep.subr.bf16.mxu0 0
      %3996 = vmatpush1.bf16.msra.mxu0 0
      %3997 = vmatprep.subr.bf16.mxu0 0
      %3998 = vmatpush1.bf16.msra.mxu0 0
      %3999 = vmatprep.subr.bf16.mxu0 0
      %4000 = vmatpush1.bf16.msra.mxu0 0
      %4001 = vmatprep.subr.bf16.mxu0 0
      %4002 = vmatpush1.bf16.msra.mxu0 0
      %4003 = vmatprep.subr.bf16.mxu0 0
      %4004 = vmatpush1.bf16.msra.mxu0 0
      %4005 = vmatprep.subr.bf16.mxu0 0
      %4006 = vmatpush1.bf16.msra.mxu0 %v3991
      %4007 = vmatprep.subr.bf16.mxu0 0
      %4008 = vmatpush1.bf16.msra.mxu0 %v3971
      %4009 = vmatprep.subr.bf16.mxu0 0
      %4010 = vmatpush2.bf16.msra.mxu0 0
      %4011 = vmatprep.subr.bf16.mxu0 0
      %4012 = vmatpush2.bf16.msra.mxu0 0
      %4013 = vmatprep.subr.bf16.mxu0 0
      %4014 = vmatpush2.bf16.msra.mxu0 0
      %4015 = vmatprep.subr.bf16.mxu0 0
      %4016 = vmatpush2.bf16.msra.mxu0 0
      %4017 = vmatprep.subr.bf16.mxu0 0
      %4018 = vmatpush2.bf16.msra.mxu0 0
      %4019 = vmatprep.subr.bf16.mxu0 0
      %4020 = vmatpush2.bf16.msra.mxu0 0
      %4021 = vmatprep.subr.bf16.mxu0 0
      %4022 = vmatpush2.bf16.msra.mxu0 0
      %4023 = vmatprep.subr.bf16.mxu0 0
      %4024 = vmatpush2.bf16.msra.mxu0 0
      %4025 = vmatprep.mubr.bf16.mxu0 0
      %4026 = vmatmul.mubr.bf16.gmra.mxu0 %v3974
      %v4027 = vpop.f32.mrf.mxu0
      %v4028 = vadd.f32 0.0, %v4027
      %v4029 = vpop.f32.mrf.mxu0
      %v4030 = vpop.f32.mrf.mxu0
      %v4031 = vadd.f32 0.0, %v4030
      %v4032 = vpop.f32.mrf.mxu0
      %4033 = vmatprep.mubr.bf16.mxu0 0
      %4034 = vmatmul.mubr.bf16.gmra.mxu0 %v3976
      %v4035 = vpop.f32.mrf.mxu0
      %v4036 = vadd.f32 0.0, %v4035
      %v4037 = vpop.f32.mrf.mxu0
      %v4038 = vpop.f32.mrf.mxu0
      %v4039 = vadd.f32 0.0, %v4038
      %v4040 = vpop.f32.mrf.mxu0
      %4041 = vmatprep.mubr.bf16.mxu0 0
      %4042 = vmatmul.mubr.bf16.gmra.mxu0 %v3978
      %v4043 = vpop.f32.mrf.mxu0
      %v4044 = vadd.f32 0.0, %v4043
      %v4045 = vpop.f32.mrf.mxu0
      %v4046 = vpop.f32.mrf.mxu0
      %v4047 = vadd.f32 0.0, %v4046
      %v4048 = vpop.f32.mrf.mxu0
      %4049 = vmatprep.mubr.bf16.mxu0 0
      %4050 = vmatmul.mubr.bf16.gmra.mxu0 %v3980
      %v4051 = vpop.f32.mrf.mxu0
      %v4052 = vadd.f32 0.0, %v4051
      %v4053 = vpop.f32.mrf.mxu0
      %v4054 = vpop.f32.mrf.mxu0
      %v4055 = vadd.f32 0.0, %v4054
      %v4056 = vpop.f32.mrf.mxu0
      %4057 = vmatprep.mubr.bf16.mxu0 0
      %4058 = vmatmul.mubr.bf16.gmra.mxu0 %v3982
      %v4059 = vpop.f32.mrf.mxu0
      %v4060 = vadd.f32 0.0, %v4059
      %v4061 = vpop.f32.mrf.mxu0
      %v4062 = vpop.f32.mrf.mxu0
      %v4063 = vadd.f32 0.0, %v4062
      %v4064 = vpop.f32.mrf.mxu0
      %4065 = vmatprep.mubr.bf16.mxu0 0
      %4066 = vmatmul.mubr.bf16.gmra.mxu0 %v3984
      %v4067 = vpop.f32.mrf.mxu0
      %v4068 = vadd.f32 0.0, %v4067
      %v4069 = vpop.f32.mrf.mxu0
      %v4070 = vpop.f32.mrf.mxu0
      %v4071 = vadd.f32 0.0, %v4070
      %v4072 = vpop.f32.mrf.mxu0
      %4073 = vmatprep.mubr.bf16.mxu0 0
      %4074 = vmatmul.mubr.bf16.gmra.mxu0 %v3986
      %v4075 = vpop.f32.mrf.mxu0
      %v4076 = vadd.f32 0.0, %v4075
      %v4077 = vpop.f32.mrf.mxu0
      %v4078 = vpop.f32.mrf.mxu0
      %v4079 = vadd.f32 0.0, %v4078
      %v4080 = vpop.f32.mrf.mxu0
      %4081 = vmatprep.mubr.bf16.mxu0 0
      %4082 = vmatmul.mubr.bf16.gmra.mxu0 %v3988
      %v4083 = vpop.f32.mrf.mxu0
      %v4084 = vadd.f32 0.0, %v4083
      %v4085 = vpop.f32.mrf.mxu0
      %v4086 = vpop.f32.mrf.mxu0
      %v4087 = vadd.f32 0.0, %v4086
      %v4088 = vpop.f32.mrf.mxu0
      %4089 = vdwg.mxu0
      %v4090 = vadd.f32 %v3626, %v4028
      %v4091 = vadd.f32 %v3629, %v4031
      %v4092 = vadd.f32 %v3634, %v4036
      %v4093 = vadd.f32 %v3637, %v4039
      %v4094 = vadd.f32 %v3642, %v4044
      %v4095 = vadd.f32 %v3645, %v4047
      %v4096 = vadd.f32 %v3650, %v4052
      %v4097 = vadd.f32 %v3653, %v4055
      %v4098 = vadd.f32 %v3658, %v4060
      %v4099 = vadd.f32 %v3661, %v4063
      %v4100 = vadd.f32 %v3666, %v4068
      %v4101 = vadd.f32 %v3669, %v4071
      %v4102 = vadd.f32 %v3674, %v4076
      %v4103 = vadd.f32 %v3677, %v4079
      %v4104 = vadd.f32 %v3682, %v4084
      %v4105 = vadd.f32 %v3685, %v4087
      %v4106 = vld [vmem:[%s406] sm:$0xf]
      %v4107 = vld [vmem:[%s406 + $0x4] sm:$0xf]
      %v4108 = vld [vmem:[%s406 + $0x8] sm:$0xf]
      %v4109 = vld [vmem:[%s406 + $0xc] sm:$0xf]
      %v4110 = vld [vmem:[%s406 + $0x10] sm:$0xf]
      %v4111 = vld [vmem:[%s406 + $0x14] sm:$0xf]
      %v4112 = vld [vmem:[%s406 + $0x18] sm:$0xf]
      %v4113 = vld [vmem:[%s406 + $0x1c] sm:$0xf]
      %v4114 = vld [vmem:[%s406 + $0x20] sm:$0xf]
      %v4115 = vld [vmem:[%s406 + $0x24] sm:$0xf]
      %v4116 = vld [vmem:[%s406 + $0x28] sm:$0xf]
      %v4117 = vld [vmem:[%s406 + $0x2c] sm:$0xf]
      %v4118 = vld [vmem:[%s406 + $0x30] sm:$0xf]
      %v4119 = vld [vmem:[%s406 + $0x34] sm:$0xf]
      %v4120 = vld [vmem:[%s406 + $0x38] sm:$0xf]
      %v4121 = vld [vmem:[%s406 + $0x3c] sm:$0xf]
      %v4122 = vunpack.c.l.bf16 %v4106
      %v4123 = vunpack.c.l.bf16 %v4107
      %v4124 = vunpack.c.l.bf16 %v4108
      %v4125 = vunpack.c.l.bf16 %v4109
      %v4126 = vunpack.c.l.bf16 %v4110
      %v4127 = vunpack.c.l.bf16 %v4111
      %v4128 = vunpack.c.l.bf16 %v4112
      %v4129 = vunpack.c.l.bf16 %v4113
      %v4130 = vunpack.c.l.bf16 %v4114
      %v4131 = vunpack.c.l.bf16 %v4115
      %v4132 = vunpack.c.l.bf16 %v4116
      %v4133 = vunpack.c.l.bf16 %v4117
      %v4134 = vunpack.c.l.bf16 %v4118
      %v4135 = vunpack.c.l.bf16 %v4119
      %v4136 = vunpack.c.l.bf16 %v4120
      %v4137 = vunpack.c.l.bf16 %v4121
      %v4138 = vld [vmem:[%s6] sm:$0x1]
      %v4140 = vlaneseq
      %v4141 = vshrl.u32 %v4140, 7
      %v4142 = vsub.s32 0, %v4141
      %v4143 = vrot.slane %v4138, %v4142
      %v4145 = vadd.f32 %v4090, %v4143
      %v4146 = vadd.f32 %v4091, %v4143
      %v4147 = vadd.f32 %v4092, %v4143
      %v4148 = vadd.f32 %v4093, %v4143
      %v4149 = vadd.f32 %v4094, %v4143
      %v4150 = vadd.f32 %v4095, %v4143
      %v4151 = vadd.f32 %v4096, %v4143
      %v4152 = vadd.f32 %v4097, %v4143
      %v4153 = vadd.f32 %v4098, %v4143
      %v4154 = vadd.f32 %v4099, %v4143
      %v4155 = vadd.f32 %v4100, %v4143
      %v4156 = vadd.f32 %v4101, %v4143
      %v4157 = vadd.f32 %v4102, %v4143
      %v4158 = vadd.f32 %v4103, %v4143
      %v4159 = vadd.f32 %v4104, %v4143
      %v4160 = vadd.f32 %v4105, %v4143
      %v4161 = vadd.f32 %v4145, %v4122
      %v4162 = vadd.f32 %v4146, %v4123
      %v4163 = vadd.f32 %v4147, %v4124
      %v4164 = vadd.f32 %v4148, %v4125
      %v4165 = vadd.f32 %v4149, %v4126
      %v4166 = vadd.f32 %v4150, %v4127
      %v4167 = vadd.f32 %v4151, %v4128
      %v4168 = vadd.f32 %v4152, %v4129
      %v4169 = vadd.f32 %v4153, %v4130
      %v4170 = vadd.f32 %v4154, %v4131
      %v4171 = vadd.f32 %v4155, %v4132
      %v4172 = vadd.f32 %v4156, %v4133
      %v4173 = vadd.f32 %v4157, %v4134
      %v4174 = vadd.f32 %v4158, %v4135
      %v4175 = vadd.f32 %v4159, %v4136
      %v4176 = vadd.f32 %v4160, %v4137
      %v4177 = vmax.f32 %v4161, 0.0
      %v4178 = vmax.f32 %v4162, 0.0
      %v4179 = vmax.f32 %v4163, 0.0
      %v4180 = vmax.f32 %v4164, 0.0
      %v4181 = vmax.f32 %v4165, 0.0
      %v4182 = vmax.f32 %v4166, 0.0
      %v4183 = vmax.f32 %v4167, 0.0
      %v4184 = vmax.f32 %v4168, 0.0
      %v4185 = vmax.f32 %v4169, 0.0
      %v4186 = vmax.f32 %v4170, 0.0
      %v4187 = vmax.f32 %v4171, 0.0
      %v4188 = vmax.f32 %v4172, 0.0
      %v4189 = vmax.f32 %v4173, 0.0
      %v4190 = vmax.f32 %v4174, 0.0
      %v4191 = vmax.f32 %v4175, 0.0
      %v4192 = vmax.f32 %v4176, 0.0
      %v4193 = vpack.c.bf16 %v4178, %v4177
      %v4194 = vpack.c.bf16 %v4180, %v4179
      %v4195 = vpack.c.bf16 %v4182, %v4181
      %v4196 = vpack.c.bf16 %v4184, %v4183
      %v4197 = vpack.c.bf16 %v4186, %v4185
      %v4198 = vpack.c.bf16 %v4188, %v4187
      %v4199 = vpack.c.bf16 %v4190, %v4189
      %v4200 = vpack.c.bf16 %v4192, %v4191
      %v4209 = vunpack.c.l.b16 %v4193
      %v4210 = vunpack.c.h.b16 %v4193
      %v4211 = vunpack.c.l.b16 %v4194
      %v4212 = vunpack.c.h.b16 %v4194
      %v4213 = vunpack.c.l.b16 %v4195
      %v4214 = vunpack.c.h.b16 %v4195
      %v4215 = vunpack.c.l.b16 %v4196
      %v4216 = vunpack.c.h.b16 %v4196
      %v4217 = vunpack.c.l.b16 %v4197
      %v4218 = vunpack.c.h.b16 %v4197
      %v4219 = vunpack.c.l.b16 %v4198
      %v4220 = vunpack.c.h.b16 %v4198
      %v4221 = vunpack.c.l.b16 %v4199
      %v4222 = vunpack.c.h.b16 %v4199
      %v4223 = vunpack.c.l.b16 %v4200
      %v4224 = vunpack.c.h.b16 %v4200
      %v4225 = vpack.c.b16 %v4209, %v4209
      %v4226 = vpack.c.b16 %v4210, %v4210
      %v4227 = vpack.c.b16 %v4211, %v4211
      %v4228 = vpack.c.b16 %v4212, %v4212
      %v4229 = vpack.c.b16 %v4213, %v4213
      %v4230 = vpack.c.b16 %v4214, %v4214
      %v4231 = vpack.c.b16 %v4215, %v4215
      %v4232 = vpack.c.b16 %v4216, %v4216
      %v4233 = vpack.c.b16 %v4217, %v4217
      %v4234 = vpack.c.b16 %v4218, %v4218
      %v4235 = vpack.c.b16 %v4219, %v4219
      %v4236 = vpack.c.b16 %v4220, %v4220
      %v4237 = vpack.c.b16 %v4221, %v4221
      %v4238 = vpack.c.b16 %v4222, %v4222
      %v4239 = vpack.c.b16 %v4223, %v4223
      %v4240 = vpack.c.b16 %v4224, %v4224
      %4257 = vst.msk [vmem:[%s455] sm:$0xf] %vm719, %v4225
      %4258 = vst.msk [vmem:[%s455 + $0x4] sm:$0xf] %vm719, %v4226
      %4259 = vst.msk [vmem:[%s455 + $0x8] sm:$0xf] %vm719, %v4227
      %4260 = vst.msk [vmem:[%s455 + $0xc] sm:$0xf] %vm719, %v4228
      %4261 = vst.msk [vmem:[%s455 + $0x10] sm:$0xf] %vm719, %v4229
      %4262 = vst.msk [vmem:[%s455 + $0x14] sm:$0xf] %vm719, %v4230
      %4263 = vst.msk [vmem:[%s455 + $0x18] sm:$0xf] %vm719, %v4231
      %4264 = vst.msk [vmem:[%s455 + $0x1c] sm:$0xf] %vm719, %v4232
      %4265 = vst.msk [vmem:[%s455 + $0x20] sm:$0xf] %vm719, %v4233
      %4266 = vst.msk [vmem:[%s455 + $0x24] sm:$0xf] %vm719, %v4234
      %4267 = vst.msk [vmem:[%s455 + $0x28] sm:$0xf] %vm719, %v4235
      %4268 = vst.msk [vmem:[%s455 + $0x2c] sm:$0xf] %vm719, %v4236
      %4269 = vst.msk [vmem:[%s455 + $0x30] sm:$0xf] %vm719, %v4237
      %4270 = vst.msk [vmem:[%s455 + $0x34] sm:$0xf] %vm719, %v4238
      %4271 = vst.msk [vmem:[%s455 + $0x38] sm:$0xf] %vm719, %v4239
      %4272 = vst.msk [vmem:[%s455 + $0x3c] sm:$0xf] %vm719, %v4240
      %s4273 = smul.u32 8, %s23
      %p4274 = scmp.lt.s32.totalorder %s22, 1
      %s4275 = scalar_select %p4274, %s22, 1
      %p4276 = scmp.lt.s32.totalorder %s4273, 15
      %s4277 = scalar_select %p4276, %s4273, 15
      %s4278 = smul.addr %s4277, 2
      %s4279 = smul.addr %s4275, 32
      %s4280 = sadd.s32 %s4278, %s4279
      %s4281 = smul.addr %s4280, 4
      %s4282 = scalar_lea.vmem %s7, %s4281
      // Predicated region
      $region73: #{basic_block_forward.1} parent=47 // pred_check
        %p4283 = pneg %p234
      $region74: #{basic_block_forward.1} parent=47 // pred_check_branch
        %4285 = sbr.rel (%p4283) target = $region76
      $region75: #{basic_block_forward.1} parent=47 // pred_region
        %s4286 = smul.u32 8, %s23
      $region76: #{basic_block_forward.1} parent=47 // pred_fallthru
        _
    $region48: #{basic_block_forward.1} parent=5 // pred_fallthru
      _
    %p4287 = scmp.le.s32.totalorder 2, %s13
    // Predicated region
    $region77: #{basic_block_forward.1} parent=5 // pred_check
      %p4288 = pneg %p4287
    $region78: #{basic_block_forward.1} parent=5 // pred_check_branch
      %4290 = sbr.rel (%p4288) target = $region80
    $region79: #{basic_block_forward.1} parent=5 // pred_region
      %s4291 = ssub.s32 %s13, 2
      // Predicated region
      $region81: #{basic_block_forward.1} parent=79 // pred_check
        %p4292 = pneg %p240
      $region82: #{basic_block_forward.1} parent=79 // pred_check_branch
        %4294 = sbr.rel (%p4292) target = $region84
      $region83: #{basic_block_forward.1} parent=79 // pred_region
        %s4295 = smul.u32 8, %s25
        %p4296 = scmp.lt.s32.totalorder %s24, 1
        %s4297 = scalar_select %p4296, %s24, 1
        %p4298 = scmp.lt.s32.totalorder %s4295, 15
        %s4299 = scalar_select %p4298, %s4295, 15
        %s4300 = smul.addr %s4299, 2
        %s4301 = smul.addr %s4297, 32
        %s4302 = sadd.s32 %s4300, %s4301
        %s4303 = smul.addr %s4302, 4
        %s4304 = scalar_lea.vmem %s7, %s4303
      $region84: #{basic_block_forward.1} parent=79 // pred_fallthru
        _
    $region80: #{basic_block_forward.1} parent=5 // pred_fallthru
      _
  $region6: #{basic_block_forward.1} parent=0 // loop_footer
    %s17 = sadd.s32 1, %s13
  $region7: #{basic_block_forward.1} parent=0 // loop_footer_branch
    %12 = sbr.rel target = $region3
  $region8: #{basic_block_forward.1} parent=0 // loop_exit
    _

</llo_original>
